<compile_context>
chip_gen: v7x
topology: tpu7x:2x2x1
jax: 0.10.0
libtpu: 0.0.40
codegen_flags: <defaults>
</compile_context>

<pallas_src>
import functools

import jax
import jax.numpy as jnp
from jax.experimental import pallas as pl
from jax.experimental.pallas import tpu as pltpu

BN_EPS = 1e-5
LANE = 128


def _generator_kernel(x_ref,
                      w1, w2, w3, w4, w5, w6,
                      vec_ref,
                      out_ref,
                      *, bn_layout, b6_off, b6_width, n_valid):
    """Fused MLP: [Linear -> BatchNorm1d(train) -> ReLU] x5 -> Linear -> Sigmoid.

    vec_ref is a packed (1, total) f32 slab holding gamma_i/beta_i for the 5 BN
    layers followed by the final bias b6; bn_layout gives the static
    (gamma_off, beta_off, width) triples (all offsets 128-aligned).
    """
    b_pad = x_ref.shape[0]
    inv_b = 1.0 / float(n_valid)

    # Row-validity mask only materializes when the batch was padded
    # (compile-time branch: no extra ops in the common unpadded case).
    if b_pad != n_valid:
        row = jax.lax.broadcasted_iota(jnp.int32, (b_pad, 1), 0)
        mask = (row < n_valid).astype(jnp.float32)
    else:
        mask = None

    def lin_bn_relu(h, w_ref, g_off, be_off, width):
        # Linear on the MXU: bf16 x bf16 operands, f32 accumulate.  No bias:
        # it is mathematically cancelled by the BN mean subtraction below.
        y = jnp.dot(h.astype(jnp.bfloat16), w_ref[...],
                    preferred_element_type=jnp.float32)
        g = vec_ref[:, g_off:g_off + width]    # (1, width) static lane-aligned slice
        be = vec_ref[:, be_off:be_off + width]
        # BatchNorm1d, training mode: batch mean / biased variance over the
        # TRUE batch.  Padded rows of y are exactly zero (zero input rows, no
        # bias), so the mean only needs the 1/n_valid scale; the variance pass
        # masks the (y - mu) residual of pad rows.
        mu = jnp.sum(y, axis=0, keepdims=True) * inv_b
        d = y - mu
        if mask is not None:
            d = d * mask
        var = jnp.sum(d * d, axis=0, keepdims=True) * inv_b
        # Fold normalize + affine into one FMA:  y_hat*g + b  ==  y*s + t
        s = g * jax.lax.rsqrt(var + BN_EPS)
        t = be - mu * s
        out = jnp.maximum(y * s + t, 0.0)
        if mask is not None:
            out = out * mask   # keep pad rows exactly zero for the next layer
        return out

    h = x_ref[...].astype(jnp.float32)
    for w_ref, (g_off, be_off, width) in zip((w1, w2, w3, w4, w5), bn_layout):
        h = lin_bn_relu(h, w_ref, g_off, be_off, width)

    # Final Linear + Sigmoid (f32 element-wise), lane-dense padded output.
    z = jnp.dot(h.astype(jnp.bfloat16), w6[...],
                preferred_element_type=jnp.float32) \
        + vec_ref[:, b6_off:b6_off + b6_width]
    out_ref[...] = jax.nn.sigmoid(z)


def _round_up(n, m):
    return ((n + m - 1) // m) * m


def generator_forward(x, params, cardcount, metadata_size):
    """x: (B, input_size) float32.  Returns (B, cardcount, metadata_size)."""
    B = x.shape[0]
    deck_size = cardcount * metadata_size
    deck_padded = _round_up(deck_size, LANE)
    b_pad = _round_up(B, 8)

    # Pad the batch to a sublane multiple; pad rows are zero and stay zero
    # through every Linear (no biases), so BN stats use only the true rows.
    if b_pad != B:
        x = jnp.pad(x, ((0, b_pad - B), (0, 0)))

    bn_params = params[:5]          # (w, gamma, beta) per layer
    w6, b6 = params[5]

    # Pad the last Linear so the kernel output last dim is a multiple of 128
    # (lane-dense, unmasked vector stores). Pad columns are sliced off below.
    if deck_padded != deck_size:
        pad = deck_padded - deck_size
        w6 = jnp.pad(w6, ((0, 0), (0, pad)))
        b6 = jnp.pad(b6, ((0, 0), (0, pad)))

    # Pack every remaining small f32 vector into a single (1, total) slab:
    # one operand / one DMA instead of 11 sublane-padded tiny buffers.
    parts, layout, off = [], [], 0
    for _, g, be in bn_params:
        width = g.shape[-1]         # 256/512/1024 -> every offset is 128-aligned
        layout.append((off, off + width, width))
        parts.extend([g, be])
        off += 2 * width
    b6_off = off
    parts.append(b6)
    vec_slab = jnp.concatenate(parts, axis=-1)

    weights = [p[0] for p in bn_params] + [w6]

    kernel = functools.partial(
        _generator_kernel,
        bn_layout=tuple(layout),
        b6_off=b6_off,
        b6_width=deck_padded,
        n_valid=B,
    )

    vmem_spec = pl.BlockSpec(memory_space=pltpu.MemorySpace.VMEM)
    n_in = 2 + len(weights)         # x + 6 weights + packed vector slab

    # No grid: single invocation, every operand fully resident in VMEM with a
    # single buffer (no pointless double-buffering of weights).  BN couples
    # the whole batch, so there is nothing to shard across v7x's two
    # TensorCores for a single generator instance.
    out = pl.pallas_call(
        kernel,
        out_shape=jax.ShapeDtypeStruct((b_pad, deck_padded), jnp.float32),
        in_specs=[vmem_spec] * n_in,
        out_specs=vmem_spec,
    )(x, *weights, vec_slab)

    return out[:B, :deck_size].reshape(B, cardcount, metadata_size)


def init_params(key, input_size, cardcount, metadata_size):
    """Deterministic synthetic parameters mirroring the PyTorch module's shapes.

    Linear biases for the BN-followed layers are intentionally not created:
    they cancel exactly under train-mode BatchNorm and are dead weight.
    """
    deck_size = cardcount * metadata_size
    layer_dims = [(input_size, 256), (256, 256), (256, 256),
                  (256, 512), (512, 1024), (1024, deck_size)]
    params = []
    keys = jax.random.split(key, len(layer_dims) * 2)
    for idx, (fan_in, fan_out) in enumerate(layer_dims):
        wk, bk = keys[2 * idx], keys[2 * idx + 1]
        scale = 1.0 / float(fan_in) ** 0.5
        # Weights: (in, out), bf16 (halves HBM traffic; MXU-native).
        w = jax.random.uniform(wk, (fan_in, fan_out), jnp.float32,
                               -scale, scale).astype(jnp.bfloat16)
        if idx < len(layer_dims) - 1:
            gamma = jnp.ones((1, fan_out), jnp.float32)
            beta = jnp.zeros((1, fan_out), jnp.float32)
            params.append((w, gamma, beta))
        else:
            b6 = jax.random.uniform(bk, (1, fan_out), jnp.float32, -scale, scale)
            params.append((w, b6))
    return params


if __name__ == "__main__":
    # Small, forward-consistent shapes (deck_size = 8*16 = 128, lane-dense).
    batch = 8
    input_size = 32
    cardcount = 8
    metadata_size = 16

    key = jax.random.PRNGKey(0)
    k_x, k_p = jax.random.split(key)
    x = jax.random.normal(k_x, (batch, input_size), jnp.float32)
    params = init_params(k_p, input_size, cardcount, metadata_size)

    fwd = jax.jit(functools.partial(generator_forward,
                                    cardcount=cardcount,
                                    metadata_size=metadata_size))
    out = fwd(x, params)
    jax.block_until_ready(out)

    assert out.shape == (batch, cardcount, metadata_size)
    assert bool(jnp.all(jnp.isfinite(out)))
    assert bool(jnp.all((out >= 0.0) & (out <= 1.0)))  # sigmoid range
    print("KERNEL_OK")
</pallas_src>

<mosaic_0001>
module attributes {stable_mosaic.version = 11 : i64} {
  func.func @_generator_kernel(%arg0: memref<8x32xf32, #tpu.memory_space<vmem>>, %arg1: memref<32x256xbf16, #tpu.memory_space<vmem>>, %arg2: memref<256x256xbf16, #tpu.memory_space<vmem>>, %arg3: memref<256x256xbf16, #tpu.memory_space<vmem>>, %arg4: memref<256x512xbf16, #tpu.memory_space<vmem>>, %arg5: memref<512x1024xbf16, #tpu.memory_space<vmem>>, %arg6: memref<1024x128xbf16, #tpu.memory_space<vmem>>, %arg7: memref<1x4736xf32, #tpu.memory_space<vmem>>, %arg8: memref<8x128xf32, #tpu.memory_space<vmem>>) attributes {dimension_semantics = [], scalar_prefetch = 0 : i64, scratch_operands = 0 : i64, tpu.core_type = #tpu.core_type<tc>} {
    %c0 = arith.constant 0 : index
    %c0_0 = arith.constant 0 : index
    %0 = vector.load %arg0[%c0, %c0_0] : memref<8x32xf32, #tpu.memory_space<vmem>>, vector<8x32xf32>
    %1 = arith.truncf %0 : vector<8x32xf32> to vector<8x32xbf16>
    %c0_1 = arith.constant 0 : index
    %c0_2 = arith.constant 0 : index
    %2 = vector.load %arg1[%c0_1, %c0_2] : memref<32x256xbf16, #tpu.memory_space<vmem>>, vector<32x256xbf16>
    %cst = arith.constant dense<0.000000e+00> : vector<8x256xf32>
    %3 = tpu.matmul %1, %2, %cst {dimension_numbers = #tpu.dot_dimension_numbers<[1], [0], [0], [1], [0, 0, 1, 1], [], []>} : vector<8x32xbf16>, vector<32x256xbf16>, vector<8x256xf32> -> vector<8x256xf32>
    %c0_3 = arith.constant 0 : index
    %c0_4 = arith.constant 0 : index
    %4 = vector.load %arg7[%c0_3, %c0_4] : memref<1x4736xf32, #tpu.memory_space<vmem>>, vector<1x256xf32>
    %c0_5 = arith.constant 0 : index
    %c256 = arith.constant 256 : index
    %5 = vector.load %arg7[%c0_5, %c256] : memref<1x4736xf32, #tpu.memory_space<vmem>>, vector<1x256xf32>
    %cst_6 = arith.constant dense<0.000000e+00> : vector<256xf32>
    %6 = vector.multi_reduction <add>, %3, %cst_6 [0] : vector<8x256xf32> to vector<256xf32>
    %7 = vector.shape_cast %6 : vector<256xf32> to vector<1x256xf32>
    %cst_7 = arith.constant 1.250000e-01 : f32
    %8 = vector.broadcast %cst_7 : f32 to vector<1x256xf32>
    %9 = arith.mulf %7, %8 : vector<1x256xf32>
    %10 = vector.broadcast %9 : vector<1x256xf32> to vector<8x256xf32>
    %11 = arith.subf %3, %10 : vector<8x256xf32>
    %12 = arith.mulf %11, %11 : vector<8x256xf32>
    %cst_8 = arith.constant dense<0.000000e+00> : vector<256xf32>
    %13 = vector.multi_reduction <add>, %12, %cst_8 [0] : vector<8x256xf32> to vector<256xf32>
    %14 = vector.shape_cast %13 : vector<256xf32> to vector<1x256xf32>
    %cst_9 = arith.constant 1.250000e-01 : f32
    %15 = vector.broadcast %cst_9 : f32 to vector<1x256xf32>
    %16 = arith.mulf %14, %15 : vector<1x256xf32>
    %cst_10 = arith.constant 9.99999974E-6 : f32
    %17 = vector.broadcast %cst_10 : f32 to vector<1x256xf32>
    %18 = arith.addf %16, %17 : vector<1x256xf32>
    %19 = math.rsqrt %18 : vector<1x256xf32>
    %20 = arith.mulf %4, %19 : vector<1x256xf32>
    %21 = arith.mulf %9, %20 : vector<1x256xf32>
    %22 = arith.subf %5, %21 : vector<1x256xf32>
    %23 = vector.broadcast %20 : vector<1x256xf32> to vector<8x256xf32>
    %24 = arith.mulf %3, %23 : vector<8x256xf32>
    %25 = vector.broadcast %22 : vector<1x256xf32> to vector<8x256xf32>
    %26 = arith.addf %24, %25 : vector<8x256xf32>
    %cst_11 = arith.constant 0.000000e+00 : f32
    %27 = vector.broadcast %cst_11 : f32 to vector<8x256xf32>
    %28 = arith.maximumf %26, %27 : vector<8x256xf32>
    %29 = arith.truncf %28 : vector<8x256xf32> to vector<8x256xbf16>
    %c0_12 = arith.constant 0 : index
    %c0_13 = arith.constant 0 : index
    %30 = vector.load %arg2[%c0_12, %c0_13] : memref<256x256xbf16, #tpu.memory_space<vmem>>, vector<256x256xbf16>
    %cst_14 = arith.constant dense<0.000000e+00> : vector<8x256xf32>
    %31 = tpu.matmul %29, %30, %cst_14 {dimension_numbers = #tpu.dot_dimension_numbers<[1], [0], [0], [1], [0, 0, 1, 1], [], []>} : vector<8x256xbf16>, vector<256x256xbf16>, vector<8x256xf32> -> vector<8x256xf32>
    %c0_15 = arith.constant 0 : index
    %c512 = arith.constant 512 : index
    %32 = vector.load %arg7[%c0_15, %c512] : memref<1x4736xf32, #tpu.memory_space<vmem>>, vector<1x256xf32>
    %c0_16 = arith.constant 0 : index
    %c768 = arith.constant 768 : index
    %33 = vector.load %arg7[%c0_16, %c768] : memref<1x4736xf32, #tpu.memory_space<vmem>>, vector<1x256xf32>
    %cst_17 = arith.constant dense<0.000000e+00> : vector<256xf32>
    %34 = vector.multi_reduction <add>, %31, %cst_17 [0] : vector<8x256xf32> to vector<256xf32>
    %35 = vector.shape_cast %34 : vector<256xf32> to vector<1x256xf32>
    %cst_18 = arith.constant 1.250000e-01 : f32
    %36 = vector.broadcast %cst_18 : f32 to vector<1x256xf32>
    %37 = arith.mulf %35, %36 : vector<1x256xf32>
    %38 = vector.broadcast %37 : vector<1x256xf32> to vector<8x256xf32>
    %39 = arith.subf %31, %38 : vector<8x256xf32>
    %40 = arith.mulf %39, %39 : vector<8x256xf32>
    %cst_19 = arith.constant dense<0.000000e+00> : vector<256xf32>
    %41 = vector.multi_reduction <add>, %40, %cst_19 [0] : vector<8x256xf32> to vector<256xf32>
    %42 = vector.shape_cast %41 : vector<256xf32> to vector<1x256xf32>
    %cst_20 = arith.constant 1.250000e-01 : f32
    %43 = vector.broadcast %cst_20 : f32 to vector<1x256xf32>
    %44 = arith.mulf %42, %43 : vector<1x256xf32>
    %cst_21 = arith.constant 9.99999974E-6 : f32
    %45 = vector.broadcast %cst_21 : f32 to vector<1x256xf32>
    %46 = arith.addf %44, %45 : vector<1x256xf32>
    %47 = math.rsqrt %46 : vector<1x256xf32>
    %48 = arith.mulf %32, %47 : vector<1x256xf32>
    %49 = arith.mulf %37, %48 : vector<1x256xf32>
    %50 = arith.subf %33, %49 : vector<1x256xf32>
    %51 = vector.broadcast %48 : vector<1x256xf32> to vector<8x256xf32>
    %52 = arith.mulf %31, %51 : vector<8x256xf32>
    %53 = vector.broadcast %50 : vector<1x256xf32> to vector<8x256xf32>
    %54 = arith.addf %52, %53 : vector<8x256xf32>
    %cst_22 = arith.constant 0.000000e+00 : f32
    %55 = vector.broadcast %cst_22 : f32 to vector<8x256xf32>
    %56 = arith.maximumf %54, %55 : vector<8x256xf32>
    %57 = arith.truncf %56 : vector<8x256xf32> to vector<8x256xbf16>
    %c0_23 = arith.constant 0 : index
    %c0_24 = arith.constant 0 : index
    %58 = vector.load %arg3[%c0_23, %c0_24] : memref<256x256xbf16, #tpu.memory_space<vmem>>, vector<256x256xbf16>
    %cst_25 = arith.constant dense<0.000000e+00> : vector<8x256xf32>
    %59 = tpu.matmul %57, %58, %cst_25 {dimension_numbers = #tpu.dot_dimension_numbers<[1], [0], [0], [1], [0, 0, 1, 1], [], []>} : vector<8x256xbf16>, vector<256x256xbf16>, vector<8x256xf32> -> vector<8x256xf32>
    %c0_26 = arith.constant 0 : index
    %c1024 = arith.constant 1024 : index
    %60 = vector.load %arg7[%c0_26, %c1024] : memref<1x4736xf32, #tpu.memory_space<vmem>>, vector<1x256xf32>
    %c0_27 = arith.constant 0 : index
    %c1280 = arith.constant 1280 : index
    %61 = vector.load %arg7[%c0_27, %c1280] : memref<1x4736xf32, #tpu.memory_space<vmem>>, vector<1x256xf32>
    %cst_28 = arith.constant dense<0.000000e+00> : vector<256xf32>
    %62 = vector.multi_reduction <add>, %59, %cst_28 [0] : vector<8x256xf32> to vector<256xf32>
    %63 = vector.shape_cast %62 : vector<256xf32> to vector<1x256xf32>
    %cst_29 = arith.constant 1.250000e-01 : f32
    %64 = vector.broadcast %cst_29 : f32 to vector<1x256xf32>
    %65 = arith.mulf %63, %64 : vector<1x256xf32>
    %66 = vector.broadcast %65 : vector<1x256xf32> to vector<8x256xf32>
    %67 = arith.subf %59, %66 : vector<8x256xf32>
    %68 = arith.mulf %67, %67 : vector<8x256xf32>
    %cst_30 = arith.constant dense<0.000000e+00> : vector<256xf32>
    %69 = vector.multi_reduction <add>, %68, %cst_30 [0] : vector<8x256xf32> to vector<256xf32>
    %70 = vector.shape_cast %69 : vector<256xf32> to vector<1x256xf32>
    %cst_31 = arith.constant 1.250000e-01 : f32
    %71 = vector.broadcast %cst_31 : f32 to vector<1x256xf32>
    %72 = arith.mulf %70, %71 : vector<1x256xf32>
    %cst_32 = arith.constant 9.99999974E-6 : f32
    %73 = vector.broadcast %cst_32 : f32 to vector<1x256xf32>
    %74 = arith.addf %72, %73 : vector<1x256xf32>
    %75 = math.rsqrt %74 : vector<1x256xf32>
    %76 = arith.mulf %60, %75 : vector<1x256xf32>
    %77 = arith.mulf %65, %76 : vector<1x256xf32>
    %78 = arith.subf %61, %77 : vector<1x256xf32>
    %79 = vector.broadcast %76 : vector<1x256xf32> to vector<8x256xf32>
    %80 = arith.mulf %59, %79 : vector<8x256xf32>
    %81 = vector.broadcast %78 : vector<1x256xf32> to vector<8x256xf32>
    %82 = arith.addf %80, %81 : vector<8x256xf32>
    %cst_33 = arith.constant 0.000000e+00 : f32
    %83 = vector.broadcast %cst_33 : f32 to vector<8x256xf32>
    %84 = arith.maximumf %82, %83 : vector<8x256xf32>
    %85 = arith.truncf %84 : vector<8x256xf32> to vector<8x256xbf16>
    %c0_34 = arith.constant 0 : index
    %c0_35 = arith.constant 0 : index
    %86 = vector.load %arg4[%c0_34, %c0_35] : memref<256x512xbf16, #tpu.memory_space<vmem>>, vector<256x512xbf16>
    %cst_36 = arith.constant dense<0.000000e+00> : vector<8x512xf32>
    %87 = tpu.matmul %85, %86, %cst_36 {dimension_numbers = #tpu.dot_dimension_numbers<[1], [0], [0], [1], [0, 0, 1, 1], [], []>} : vector<8x256xbf16>, vector<256x512xbf16>, vector<8x512xf32> -> vector<8x512xf32>
    %c0_37 = arith.constant 0 : index
    %c1536 = arith.constant 1536 : index
    %88 = vector.load %arg7[%c0_37, %c1536] : memref<1x4736xf32, #tpu.memory_space<vmem>>, vector<1x512xf32>
    %c0_38 = arith.constant 0 : index
    %c2048 = arith.constant 2048 : index
    %89 = vector.load %arg7[%c0_38, %c2048] : memref<1x4736xf32, #tpu.memory_space<vmem>>, vector<1x512xf32>
    %cst_39 = arith.constant dense<0.000000e+00> : vector<512xf32>
    %90 = vector.multi_reduction <add>, %87, %cst_39 [0] : vector<8x512xf32> to vector<512xf32>
    %91 = vector.shape_cast %90 : vector<512xf32> to vector<1x512xf32>
    %cst_40 = arith.constant 1.250000e-01 : f32
    %92 = vector.broadcast %cst_40 : f32 to vector<1x512xf32>
    %93 = arith.mulf %91, %92 : vector<1x512xf32>
    %94 = vector.broadcast %93 : vector<1x512xf32> to vector<8x512xf32>
    %95 = arith.subf %87, %94 : vector<8x512xf32>
    %96 = arith.mulf %95, %95 : vector<8x512xf32>
    %cst_41 = arith.constant dense<0.000000e+00> : vector<512xf32>
    %97 = vector.multi_reduction <add>, %96, %cst_41 [0] : vector<8x512xf32> to vector<512xf32>
    %98 = vector.shape_cast %97 : vector<512xf32> to vector<1x512xf32>
    %cst_42 = arith.constant 1.250000e-01 : f32
    %99 = vector.broadcast %cst_42 : f32 to vector<1x512xf32>
    %100 = arith.mulf %98, %99 : vector<1x512xf32>
    %cst_43 = arith.constant 9.99999974E-6 : f32
    %101 = vector.broadcast %cst_43 : f32 to vector<1x512xf32>
    %102 = arith.addf %100, %101 : vector<1x512xf32>
    %103 = math.rsqrt %102 : vector<1x512xf32>
    %104 = arith.mulf %88, %103 : vector<1x512xf32>
    %105 = arith.mulf %93, %104 : vector<1x512xf32>
    %106 = arith.subf %89, %105 : vector<1x512xf32>
    %107 = vector.broadcast %104 : vector<1x512xf32> to vector<8x512xf32>
    %108 = arith.mulf %87, %107 : vector<8x512xf32>
    %109 = vector.broadcast %106 : vector<1x512xf32> to vector<8x512xf32>
    %110 = arith.addf %108, %109 : vector<8x512xf32>
    %cst_44 = arith.constant 0.000000e+00 : f32
    %111 = vector.broadcast %cst_44 : f32 to vector<8x512xf32>
    %112 = arith.maximumf %110, %111 : vector<8x512xf32>
    %113 = arith.truncf %112 : vector<8x512xf32> to vector<8x512xbf16>
    %c0_45 = arith.constant 0 : index
    %c0_46 = arith.constant 0 : index
    %114 = vector.load %arg5[%c0_45, %c0_46] : memref<512x1024xbf16, #tpu.memory_space<vmem>>, vector<512x1024xbf16>
    %cst_47 = arith.constant dense<0.000000e+00> : vector<8x1024xf32>
    %115 = tpu.matmul %113, %114, %cst_47 {dimension_numbers = #tpu.dot_dimension_numbers<[1], [0], [0], [1], [0, 0, 1, 1], [], []>} : vector<8x512xbf16>, vector<512x1024xbf16>, vector<8x1024xf32> -> vector<8x1024xf32>
    %c0_48 = arith.constant 0 : index
    %c2560 = arith.constant 2560 : index
    %116 = vector.load %arg7[%c0_48, %c2560] : memref<1x4736xf32, #tpu.memory_space<vmem>>, vector<1x1024xf32>
    %c0_49 = arith.constant 0 : index
    %c3584 = arith.constant 3584 : index
    %117 = vector.load %arg7[%c0_49, %c3584] : memref<1x4736xf32, #tpu.memory_space<vmem>>, vector<1x1024xf32>
    %cst_50 = arith.constant dense<0.000000e+00> : vector<1024xf32>
    %118 = vector.multi_reduction <add>, %115, %cst_50 [0] : vector<8x1024xf32> to vector<1024xf32>
    %119 = vector.shape_cast %118 : vector<1024xf32> to vector<1x1024xf32>
    %cst_51 = arith.constant 1.250000e-01 : f32
    %120 = vector.broadcast %cst_51 : f32 to vector<1x1024xf32>
    %121 = arith.mulf %119, %120 : vector<1x1024xf32>
    %122 = vector.broadcast %121 : vector<1x1024xf32> to vector<8x1024xf32>
    %123 = arith.subf %115, %122 : vector<8x1024xf32>
    %124 = arith.mulf %123, %123 : vector<8x1024xf32>
    %cst_52 = arith.constant dense<0.000000e+00> : vector<1024xf32>
    %125 = vector.multi_reduction <add>, %124, %cst_52 [0] : vector<8x1024xf32> to vector<1024xf32>
    %126 = vector.shape_cast %125 : vector<1024xf32> to vector<1x1024xf32>
    %cst_53 = arith.constant 1.250000e-01 : f32
    %127 = vector.broadcast %cst_53 : f32 to vector<1x1024xf32>
    %128 = arith.mulf %126, %127 : vector<1x1024xf32>
    %cst_54 = arith.constant 9.99999974E-6 : f32
    %129 = vector.broadcast %cst_54 : f32 to vector<1x1024xf32>
    %130 = arith.addf %128, %129 : vector<1x1024xf32>
    %131 = math.rsqrt %130 : vector<1x1024xf32>
    %132 = arith.mulf %116, %131 : vector<1x1024xf32>
    %133 = arith.mulf %121, %132 : vector<1x1024xf32>
    %134 = arith.subf %117, %133 : vector<1x1024xf32>
    %135 = vector.broadcast %132 : vector<1x1024xf32> to vector<8x1024xf32>
    %136 = arith.mulf %115, %135 : vector<8x1024xf32>
    %137 = vector.broadcast %134 : vector<1x1024xf32> to vector<8x1024xf32>
    %138 = arith.addf %136, %137 : vector<8x1024xf32>
    %cst_55 = arith.constant 0.000000e+00 : f32
    %139 = vector.broadcast %cst_55 : f32 to vector<8x1024xf32>
    %140 = arith.maximumf %138, %139 : vector<8x1024xf32>
    %141 = arith.truncf %140 : vector<8x1024xf32> to vector<8x1024xbf16>
    %c0_56 = arith.constant 0 : index
    %c0_57 = arith.constant 0 : index
    %142 = vector.load %arg6[%c0_56, %c0_57] : memref<1024x128xbf16, #tpu.memory_space<vmem>>, vector<1024x128xbf16>
    %cst_58 = arith.constant dense<0.000000e+00> : vector<8x128xf32>
    %143 = tpu.matmul %141, %142, %cst_58 {dimension_numbers = #tpu.dot_dimension_numbers<[1], [0], [0], [1], [0, 0, 1, 1], [], []>} : vector<8x1024xbf16>, vector<1024x128xbf16>, vector<8x128xf32> -> vector<8x128xf32>
    %c0_59 = arith.constant 0 : index
    %c4608 = arith.constant 4608 : index
    %144 = vector.load %arg7[%c0_59, %c4608] : memref<1x4736xf32, #tpu.memory_space<vmem>>, vector<1x128xf32>
    %145 = vector.broadcast %144 : vector<1x128xf32> to vector<8x128xf32>
    %146 = arith.addf %143, %145 : vector<8x128xf32>
    %147 = arith.negf %146 : vector<8x128xf32>
    %148 = math.exp %147 : vector<8x128xf32>
    %cst_60 = arith.constant 1.000000e+00 : f32
    %149 = vector.broadcast %cst_60 : f32 to vector<8x128xf32>
    %150 = arith.addf %149, %148 : vector<8x128xf32>
    %151 = arith.divf %149, %150 : vector<8x128xf32>
    %c0_61 = arith.constant 0 : index
    %c0_62 = arith.constant 0 : index
    %152 = vector.load %arg8[%c0_61, %c0_62] : memref<8x128xf32, #tpu.memory_space<vmem>>, vector<8x128xf32>
    tpu.vector_store %arg8[%c0_61, %c0_62], %151 {strides = array<i32>} : memref<8x128xf32, #tpu.memory_space<vmem>>, vector<8x128xf32>,
    return
  }
}

</mosaic_0001>

<llo_original>
// kernel: generator_forward.1
$region0: #{generator_forward.1}
  #allocation0 [shape = 'u32[]', space=smem, size = 0x4, offset = 0x4, fixed_abs, tag = 'smem constant byte address 0x4 - core index']
  #allocation1 [shape = 'u32[144,128]{1,0:T(1,128)}', space=vmem, size = 0x12000, scoped, tag = 'internal scratch']
  %s0 = inlined_call_operand.vmem [shape: f32[8,32], index: 0, kind: input, shape index: {}]
  %s1 = inlined_call_operand.vmem [shape: bf16[32,256], index: 1, kind: input, shape index: {}]
  %s2 = inlined_call_operand.hbm [shape: bf16[256,256], index: 2, kind: input, shape index: {}]
  %s3 = inlined_call_operand.hbm [shape: bf16[256,256], index: 3, kind: input, shape index: {}]
  %s4 = inlined_call_operand.hbm [shape: bf16[256,512], index: 4, kind: input, shape index: {}]
  %s5 = inlined_call_operand.hbm [shape: bf16[512,1024], index: 5, kind: input, shape index: {}]
  %s6 = inlined_call_operand.hbm [shape: bf16[1024,128], index: 6, kind: input, shape index: {}]
  %s7 = inlined_call_operand.vmem [shape: f32[1,4736], index: 7, kind: input, shape index: {}]
  %s8 = inlined_call_operand.vmem [shape: f32[8,128], index: 8, kind: output, shape index: {}]
  %s9 = sld [smem:[#allocation0]]
  $region62: #{generator_forward.1} parent=0
    _
  %s11 = ssub.s32 1, %s9
  %s12 = scalar_select 0, %s11, %s9
  $region1: #{generator_forward.1} parent=0
    #allocation2 [shape = 'u8[131072]{0}', space=vmem, size = 0x20000, scoped, tag = 'input window, operand 2, single buffered']
    #allocation3 [shape = 's32[1]{0}', space=sflag, size = 0x4, scoped, tag = 'scoped memory for generator_forward.1']
    #allocation4 [shape = 'u8[131072]{0}', space=vmem, size = 0x20000, scoped, tag = 'input window, operand 3, single buffered']
    #allocation5 [shape = 's32[1]{0}', space=sflag, size = 0x4, scoped, tag = 'scoped memory for generator_forward.1']
    #allocation6 [shape = 'u8[262144]{0}', space=vmem, size = 0x40000, scoped, tag = 'input window, operand 4, single buffered']
    #allocation7 [shape = 'u8[1048576]{0}', space=vmem, size = 0x100000, scoped, tag = 'input window, operand 5, single buffered']
    #allocation8 [shape = 's32[1]{0}', space=sflag, size = 0x4, scoped, tag = 'scoped memory for generator_forward.1']
    #allocation9 [shape = 'u8[262144]{0}', space=vmem, size = 0x40000, scoped, tag = 'input window, operand 6, single buffered']
    %13 = vsyncpa [#allocation3], 0
    %14 = vsyncpa [#allocation5], 0
    %15 = vsyncpa [#allocation8], 0
    // Predicated region
    $region2: #{generator_forward.1} parent=1 // pred_check
      _
    $region3: #{generator_forward.1} parent=1 // pred_check_branch
      %17 = sbr.rel (0) target = $region5
    $region4: #{generator_forward.1} parent=1 // pred_region
      _
    $region5: #{generator_forward.1} parent=1 // pred_fallthru
      _
    // Predicated region
    $region6: #{generator_forward.1} parent=1 // pred_check
      _
    $region7: #{generator_forward.1} parent=1 // pred_check_branch
      %19 = sbr.rel (0) target = $region9
    $region8: #{generator_forward.1} parent=1 // pred_region
      _
    $region9: #{generator_forward.1} parent=1 // pred_fallthru
      _
    // Predicated region
    $region10: #{generator_forward.1} parent=1 // pred_check
      _
    $region11: #{generator_forward.1} parent=1 // pred_check_branch
      %21 = sbr.rel (0) target = $region13
    $region12: #{generator_forward.1} parent=1 // pred_region
      %s23 = ssub.s32 4096, 4096
      %24 = vsyncadd [#allocation3], %s23
      %s25 = sshll.u32 [#allocation2], 4
      %s26 = int_to_ptr.vmem [resolvable:$true] %s25
      %31 = dma.hbm_to_vmem [thread:$0]  %s2, 4096, %s26, [#allocation3], 128, 128, 8
    $region13: #{generator_forward.1} parent=1 // pred_fallthru
      _
    // Predicated region
    $region14: #{generator_forward.1} parent=1 // pred_check
      _
    $region15: #{generator_forward.1} parent=1 // pred_check_branch
      %33 = sbr.rel (0) target = $region17
    $region16: #{generator_forward.1} parent=1 // pred_region
      %s35 = ssub.s32 4096, 4096
      %36 = vsyncadd [#allocation5], %s35
      %s37 = sshll.u32 [#allocation4], 4
      %s38 = int_to_ptr.vmem [resolvable:$true] %s37
      %43 = dma.hbm_to_vmem [thread:$0]  %s3, 4096, %s38, [#allocation5], 128, 128, 8
    $region17: #{generator_forward.1} parent=1 // pred_fallthru
      _
    // Predicated region
    $region18: #{generator_forward.1} parent=1 // pred_check
      _
    $region19: #{generator_forward.1} parent=1 // pred_check_branch
      %45 = sbr.rel (0) target = $region21
    $region20: #{generator_forward.1} parent=1 // pred_region
      %s47 = ssub.s32 8192, 8192
      %48 = vsyncadd [#allocation5], %s47
      %s49 = sshll.u32 [#allocation6], 4
      %s50 = int_to_ptr.vmem [resolvable:$true] %s49
      %55 = dma.hbm_to_vmem [thread:$0]  %s4, 8192, %s50, [#allocation5], 256, 256, 16
    $region21: #{generator_forward.1} parent=1 // pred_fallthru
      _
    // Predicated region
    $region22: #{generator_forward.1} parent=1 // pred_check
      _
    $region23: #{generator_forward.1} parent=1 // pred_check_branch
      %57 = sbr.rel (0) target = $region25
    $region24: #{generator_forward.1} parent=1 // pred_region
      %s59 = ssub.s32 32768, 32768
      %60 = vsyncadd [#allocation8], %s59
      %s61 = sshll.u32 [#allocation7], 4
      %s62 = int_to_ptr.vmem [resolvable:$true] %s61
      %67 = dma.hbm_to_vmem [thread:$0]  %s5, 32768, %s62, [#allocation8], 512, 512, 32
    $region25: #{generator_forward.1} parent=1 // pred_fallthru
      _
    // Predicated region
    $region26: #{generator_forward.1} parent=1 // pred_check
      _
    $region27: #{generator_forward.1} parent=1 // pred_check_branch
      %69 = sbr.rel (0) target = $region29
    $region28: #{generator_forward.1} parent=1 // pred_region
      %s71 = ssub.s32 8192, 8192
      %72 = vsyncadd [#allocation8], %s71
      %s73 = sshll.u32 [#allocation9], 4
      %s74 = int_to_ptr.vmem [resolvable:$true] %s73
      %79 = dma.hbm_to_vmem [thread:$0]  %s6, 8192, %s74, [#allocation8], 64, 64, 4
    $region29: #{generator_forward.1} parent=1 // pred_fallthru
      _
    // Predicated region
    $region30: #{generator_forward.1} parent=1 // pred_check
      _
    $region31: #{generator_forward.1} parent=1 // pred_check_branch
      %81 = sbr.rel (0) target = $region33
    $region32: #{generator_forward.1} parent=1 // pred_region
      _
    $region33: #{generator_forward.1} parent=1 // pred_fallthru
      _
    // Predicated region
    $region34: #{generator_forward.1} parent=1 // pred_check
      _
    $region35: #{generator_forward.1} parent=1 // pred_check_branch
      %83 = sbr.rel (0) target = $region37
    $region36: #{generator_forward.1} parent=1 // pred_region
      %84 = dma.done [#allocation3], 4096
    $region37: #{generator_forward.1} parent=1 // pred_fallthru
      _
    // Predicated region
    $region38: #{generator_forward.1} parent=1 // pred_check
      _
    $region39: #{generator_forward.1} parent=1 // pred_check_branch
      %86 = sbr.rel (0) target = $region41
    $region40: #{generator_forward.1} parent=1 // pred_region
      %87 = dma.done [#allocation5], 4096
    $region41: #{generator_forward.1} parent=1 // pred_fallthru
      _
    // Predicated region
    $region42: #{generator_forward.1} parent=1 // pred_check
      _
    $region43: #{generator_forward.1} parent=1 // pred_check_branch
      %89 = sbr.rel (0) target = $region45
    $region44: #{generator_forward.1} parent=1 // pred_region
      %90 = dma.done [#allocation5], 8192
    $region45: #{generator_forward.1} parent=1 // pred_fallthru
      _
    // Predicated region
    $region46: #{generator_forward.1} parent=1 // pred_check
      _
    $region47: #{generator_forward.1} parent=1 // pred_check_branch
      %92 = sbr.rel (0) target = $region49
    $region48: #{generator_forward.1} parent=1 // pred_region
      %93 = dma.done [#allocation8], 32768
    $region49: #{generator_forward.1} parent=1 // pred_fallthru
      _
    // Predicated region
    $region50: #{generator_forward.1} parent=1 // pred_check
      _
    $region51: #{generator_forward.1} parent=1 // pred_check_branch
      %95 = sbr.rel (0) target = $region53
    $region52: #{generator_forward.1} parent=1 // pred_region
      %96 = dma.done [#allocation8], 8192
    $region53: #{generator_forward.1} parent=1 // pred_fallthru
      _
    %v98 = vld [vmem:[%s0] sm:$0xff]
    %v99 = vpack.c.bf16 %v98, %v98
    %v100 = vld [vmem:[%s1] sm:$0xff]
    %v101 = vld [vmem:[%s1 + $0x8] sm:$0xff]
    %v102 = vld [vmem:[%s1 + $0x10] sm:$0xff]
    %v103 = vld [vmem:[%s1 + $0x18] sm:$0xff]
    %v108 = vunpack.c.l.b16 %v100
    %v109 = vunpack.c.h.b16 %v100
    %v110 = vunpack.c.l.b16 %v101
    %v111 = vunpack.c.h.b16 %v101
    %v112 = vunpack.c.l.b16 %v102
    %v113 = vunpack.c.h.b16 %v102
    %v114 = vunpack.c.l.b16 %v103
    %v115 = vunpack.c.h.b16 %v103
    %v116 = vpack.c.b16 %v110, %v108
    %v117 = vpack.c.b16 %v111, %v109
    %v118 = vpack.c.b16 %v114, %v112
    %v119 = vpack.c.b16 %v115, %v113
    %vm124 = vcmask 261120
    %v126 = vsel %vm124, %v99, 0
    %128 = vmatprep.subr.bf16.mxu0 %v117
    %129 = vmatpush1.bf16.msra.mxu0 %v116
    %130 = vmatprep.subr.bf16.mxu0 %v119
    %131 = vmatpush1.bf16.msra.mxu0 %v118
    %132 = vmatprep.subr.bf16.mxu0 0
    %133 = vmatpush1.bf16.msra.mxu0 0
    %134 = vmatprep.subr.bf16.mxu0 0
    %135 = vmatpush1.bf16.msra.mxu0 0
    %136 = vmatprep.subr.bf16.mxu0 0
    %137 = vmatpush1.bf16.msra.mxu0 0
    %138 = vmatprep.subr.bf16.mxu0 0
    %139 = vmatpush1.bf16.msra.mxu0 0
    %140 = vmatprep.subr.bf16.mxu0 0
    %141 = vmatpush1.bf16.msra.mxu0 0
    %142 = vmatprep.subr.bf16.mxu0 0
    %143 = vmatpush1.bf16.msra.mxu0 0
    %144 = vmatprep.subr.bf16.mxu0 0
    %145 = vmatpush1.bf16.msra.mxu0 0
    %146 = vmatprep.subr.bf16.mxu0 0
    %147 = vmatpush1.bf16.msra.mxu0 0
    %148 = vmatprep.subr.bf16.mxu0 0
    %149 = vmatpush1.bf16.msra.mxu0 0
    %150 = vmatprep.subr.bf16.mxu0 0
    %151 = vmatpush1.bf16.msra.mxu0 0
    %152 = vmatprep.subr.bf16.mxu0 0
    %153 = vmatpush1.bf16.msra.mxu0 0
    %154 = vmatprep.subr.bf16.mxu0 0
    %155 = vmatpush1.bf16.msra.mxu0 0
    %156 = vmatprep.subr.bf16.mxu0 0
    %157 = vmatpush1.bf16.msra.mxu0 0
    %158 = vmatprep.subr.bf16.mxu0 0
    %159 = vmatpush1.bf16.msra.mxu0 0
    %160 = vmatprep.mubr.bf16.mxu0 0
    %161 = vmatmul.mubr.bf16.gmra.mrb[0].mxu0 %v126
    %v162 = vpop.f32.mrb[0].mxu0
    %v163 = vadd.f32 0.0, %v162
    %v164 = vpop.f32.mrb[0].mxu0
    %v165 = vadd.f32 0.0, %v164
    %v166 = vpop.f32.mrb[0].mxu0
    %v167 = vpop.f32.mrb[0].mxu0
    %168 = vdwg.mxu0
    %v169 = vld [vmem:[%s7] sm:$0x3]
    %v170 = vld [vmem:[%s7 + $0x2] sm:$0x3]
    %v171 = vrot.slane %v163, 4
    %v172 = vadd.f32 %v163, %v171
    %v173 = vrot.slane %v172, 2
    %v174 = vadd.f32 %v172, %v173
    %v175 = vrot.slane %v174, 1
    %v176 = vadd.f32 %v174, %v175
    %v177 = vrot.slane %v165, 4
    %v178 = vadd.f32 %v165, %v177
    %v179 = vrot.slane %v178, 2
    %v180 = vadd.f32 %v178, %v179
    %v181 = vrot.slane %v180, 1
    %v182 = vadd.f32 %v180, %v181
    %v183 = vmul.f32 %v176, 0.125
    %v184 = vmul.f32 %v182, 0.125
    %v185 = vsub.f32 %v163, %v183
    %v186 = vsub.f32 %v165, %v184
    %v187 = vmul.f32 %v185, %v185
    %v188 = vmul.f32 %v186, %v186
    %v189 = vrot.slane %v187, 4
    %v190 = vadd.f32 %v187, %v189
    %v191 = vrot.slane %v190, 2
    %v192 = vadd.f32 %v190, %v191
    %v193 = vrot.slane %v192, 1
    %v194 = vadd.f32 %v192, %v193
    %v195 = vrot.slane %v188, 4
    %v196 = vadd.f32 %v188, %v195
    %v197 = vrot.slane %v196, 2
    %v198 = vadd.f32 %v196, %v197
    %v199 = vrot.slane %v198, 1
    %v200 = vadd.f32 %v198, %v199
    %v201 = vmul.f32 %v194, 0.125
    %v202 = vmul.f32 %v200, 0.125
    %v203 = vadd.f32 %v201, 1e-05
    %v204 = vadd.f32 %v202, 1e-05
    %v205 = vrsqrt.pop %v203
    %v206 = vrsqrt.pop %v204
    %v209 = vcombine.low %v205, %v206
    %v211 = vunpack.c.l.s4 1966171168
    %v212 = vunpack.c.0.s8 %v211
    %v213 = vlaneseq
    %v214 = vshrl.u32 %v213, 7
    %v215 = vsub.s32 %v212, %v214
    %v216 = vrot.slane %v209, %v215
    %v218 = vunpack.c.l.s4 1966171168
    %v219 = vunpack.c.0.s8 %v218
    %v220 = vlaneseq
    %v221 = vshrl.u32 %v220, 7
    %v222 = vsub.s32 %v219, %v221
    %v223 = vrot.slane %v216, %v222
    %v225 = vmul.f32 %v169, %v223
    %v227 = vlaneseq
    %v228 = vshrl.u32 %v227, 7
    %v229 = vsub.s32 0, %v228
    %v230 = vrot.slane %v225, %v229
    %v231 = vlaneseq
    %v232 = vshrl.u32 %v231, 7
    %v233 = vsub.s32 1, %v232
    %v234 = vrot.slane %v225, %v233
    %v237 = vmul.f32 %v183, %v230
    %v238 = vmul.f32 %v184, %v234
    %v241 = vcombine.low %v237, %v238
    %v243 = vunpack.c.l.s4 1966171168
    %v244 = vunpack.c.0.s8 %v243
    %v245 = vlaneseq
    %v246 = vshrl.u32 %v245, 7
    %v247 = vsub.s32 %v244, %v246
    %v248 = vrot.slane %v241, %v247
    %v250 = vunpack.c.l.s4 1966171168
    %v251 = vunpack.c.0.s8 %v250
    %v252 = vlaneseq
    %v253 = vshrl.u32 %v252, 7
    %v254 = vsub.s32 %v251, %v253
    %v255 = vrot.slane %v248, %v254
    %v257 = vsub.f32 %v170, %v255
    %v258 = vmul.f32 %v163, %v230
    %v259 = vmul.f32 %v165, %v234
    %v261 = vlaneseq
    %v262 = vshrl.u32 %v261, 7
    %v263 = vsub.s32 0, %v262
    %v264 = vrot.slane %v257, %v263
    %v265 = vlaneseq
    %v266 = vshrl.u32 %v265, 7
    %v267 = vsub.s32 1, %v266
    %v268 = vrot.slane %v257, %v267
    %v271 = vadd.f32 %v258, %v264
    %v272 = vadd.f32 %v259, %v268
    %v273 = vmax.f32 %v271, 0.0
    %v274 = vmax.f32 %v272, 0.0
    %v275 = vpack.c.bf16 %v273, %v273
    %v276 = vpack.c.bf16 %v274, %v274
    %v277 = vld [vmem:[#allocation2] sm:$0xff]
    %v278 = vld [vmem:[#allocation2 + $0x8] sm:$0xff]
    %v279 = vld [vmem:[#allocation2 + $0x10] sm:$0xff]
    %v280 = vld [vmem:[#allocation2 + $0x18] sm:$0xff]
    %v281 = vld [vmem:[#allocation2 + $0x20] sm:$0xff]
    %v282 = vld [vmem:[#allocation2 + $0x28] sm:$0xff]
    %v283 = vld [vmem:[#allocation2 + $0x30] sm:$0xff]
    %v284 = vld [vmem:[#allocation2 + $0x38] sm:$0xff]
    %v285 = vld [vmem:[#allocation2 + $0x40] sm:$0xff]
    %v286 = vld [vmem:[#allocation2 + $0x48] sm:$0xff]
    %v287 = vld [vmem:[#allocation2 + $0x50] sm:$0xff]
    %v288 = vld [vmem:[#allocation2 + $0x58] sm:$0xff]
    %v289 = vld [vmem:[#allocation2 + $0x60] sm:$0xff]
    %v290 = vld [vmem:[#allocation2 + $0x68] sm:$0xff]
    %v291 = vld [vmem:[#allocation2 + $0x70] sm:$0xff]
    %v292 = vld [vmem:[#allocation2 + $0x78] sm:$0xff]
    %v293 = vld [vmem:[#allocation2 + $0x80] sm:$0xff]
    %v294 = vld [vmem:[#allocation2 + $0x88] sm:$0xff]
    %v295 = vld [vmem:[#allocation2 + $0x90] sm:$0xff]
    %v296 = vld [vmem:[#allocation2 + $0x98] sm:$0xff]
    %v297 = vld [vmem:[#allocation2 + $0xa0] sm:$0xff]
    %v298 = vld [vmem:[#allocation2 + $0xa8] sm:$0xff]
    %v299 = vld [vmem:[#allocation2 + $0xb0] sm:$0xff]
    %v300 = vld [vmem:[#allocation2 + $0xb8] sm:$0xff]
    %v301 = vld [vmem:[#allocation2 + $0xc0] sm:$0xff]
    %v302 = vld [vmem:[#allocation2 + $0xc8] sm:$0xff]
    %v303 = vld [vmem:[#allocation2 + $0xd0] sm:$0xff]
    %v304 = vld [vmem:[#allocation2 + $0xd8] sm:$0xff]
    %v305 = vld [vmem:[#allocation2 + $0xe0] sm:$0xff]
    %v306 = vld [vmem:[#allocation2 + $0xe8] sm:$0xff]
    %v307 = vld [vmem:[#allocation2 + $0xf0] sm:$0xff]
    %v308 = vld [vmem:[#allocation2 + $0xf8] sm:$0xff]
    %v341 = vunpack.c.l.b16 %v277
    %v342 = vunpack.c.h.b16 %v277
    %v343 = vunpack.c.l.b16 %v278
    %v344 = vunpack.c.h.b16 %v278
    %v345 = vunpack.c.l.b16 %v279
    %v346 = vunpack.c.h.b16 %v279
    %v347 = vunpack.c.l.b16 %v280
    %v348 = vunpack.c.h.b16 %v280
    %v349 = vunpack.c.l.b16 %v281
    %v350 = vunpack.c.h.b16 %v281
    %v351 = vunpack.c.l.b16 %v282
    %v352 = vunpack.c.h.b16 %v282
    %v353 = vunpack.c.l.b16 %v283
    %v354 = vunpack.c.h.b16 %v283
    %v355 = vunpack.c.l.b16 %v284
    %v356 = vunpack.c.h.b16 %v284
    %v357 = vunpack.c.l.b16 %v285
    %v358 = vunpack.c.h.b16 %v285
    %v359 = vunpack.c.l.b16 %v286
    %v360 = vunpack.c.h.b16 %v286
    %v361 = vunpack.c.l.b16 %v287
    %v362 = vunpack.c.h.b16 %v287
    %v363 = vunpack.c.l.b16 %v288
    %v364 = vunpack.c.h.b16 %v288
    %v365 = vunpack.c.l.b16 %v289
    %v366 = vunpack.c.h.b16 %v289
    %v367 = vunpack.c.l.b16 %v290
    %v368 = vunpack.c.h.b16 %v290
    %v369 = vunpack.c.l.b16 %v291
    %v370 = vunpack.c.h.b16 %v291
    %v371 = vunpack.c.l.b16 %v292
    %v372 = vunpack.c.h.b16 %v292
    %v373 = vunpack.c.l.b16 %v293
    %v374 = vunpack.c.h.b16 %v293
    %v375 = vunpack.c.l.b16 %v294
    %v376 = vunpack.c.h.b16 %v294
    %v377 = vunpack.c.l.b16 %v295
    %v378 = vunpack.c.h.b16 %v295
    %v379 = vunpack.c.l.b16 %v296
    %v380 = vunpack.c.h.b16 %v296
    %v381 = vunpack.c.l.b16 %v297
    %v382 = vunpack.c.h.b16 %v297
    %v383 = vunpack.c.l.b16 %v298
    %v384 = vunpack.c.h.b16 %v298
    %v385 = vunpack.c.l.b16 %v299
    %v386 = vunpack.c.h.b16 %v299
    %v387 = vunpack.c.l.b16 %v300
    %v388 = vunpack.c.h.b16 %v300
    %v389 = vunpack.c.l.b16 %v301
    %v390 = vunpack.c.h.b16 %v301
    %v391 = vunpack.c.l.b16 %v302
    %v392 = vunpack.c.h.b16 %v302
    %v393 = vunpack.c.l.b16 %v303
    %v394 = vunpack.c.h.b16 %v303
    %v395 = vunpack.c.l.b16 %v304
    %v396 = vunpack.c.h.b16 %v304
    %v397 = vunpack.c.l.b16 %v305
    %v398 = vunpack.c.h.b16 %v305
    %v399 = vunpack.c.l.b16 %v306
    %v400 = vunpack.c.h.b16 %v306
    %v401 = vunpack.c.l.b16 %v307
    %v402 = vunpack.c.h.b16 %v307
    %v403 = vunpack.c.l.b16 %v308
    %v404 = vunpack.c.h.b16 %v308
    %v405 = vpack.c.b16 %v343, %v341
    %v406 = vpack.c.b16 %v344, %v342
    %v407 = vpack.c.b16 %v347, %v345
    %v408 = vpack.c.b16 %v348, %v346
    %v409 = vpack.c.b16 %v351, %v349
    %v410 = vpack.c.b16 %v352, %v350
    %v411 = vpack.c.b16 %v355, %v353
    %v412 = vpack.c.b16 %v356, %v354
    %v413 = vpack.c.b16 %v359, %v357
    %v414 = vpack.c.b16 %v360, %v358
    %v415 = vpack.c.b16 %v363, %v361
    %v416 = vpack.c.b16 %v364, %v362
    %v417 = vpack.c.b16 %v367, %v365
    %v418 = vpack.c.b16 %v368, %v366
    %v419 = vpack.c.b16 %v371, %v369
    %v420 = vpack.c.b16 %v372, %v370
    %v421 = vpack.c.b16 %v375, %v373
    %v422 = vpack.c.b16 %v376, %v374
    %v423 = vpack.c.b16 %v379, %v377
    %v424 = vpack.c.b16 %v380, %v378
    %v425 = vpack.c.b16 %v383, %v381
    %v426 = vpack.c.b16 %v384, %v382
    %v427 = vpack.c.b16 %v387, %v385
    %v428 = vpack.c.b16 %v388, %v386
    %v429 = vpack.c.b16 %v391, %v389
    %v430 = vpack.c.b16 %v392, %v390
    %v431 = vpack.c.b16 %v395, %v393
    %v432 = vpack.c.b16 %v396, %v394
    %v433 = vpack.c.b16 %v399, %v397
    %v434 = vpack.c.b16 %v400, %v398
    %v435 = vpack.c.b16 %v403, %v401
    %v436 = vpack.c.b16 %v404, %v402
    %469 = vmatprep.subr.bf16.mxu0 %v406
    %470 = vmatpush1.bf16.msra.mxu0 %v405
    %471 = vmatprep.subr.bf16.mxu0 %v408
    %472 = vmatpush1.bf16.msra.mxu0 %v407
    %473 = vmatprep.subr.bf16.mxu0 %v410
    %474 = vmatpush1.bf16.msra.mxu0 %v409
    %475 = vmatprep.subr.bf16.mxu0 %v412
    %476 = vmatpush1.bf16.msra.mxu0 %v411
    %477 = vmatprep.subr.bf16.mxu0 %v414
    %478 = vmatpush1.bf16.msra.mxu0 %v413
    %479 = vmatprep.subr.bf16.mxu0 %v416
    %480 = vmatpush1.bf16.msra.mxu0 %v415
    %481 = vmatprep.subr.bf16.mxu0 %v418
    %482 = vmatpush1.bf16.msra.mxu0 %v417
    %483 = vmatprep.subr.bf16.mxu0 %v420
    %484 = vmatpush1.bf16.msra.mxu0 %v419
    %485 = vmatprep.subr.bf16.mxu0 %v422
    %486 = vmatpush1.bf16.msra.mxu0 %v421
    %487 = vmatprep.subr.bf16.mxu0 %v424
    %488 = vmatpush1.bf16.msra.mxu0 %v423
    %489 = vmatprep.subr.bf16.mxu0 %v426
    %490 = vmatpush1.bf16.msra.mxu0 %v425
    %491 = vmatprep.subr.bf16.mxu0 %v428
    %492 = vmatpush1.bf16.msra.mxu0 %v427
    %493 = vmatprep.subr.bf16.mxu0 %v430
    %494 = vmatpush1.bf16.msra.mxu0 %v429
    %495 = vmatprep.subr.bf16.mxu0 %v432
    %496 = vmatpush1.bf16.msra.mxu0 %v431
    %497 = vmatprep.subr.bf16.mxu0 %v434
    %498 = vmatpush1.bf16.msra.mxu0 %v433
    %499 = vmatprep.subr.bf16.mxu0 %v436
    %500 = vmatpush1.bf16.msra.mxu0 %v435
    %501 = vmatprep.mubr.bf16.mxu0 %v276
    %502 = vmatmul.mubr.bf16.gmra.mrb[0].mxu0 %v275
    %v503 = vpop.f32.mrb[0].mxu0
    %v504 = vadd.f32 0.0, %v503
    %v505 = vpop.f32.mrb[0].mxu0
    %v506 = vadd.f32 0.0, %v505
    %v507 = vpop.f32.mrb[0].mxu0
    %v508 = vpop.f32.mrb[0].mxu0
    %509 = vdwg.mxu0
    %v510 = vld [vmem:[%s7 + $0x4] sm:$0x3]
    %v511 = vld [vmem:[%s7 + $0x6] sm:$0x3]
    %v512 = vrot.slane %v504, 4
    %v513 = vadd.f32 %v504, %v512
    %v514 = vrot.slane %v513, 2
    %v515 = vadd.f32 %v513, %v514
    %v516 = vrot.slane %v515, 1
    %v517 = vadd.f32 %v515, %v516
    %v518 = vrot.slane %v506, 4
    %v519 = vadd.f32 %v506, %v518
    %v520 = vrot.slane %v519, 2
    %v521 = vadd.f32 %v519, %v520
    %v522 = vrot.slane %v521, 1
    %v523 = vadd.f32 %v521, %v522
    %v524 = vmul.f32 %v517, 0.125
    %v525 = vmul.f32 %v523, 0.125
    %v526 = vsub.f32 %v504, %v524
    %v527 = vsub.f32 %v506, %v525
    %v528 = vmul.f32 %v526, %v526
    %v529 = vmul.f32 %v527, %v527
    %v530 = vrot.slane %v528, 4
    %v531 = vadd.f32 %v528, %v530
    %v532 = vrot.slane %v531, 2
    %v533 = vadd.f32 %v531, %v532
    %v534 = vrot.slane %v533, 1
    %v535 = vadd.f32 %v533, %v534
    %v536 = vrot.slane %v529, 4
    %v537 = vadd.f32 %v529, %v536
    %v538 = vrot.slane %v537, 2
    %v539 = vadd.f32 %v537, %v538
    %v540 = vrot.slane %v539, 1
    %v541 = vadd.f32 %v539, %v540
    %v542 = vmul.f32 %v535, 0.125
    %v543 = vmul.f32 %v541, 0.125
    %v544 = vadd.f32 %v542, 1e-05
    %v545 = vadd.f32 %v543, 1e-05
    %v546 = vrsqrt.pop %v544
    %v547 = vrsqrt.pop %v545
    %v550 = vcombine.low %v546, %v547
    %v552 = vunpack.c.l.s4 1966171168
    %v553 = vunpack.c.0.s8 %v552
    %v554 = vlaneseq
    %v555 = vshrl.u32 %v554, 7
    %v556 = vsub.s32 %v553, %v555
    %v557 = vrot.slane %v550, %v556
    %v559 = vunpack.c.l.s4 1966171168
    %v560 = vunpack.c.0.s8 %v559
    %v561 = vlaneseq
    %v562 = vshrl.u32 %v561, 7
    %v563 = vsub.s32 %v560, %v562
    %v564 = vrot.slane %v557, %v563
    %v566 = vmul.f32 %v510, %v564
    %v568 = vlaneseq
    %v569 = vshrl.u32 %v568, 7
    %v570 = vsub.s32 0, %v569
    %v571 = vrot.slane %v566, %v570
    %v572 = vlaneseq
    %v573 = vshrl.u32 %v572, 7
    %v574 = vsub.s32 1, %v573
    %v575 = vrot.slane %v566, %v574
    %v578 = vmul.f32 %v524, %v571
    %v579 = vmul.f32 %v525, %v575
    %v582 = vcombine.low %v578, %v579
    %v584 = vunpack.c.l.s4 1966171168
    %v585 = vunpack.c.0.s8 %v584
    %v586 = vlaneseq
    %v587 = vshrl.u32 %v586, 7
    %v588 = vsub.s32 %v585, %v587
    %v589 = vrot.slane %v582, %v588
    %v591 = vunpack.c.l.s4 1966171168
    %v592 = vunpack.c.0.s8 %v591
    %v593 = vlaneseq
    %v594 = vshrl.u32 %v593, 7
    %v595 = vsub.s32 %v592, %v594
    %v596 = vrot.slane %v589, %v595
    %v598 = vsub.f32 %v511, %v596
    %v599 = vmul.f32 %v504, %v571
    %v600 = vmul.f32 %v506, %v575
    %v602 = vlaneseq
    %v603 = vshrl.u32 %v602, 7
    %v604 = vsub.s32 0, %v603
    %v605 = vrot.slane %v598, %v604
    %v606 = vlaneseq
    %v607 = vshrl.u32 %v606, 7
    %v608 = vsub.s32 1, %v607
    %v609 = vrot.slane %v598, %v608
    %v612 = vadd.f32 %v599, %v605
    %v613 = vadd.f32 %v600, %v609
    %v614 = vmax.f32 %v612, 0.0
    %v615 = vmax.f32 %v613, 0.0
    %v616 = vpack.c.bf16 %v614, %v614
    %v617 = vpack.c.bf16 %v615, %v615
    %v618 = vld [vmem:[#allocation4] sm:$0xff]
    %v619 = vld [vmem:[#allocation4 + $0x8] sm:$0xff]
    %v620 = vld [vmem:[#allocation4 + $0x10] sm:$0xff]
    %v621 = vld [vmem:[#allocation4 + $0x18] sm:$0xff]
    %v622 = vld [vmem:[#allocation4 + $0x20] sm:$0xff]
    %v623 = vld [vmem:[#allocation4 + $0x28] sm:$0xff]
    %v624 = vld [vmem:[#allocation4 + $0x30] sm:$0xff]
    %v625 = vld [vmem:[#allocation4 + $0x38] sm:$0xff]
    %v626 = vld [vmem:[#allocation4 + $0x40] sm:$0xff]
    %v627 = vld [vmem:[#allocation4 + $0x48] sm:$0xff]
    %v628 = vld [vmem:[#allocation4 + $0x50] sm:$0xff]
    %v629 = vld [vmem:[#allocation4 + $0x58] sm:$0xff]
    %v630 = vld [vmem:[#allocation4 + $0x60] sm:$0xff]
    %v631 = vld [vmem:[#allocation4 + $0x68] sm:$0xff]
    %v632 = vld [vmem:[#allocation4 + $0x70] sm:$0xff]
    %v633 = vld [vmem:[#allocation4 + $0x78] sm:$0xff]
    %v634 = vld [vmem:[#allocation4 + $0x80] sm:$0xff]
    %v635 = vld [vmem:[#allocation4 + $0x88] sm:$0xff]
    %v636 = vld [vmem:[#allocation4 + $0x90] sm:$0xff]
    %v637 = vld [vmem:[#allocation4 + $0x98] sm:$0xff]
    %v638 = vld [vmem:[#allocation4 + $0xa0] sm:$0xff]
    %v639 = vld [vmem:[#allocation4 + $0xa8] sm:$0xff]
    %v640 = vld [vmem:[#allocation4 + $0xb0] sm:$0xff]
    %v641 = vld [vmem:[#allocation4 + $0xb8] sm:$0xff]
    %v642 = vld [vmem:[#allocation4 + $0xc0] sm:$0xff]
    %v643 = vld [vmem:[#allocation4 + $0xc8] sm:$0xff]
    %v644 = vld [vmem:[#allocation4 + $0xd0] sm:$0xff]
    %v645 = vld [vmem:[#allocation4 + $0xd8] sm:$0xff]
    %v646 = vld [vmem:[#allocation4 + $0xe0] sm:$0xff]
    %v647 = vld [vmem:[#allocation4 + $0xe8] sm:$0xff]
    %v648 = vld [vmem:[#allocation4 + $0xf0] sm:$0xff]
    %v649 = vld [vmem:[#allocation4 + $0xf8] sm:$0xff]
    %v682 = vunpack.c.l.b16 %v618
    %v683 = vunpack.c.h.b16 %v618
    %v684 = vunpack.c.l.b16 %v619
    %v685 = vunpack.c.h.b16 %v619
    %v686 = vunpack.c.l.b16 %v620
    %v687 = vunpack.c.h.b16 %v620
    %v688 = vunpack.c.l.b16 %v621
    %v689 = vunpack.c.h.b16 %v621
    %v690 = vunpack.c.l.b16 %v622
    %v691 = vunpack.c.h.b16 %v622
    %v692 = vunpack.c.l.b16 %v623
    %v693 = vunpack.c.h.b16 %v623
    %v694 = vunpack.c.l.b16 %v624
    %v695 = vunpack.c.h.b16 %v624
    %v696 = vunpack.c.l.b16 %v625
    %v697 = vunpack.c.h.b16 %v625
    %v698 = vunpack.c.l.b16 %v626
    %v699 = vunpack.c.h.b16 %v626
    %v700 = vunpack.c.l.b16 %v627
    %v701 = vunpack.c.h.b16 %v627
    %v702 = vunpack.c.l.b16 %v628
    %v703 = vunpack.c.h.b16 %v628
    %v704 = vunpack.c.l.b16 %v629
    %v705 = vunpack.c.h.b16 %v629
    %v706 = vunpack.c.l.b16 %v630
    %v707 = vunpack.c.h.b16 %v630
    %v708 = vunpack.c.l.b16 %v631
    %v709 = vunpack.c.h.b16 %v631
    %v710 = vunpack.c.l.b16 %v632
    %v711 = vunpack.c.h.b16 %v632
    %v712 = vunpack.c.l.b16 %v633
    %v713 = vunpack.c.h.b16 %v633
    %v714 = vunpack.c.l.b16 %v634
    %v715 = vunpack.c.h.b16 %v634
    %v716 = vunpack.c.l.b16 %v635
    %v717 = vunpack.c.h.b16 %v635
    %v718 = vunpack.c.l.b16 %v636
    %v719 = vunpack.c.h.b16 %v636
    %v720 = vunpack.c.l.b16 %v637
    %v721 = vunpack.c.h.b16 %v637
    %v722 = vunpack.c.l.b16 %v638
    %v723 = vunpack.c.h.b16 %v638
    %v724 = vunpack.c.l.b16 %v639
    %v725 = vunpack.c.h.b16 %v639
    %v726 = vunpack.c.l.b16 %v640
    %v727 = vunpack.c.h.b16 %v640
    %v728 = vunpack.c.l.b16 %v641
    %v729 = vunpack.c.h.b16 %v641
    %v730 = vunpack.c.l.b16 %v642
    %v731 = vunpack.c.h.b16 %v642
    %v732 = vunpack.c.l.b16 %v643
    %v733 = vunpack.c.h.b16 %v643
    %v734 = vunpack.c.l.b16 %v644
    %v735 = vunpack.c.h.b16 %v644
    %v736 = vunpack.c.l.b16 %v645
    %v737 = vunpack.c.h.b16 %v645
    %v738 = vunpack.c.l.b16 %v646
    %v739 = vunpack.c.h.b16 %v646
    %v740 = vunpack.c.l.b16 %v647
    %v741 = vunpack.c.h.b16 %v647
    %v742 = vunpack.c.l.b16 %v648
    %v743 = vunpack.c.h.b16 %v648
    %v744 = vunpack.c.l.b16 %v649
    %v745 = vunpack.c.h.b16 %v649
    %v746 = vpack.c.b16 %v684, %v682
    %v747 = vpack.c.b16 %v685, %v683
    %v748 = vpack.c.b16 %v688, %v686
    %v749 = vpack.c.b16 %v689, %v687
    %v750 = vpack.c.b16 %v692, %v690
    %v751 = vpack.c.b16 %v693, %v691
    %v752 = vpack.c.b16 %v696, %v694
    %v753 = vpack.c.b16 %v697, %v695
    %v754 = vpack.c.b16 %v700, %v698
    %v755 = vpack.c.b16 %v701, %v699
    %v756 = vpack.c.b16 %v704, %v702
    %v757 = vpack.c.b16 %v705, %v703
    %v758 = vpack.c.b16 %v708, %v706
    %v759 = vpack.c.b16 %v709, %v707
    %v760 = vpack.c.b16 %v712, %v710
    %v761 = vpack.c.b16 %v713, %v711
    %v762 = vpack.c.b16 %v716, %v714
    %v763 = vpack.c.b16 %v717, %v715
    %v764 = vpack.c.b16 %v720, %v718
    %v765 = vpack.c.b16 %v721, %v719
    %v766 = vpack.c.b16 %v724, %v722
    %v767 = vpack.c.b16 %v725, %v723
    %v768 = vpack.c.b16 %v728, %v726
    %v769 = vpack.c.b16 %v729, %v727
    %v770 = vpack.c.b16 %v732, %v730
    %v771 = vpack.c.b16 %v733, %v731
    %v772 = vpack.c.b16 %v736, %v734
    %v773 = vpack.c.b16 %v737, %v735
    %v774 = vpack.c.b16 %v740, %v738
    %v775 = vpack.c.b16 %v741, %v739
    %v776 = vpack.c.b16 %v744, %v742
    %v777 = vpack.c.b16 %v745, %v743
    %810 = vmatprep.subr.bf16.mxu0 %v747
    %811 = vmatpush1.bf16.msra.mxu0 %v746
    %812 = vmatprep.subr.bf16.mxu0 %v749
    %813 = vmatpush1.bf16.msra.mxu0 %v748
    %814 = vmatprep.subr.bf16.mxu0 %v751
    %815 = vmatpush1.bf16.msra.mxu0 %v750
    %816 = vmatprep.subr.bf16.mxu0 %v753
    %817 = vmatpush1.bf16.msra.mxu0 %v752
    %818 = vmatprep.subr.bf16.mxu0 %v755
    %819 = vmatpush1.bf16.msra.mxu0 %v754
    %820 = vmatprep.subr.bf16.mxu0 %v757
    %821 = vmatpush1.bf16.msra.mxu0 %v756
    %822 = vmatprep.subr.bf16.mxu0 %v759
    %823 = vmatpush1.bf16.msra.mxu0 %v758
    %824 = vmatprep.subr.bf16.mxu0 %v761
    %825 = vmatpush1.bf16.msra.mxu0 %v760
    %826 = vmatprep.subr.bf16.mxu0 %v763
    %827 = vmatpush1.bf16.msra.mxu0 %v762
    %828 = vmatprep.subr.bf16.mxu0 %v765
    %829 = vmatpush1.bf16.msra.mxu0 %v764
    %830 = vmatprep.subr.bf16.mxu0 %v767
    %831 = vmatpush1.bf16.msra.mxu0 %v766
    %832 = vmatprep.subr.bf16.mxu0 %v769
    %833 = vmatpush1.bf16.msra.mxu0 %v768
    %834 = vmatprep.subr.bf16.mxu0 %v771
    %835 = vmatpush1.bf16.msra.mxu0 %v770
    %836 = vmatprep.subr.bf16.mxu0 %v773
    %837 = vmatpush1.bf16.msra.mxu0 %v772
    %838 = vmatprep.subr.bf16.mxu0 %v775
    %839 = vmatpush1.bf16.msra.mxu0 %v774
    %840 = vmatprep.subr.bf16.mxu0 %v777
    %841 = vmatpush1.bf16.msra.mxu0 %v776
    %842 = vmatprep.mubr.bf16.mxu0 %v617
    %843 = vmatmul.mubr.bf16.gmra.mrb[0].mxu0 %v616
    %v844 = vpop.f32.mrb[0].mxu0
    %v845 = vadd.f32 0.0, %v844
    %v846 = vpop.f32.mrb[0].mxu0
    %v847 = vadd.f32 0.0, %v846
    %v848 = vpop.f32.mrb[0].mxu0
    %v849 = vpop.f32.mrb[0].mxu0
    %850 = vdwg.mxu0
    %v851 = vld [vmem:[%s7 + $0x8] sm:$0x3]
    %v852 = vld [vmem:[%s7 + $0xa] sm:$0x3]
    %v853 = vrot.slane %v845, 4
    %v854 = vadd.f32 %v845, %v853
    %v855 = vrot.slane %v854, 2
    %v856 = vadd.f32 %v854, %v855
    %v857 = vrot.slane %v856, 1
    %v858 = vadd.f32 %v856, %v857
    %v859 = vrot.slane %v847, 4
    %v860 = vadd.f32 %v847, %v859
    %v861 = vrot.slane %v860, 2
    %v862 = vadd.f32 %v860, %v861
    %v863 = vrot.slane %v862, 1
    %v864 = vadd.f32 %v862, %v863
    %v865 = vmul.f32 %v858, 0.125
    %v866 = vmul.f32 %v864, 0.125
    %v867 = vsub.f32 %v845, %v865
    %v868 = vsub.f32 %v847, %v866
    %v869 = vmul.f32 %v867, %v867
    %v870 = vmul.f32 %v868, %v868
    %v871 = vrot.slane %v869, 4
    %v872 = vadd.f32 %v869, %v871
    %v873 = vrot.slane %v872, 2
    %v874 = vadd.f32 %v872, %v873
    %v875 = vrot.slane %v874, 1
    %v876 = vadd.f32 %v874, %v875
    %v877 = vrot.slane %v870, 4
    %v878 = vadd.f32 %v870, %v877
    %v879 = vrot.slane %v878, 2
    %v880 = vadd.f32 %v878, %v879
    %v881 = vrot.slane %v880, 1
    %v882 = vadd.f32 %v880, %v881
    %v883 = vmul.f32 %v876, 0.125
    %v884 = vmul.f32 %v882, 0.125
    %v885 = vadd.f32 %v883, 1e-05
    %v886 = vadd.f32 %v884, 1e-05
    %v887 = vrsqrt.pop %v885
    %v888 = vrsqrt.pop %v886
    %v891 = vcombine.low %v887, %v888
    %v893 = vunpack.c.l.s4 1966171168
    %v894 = vunpack.c.0.s8 %v893
    %v895 = vlaneseq
    %v896 = vshrl.u32 %v895, 7
    %v897 = vsub.s32 %v894, %v896
    %v898 = vrot.slane %v891, %v897
    %v900 = vunpack.c.l.s4 1966171168
    %v901 = vunpack.c.0.s8 %v900
    %v902 = vlaneseq
    %v903 = vshrl.u32 %v902, 7
    %v904 = vsub.s32 %v901, %v903
    %v905 = vrot.slane %v898, %v904
    %v907 = vmul.f32 %v851, %v905
    %v909 = vlaneseq
    %v910 = vshrl.u32 %v909, 7
    %v911 = vsub.s32 0, %v910
    %v912 = vrot.slane %v907, %v911
    %v913 = vlaneseq
    %v914 = vshrl.u32 %v913, 7
    %v915 = vsub.s32 1, %v914
    %v916 = vrot.slane %v907, %v915
    %v919 = vmul.f32 %v865, %v912
    %v920 = vmul.f32 %v866, %v916
    %v923 = vcombine.low %v919, %v920
    %v925 = vunpack.c.l.s4 1966171168
    %v926 = vunpack.c.0.s8 %v925
    %v927 = vlaneseq
    %v928 = vshrl.u32 %v927, 7
    %v929 = vsub.s32 %v926, %v928
    %v930 = vrot.slane %v923, %v929
    %v932 = vunpack.c.l.s4 1966171168
    %v933 = vunpack.c.0.s8 %v932
    %v934 = vlaneseq
    %v935 = vshrl.u32 %v934, 7
    %v936 = vsub.s32 %v933, %v935
    %v937 = vrot.slane %v930, %v936
    %v939 = vsub.f32 %v852, %v937
    %v940 = vmul.f32 %v845, %v912
    %v941 = vmul.f32 %v847, %v916
    %v943 = vlaneseq
    %v944 = vshrl.u32 %v943, 7
    %v945 = vsub.s32 0, %v944
    %v946 = vrot.slane %v939, %v945
    %v947 = vlaneseq
    %v948 = vshrl.u32 %v947, 7
    %v949 = vsub.s32 1, %v948
    %v950 = vrot.slane %v939, %v949
    %v953 = vadd.f32 %v940, %v946
    %v954 = vadd.f32 %v941, %v950
    %v955 = vmax.f32 %v953, 0.0
    %v956 = vmax.f32 %v954, 0.0
    %v957 = vpack.c.bf16 %v955, %v955
    %v958 = vpack.c.bf16 %v956, %v956
    %v959 = vld [vmem:[#allocation6] sm:$0xff]
    %v960 = vld [vmem:[#allocation6 + $0x8] sm:$0xff]
    %v961 = vld [vmem:[#allocation6 + $0x10] sm:$0xff]
    %v962 = vld [vmem:[#allocation6 + $0x18] sm:$0xff]
    %v963 = vld [vmem:[#allocation6 + $0x20] sm:$0xff]
    %v964 = vld [vmem:[#allocation6 + $0x28] sm:$0xff]
    %v965 = vld [vmem:[#allocation6 + $0x30] sm:$0xff]
    %v966 = vld [vmem:[#allocation6 + $0x38] sm:$0xff]
    %v967 = vld [vmem:[#allocation6 + $0x40] sm:$0xff]
    %v968 = vld [vmem:[#allocation6 + $0x48] sm:$0xff]
    %v969 = vld [vmem:[#allocation6 + $0x50] sm:$0xff]
    %v970 = vld [vmem:[#allocation6 + $0x58] sm:$0xff]
    %v971 = vld [vmem:[#allocation6 + $0x60] sm:$0xff]
    %v972 = vld [vmem:[#allocation6 + $0x68] sm:$0xff]
    %v973 = vld [vmem:[#allocation6 + $0x70] sm:$0xff]
    %v974 = vld [vmem:[#allocation6 + $0x78] sm:$0xff]
    %v975 = vld [vmem:[#allocation6 + $0x80] sm:$0xff]
    %v976 = vld [vmem:[#allocation6 + $0x88] sm:$0xff]
    %v977 = vld [vmem:[#allocation6 + $0x90] sm:$0xff]
    %v978 = vld [vmem:[#allocation6 + $0x98] sm:$0xff]
    %v979 = vld [vmem:[#allocation6 + $0xa0] sm:$0xff]
    %v980 = vld [vmem:[#allocation6 + $0xa8] sm:$0xff]
    %v981 = vld [vmem:[#allocation6 + $0xb0] sm:$0xff]
    %v982 = vld [vmem:[#allocation6 + $0xb8] sm:$0xff]
    %v983 = vld [vmem:[#allocation6 + $0xc0] sm:$0xff]
    %v984 = vld [vmem:[#allocation6 + $0xc8] sm:$0xff]
    %v985 = vld [vmem:[#allocation6 + $0xd0] sm:$0xff]
    %v986 = vld [vmem:[#allocation6 + $0xd8] sm:$0xff]
    %v987 = vld [vmem:[#allocation6 + $0xe0] sm:$0xff]
    %v988 = vld [vmem:[#allocation6 + $0xe8] sm:$0xff]
    %v989 = vld [vmem:[#allocation6 + $0xf0] sm:$0xff]
    %v990 = vld [vmem:[#allocation6 + $0xf8] sm:$0xff]
    %v991 = vld [vmem:[#allocation6 + $0x100] sm:$0xff]
    %v992 = vld [vmem:[#allocation6 + $0x108] sm:$0xff]
    %v993 = vld [vmem:[#allocation6 + $0x110] sm:$0xff]
    %v994 = vld [vmem:[#allocation6 + $0x118] sm:$0xff]
    %v995 = vld [vmem:[#allocation6 + $0x120] sm:$0xff]
    %v996 = vld [vmem:[#allocation6 + $0x128] sm:$0xff]
    %v997 = vld [vmem:[#allocation6 + $0x130] sm:$0xff]
    %v998 = vld [vmem:[#allocation6 + $0x138] sm:$0xff]
    %v999 = vld [vmem:[#allocation6 + $0x140] sm:$0xff]
    %v1000 = vld [vmem:[#allocation6 + $0x148] sm:$0xff]
    %v1001 = vld [vmem:[#allocation6 + $0x150] sm:$0xff]
    %v1002 = vld [vmem:[#allocation6 + $0x158] sm:$0xff]
    %v1003 = vld [vmem:[#allocation6 + $0x160] sm:$0xff]
    %v1004 = vld [vmem:[#allocation6 + $0x168] sm:$0xff]
    %v1005 = vld [vmem:[#allocation6 + $0x170] sm:$0xff]
    %v1006 = vld [vmem:[#allocation6 + $0x178] sm:$0xff]
    %v1007 = vld [vmem:[#allocation6 + $0x180] sm:$0xff]
    %v1008 = vld [vmem:[#allocation6 + $0x188] sm:$0xff]
    %v1009 = vld [vmem:[#allocation6 + $0x190] sm:$0xff]
    %v1010 = vld [vmem:[#allocation6 + $0x198] sm:$0xff]
    %v1011 = vld [vmem:[#allocation6 + $0x1a0] sm:$0xff]
    %v1012 = vld [vmem:[#allocation6 + $0x1a8] sm:$0xff]
    %v1013 = vld [vmem:[#allocation6 + $0x1b0] sm:$0xff]
    %v1014 = vld [vmem:[#allocation6 + $0x1b8] sm:$0xff]
    %v1015 = vld [vmem:[#allocation6 + $0x1c0] sm:$0xff]
    %v1016 = vld [vmem:[#allocation6 + $0x1c8] sm:$0xff]
    %v1017 = vld [vmem:[#allocation6 + $0x1d0] sm:$0xff]
    %v1018 = vld [vmem:[#allocation6 + $0x1d8] sm:$0xff]
    %v1019 = vld [vmem:[#allocation6 + $0x1e0] sm:$0xff]
    %v1020 = vld [vmem:[#allocation6 + $0x1e8] sm:$0xff]
    %v1021 = vld [vmem:[#allocation6 + $0x1f0] sm:$0xff]
    %v1022 = vld [vmem:[#allocation6 + $0x1f8] sm:$0xff]
    %v1087 = vunpack.c.l.b16 %v959
    %v1088 = vunpack.c.h.b16 %v959
    %v1089 = vunpack.c.l.b16 %v960
    %v1090 = vunpack.c.h.b16 %v960
    %v1091 = vunpack.c.l.b16 %v961
    %v1092 = vunpack.c.h.b16 %v961
    %v1093 = vunpack.c.l.b16 %v962
    %v1094 = vunpack.c.h.b16 %v962
    %v1095 = vunpack.c.l.b16 %v963
    %v1096 = vunpack.c.h.b16 %v963
    %v1097 = vunpack.c.l.b16 %v964
    %v1098 = vunpack.c.h.b16 %v964
    %v1099 = vunpack.c.l.b16 %v965
    %v1100 = vunpack.c.h.b16 %v965
    %v1101 = vunpack.c.l.b16 %v966
    %v1102 = vunpack.c.h.b16 %v966
    %v1103 = vunpack.c.l.b16 %v967
    %v1104 = vunpack.c.h.b16 %v967
    %v1105 = vunpack.c.l.b16 %v968
    %v1106 = vunpack.c.h.b16 %v968
    %v1107 = vunpack.c.l.b16 %v969
    %v1108 = vunpack.c.h.b16 %v969
    %v1109 = vunpack.c.l.b16 %v970
    %v1110 = vunpack.c.h.b16 %v970
    %v1111 = vunpack.c.l.b16 %v971
    %v1112 = vunpack.c.h.b16 %v971
    %v1113 = vunpack.c.l.b16 %v972
    %v1114 = vunpack.c.h.b16 %v972
    %v1115 = vunpack.c.l.b16 %v973
    %v1116 = vunpack.c.h.b16 %v973
    %v1117 = vunpack.c.l.b16 %v974
    %v1118 = vunpack.c.h.b16 %v974
    %v1119 = vunpack.c.l.b16 %v975
    %v1120 = vunpack.c.h.b16 %v975
    %v1121 = vunpack.c.l.b16 %v976
    %v1122 = vunpack.c.h.b16 %v976
    %v1123 = vunpack.c.l.b16 %v977
    %v1124 = vunpack.c.h.b16 %v977
    %v1125 = vunpack.c.l.b16 %v978
    %v1126 = vunpack.c.h.b16 %v978
    %v1127 = vunpack.c.l.b16 %v979
    %v1128 = vunpack.c.h.b16 %v979
    %v1129 = vunpack.c.l.b16 %v980
    %v1130 = vunpack.c.h.b16 %v980
    %v1131 = vunpack.c.l.b16 %v981
    %v1132 = vunpack.c.h.b16 %v981
    %v1133 = vunpack.c.l.b16 %v982
    %v1134 = vunpack.c.h.b16 %v982
    %v1135 = vunpack.c.l.b16 %v983
    %v1136 = vunpack.c.h.b16 %v983
    %v1137 = vunpack.c.l.b16 %v984
    %v1138 = vunpack.c.h.b16 %v984
    %v1139 = vunpack.c.l.b16 %v985
    %v1140 = vunpack.c.h.b16 %v985
    %v1141 = vunpack.c.l.b16 %v986
    %v1142 = vunpack.c.h.b16 %v986
    %v1143 = vunpack.c.l.b16 %v987
    %v1144 = vunpack.c.h.b16 %v987
    %v1145 = vunpack.c.l.b16 %v988
    %v1146 = vunpack.c.h.b16 %v988
    %v1147 = vunpack.c.l.b16 %v989
    %v1148 = vunpack.c.h.b16 %v989
    %v1149 = vunpack.c.l.b16 %v990
    %v1150 = vunpack.c.h.b16 %v990
    %v1151 = vunpack.c.l.b16 %v991
    %v1152 = vunpack.c.h.b16 %v991
    %v1153 = vunpack.c.l.b16 %v992
    %v1154 = vunpack.c.h.b16 %v992
    %v1155 = vunpack.c.l.b16 %v993
    %v1156 = vunpack.c.h.b16 %v993
    %v1157 = vunpack.c.l.b16 %v994
    %v1158 = vunpack.c.h.b16 %v994
    %v1159 = vunpack.c.l.b16 %v995
    %v1160 = vunpack.c.h.b16 %v995
    %v1161 = vunpack.c.l.b16 %v996
    %v1162 = vunpack.c.h.b16 %v996
    %v1163 = vunpack.c.l.b16 %v997
    %v1164 = vunpack.c.h.b16 %v997
    %v1165 = vunpack.c.l.b16 %v998
    %v1166 = vunpack.c.h.b16 %v998
    %v1167 = vunpack.c.l.b16 %v999
    %v1168 = vunpack.c.h.b16 %v999
    %v1169 = vunpack.c.l.b16 %v1000
    %v1170 = vunpack.c.h.b16 %v1000
    %v1171 = vunpack.c.l.b16 %v1001
    %v1172 = vunpack.c.h.b16 %v1001
    %v1173 = vunpack.c.l.b16 %v1002
    %v1174 = vunpack.c.h.b16 %v1002
    %v1175 = vunpack.c.l.b16 %v1003
    %v1176 = vunpack.c.h.b16 %v1003
    %v1177 = vunpack.c.l.b16 %v1004
    %v1178 = vunpack.c.h.b16 %v1004
    %v1179 = vunpack.c.l.b16 %v1005
    %v1180 = vunpack.c.h.b16 %v1005
    %v1181 = vunpack.c.l.b16 %v1006
    %v1182 = vunpack.c.h.b16 %v1006
    %v1183 = vunpack.c.l.b16 %v1007
    %v1184 = vunpack.c.h.b16 %v1007
    %v1185 = vunpack.c.l.b16 %v1008
    %v1186 = vunpack.c.h.b16 %v1008
    %v1187 = vunpack.c.l.b16 %v1009
    %v1188 = vunpack.c.h.b16 %v1009
    %v1189 = vunpack.c.l.b16 %v1010
    %v1190 = vunpack.c.h.b16 %v1010
    %v1191 = vunpack.c.l.b16 %v1011
    %v1192 = vunpack.c.h.b16 %v1011
    %v1193 = vunpack.c.l.b16 %v1012
    %v1194 = vunpack.c.h.b16 %v1012
    %v1195 = vunpack.c.l.b16 %v1013
    %v1196 = vunpack.c.h.b16 %v1013
    %v1197 = vunpack.c.l.b16 %v1014
    %v1198 = vunpack.c.h.b16 %v1014
    %v1199 = vunpack.c.l.b16 %v1015
    %v1200 = vunpack.c.h.b16 %v1015
    %v1201 = vunpack.c.l.b16 %v1016
    %v1202 = vunpack.c.h.b16 %v1016
    %v1203 = vunpack.c.l.b16 %v1017
    %v1204 = vunpack.c.h.b16 %v1017
    %v1205 = vunpack.c.l.b16 %v1018
    %v1206 = vunpack.c.h.b16 %v1018
    %v1207 = vunpack.c.l.b16 %v1019
    %v1208 = vunpack.c.h.b16 %v1019
    %v1209 = vunpack.c.l.b16 %v1020
    %v1210 = vunpack.c.h.b16 %v1020
    %v1211 = vunpack.c.l.b16 %v1021
    %v1212 = vunpack.c.h.b16 %v1021
    %v1213 = vunpack.c.l.b16 %v1022
    %v1214 = vunpack.c.h.b16 %v1022
    %v1215 = vpack.c.b16 %v1091, %v1087
    %v1216 = vpack.c.b16 %v1092, %v1088
    %v1217 = vpack.c.b16 %v1093, %v1089
    %v1218 = vpack.c.b16 %v1094, %v1090
    %v1219 = vpack.c.b16 %v1099, %v1095
    %v1220 = vpack.c.b16 %v1100, %v1096
    %v1221 = vpack.c.b16 %v1101, %v1097
    %v1222 = vpack.c.b16 %v1102, %v1098
    %v1223 = vpack.c.b16 %v1107, %v1103
    %v1224 = vpack.c.b16 %v1108, %v1104
    %v1225 = vpack.c.b16 %v1109, %v1105
    %v1226 = vpack.c.b16 %v1110, %v1106
    %v1227 = vpack.c.b16 %v1115, %v1111
    %v1228 = vpack.c.b16 %v1116, %v1112
    %v1229 = vpack.c.b16 %v1117, %v1113
    %v1230 = vpack.c.b16 %v1118, %v1114
    %v1231 = vpack.c.b16 %v1123, %v1119
    %v1232 = vpack.c.b16 %v1124, %v1120
    %v1233 = vpack.c.b16 %v1125, %v1121
    %v1234 = vpack.c.b16 %v1126, %v1122
    %v1235 = vpack.c.b16 %v1131, %v1127
    %v1236 = vpack.c.b16 %v1132, %v1128
    %v1237 = vpack.c.b16 %v1133, %v1129
    %v1238 = vpack.c.b16 %v1134, %v1130
    %v1239 = vpack.c.b16 %v1139, %v1135
    %v1240 = vpack.c.b16 %v1140, %v1136
    %v1241 = vpack.c.b16 %v1141, %v1137
    %v1242 = vpack.c.b16 %v1142, %v1138
    %v1243 = vpack.c.b16 %v1147, %v1143
    %v1244 = vpack.c.b16 %v1148, %v1144
    %v1245 = vpack.c.b16 %v1149, %v1145
    %v1246 = vpack.c.b16 %v1150, %v1146
    %v1247 = vpack.c.b16 %v1155, %v1151
    %v1248 = vpack.c.b16 %v1156, %v1152
    %v1249 = vpack.c.b16 %v1157, %v1153
    %v1250 = vpack.c.b16 %v1158, %v1154
    %v1251 = vpack.c.b16 %v1163, %v1159
    %v1252 = vpack.c.b16 %v1164, %v1160
    %v1253 = vpack.c.b16 %v1165, %v1161
    %v1254 = vpack.c.b16 %v1166, %v1162
    %v1255 = vpack.c.b16 %v1171, %v1167
    %v1256 = vpack.c.b16 %v1172, %v1168
    %v1257 = vpack.c.b16 %v1173, %v1169
    %v1258 = vpack.c.b16 %v1174, %v1170
    %v1259 = vpack.c.b16 %v1179, %v1175
    %v1260 = vpack.c.b16 %v1180, %v1176
    %v1261 = vpack.c.b16 %v1181, %v1177
    %v1262 = vpack.c.b16 %v1182, %v1178
    %v1263 = vpack.c.b16 %v1187, %v1183
    %v1264 = vpack.c.b16 %v1188, %v1184
    %v1265 = vpack.c.b16 %v1189, %v1185
    %v1266 = vpack.c.b16 %v1190, %v1186
    %v1267 = vpack.c.b16 %v1195, %v1191
    %v1268 = vpack.c.b16 %v1196, %v1192
    %v1269 = vpack.c.b16 %v1197, %v1193
    %v1270 = vpack.c.b16 %v1198, %v1194
    %v1271 = vpack.c.b16 %v1203, %v1199
    %v1272 = vpack.c.b16 %v1204, %v1200
    %v1273 = vpack.c.b16 %v1205, %v1201
    %v1274 = vpack.c.b16 %v1206, %v1202
    %v1275 = vpack.c.b16 %v1211, %v1207
    %v1276 = vpack.c.b16 %v1212, %v1208
    %v1277 = vpack.c.b16 %v1213, %v1209
    %v1278 = vpack.c.b16 %v1214, %v1210
    %1343 = vmatprep.subr.bf16.mxu0 %v1216
    %1344 = vmatpush1.bf16.msra.mxu0 %v1215
    %1345 = vmatprep.subr.bf16.mxu0 %v1220
    %1346 = vmatpush1.bf16.msra.mxu0 %v1219
    %1347 = vmatprep.subr.bf16.mxu0 %v1224
    %1348 = vmatpush1.bf16.msra.mxu0 %v1223
    %1349 = vmatprep.subr.bf16.mxu0 %v1228
    %1350 = vmatpush1.bf16.msra.mxu0 %v1227
    %1351 = vmatprep.subr.bf16.mxu0 %v1232
    %1352 = vmatpush1.bf16.msra.mxu0 %v1231
    %1353 = vmatprep.subr.bf16.mxu0 %v1236
    %1354 = vmatpush1.bf16.msra.mxu0 %v1235
    %1355 = vmatprep.subr.bf16.mxu0 %v1240
    %1356 = vmatpush1.bf16.msra.mxu0 %v1239
    %1357 = vmatprep.subr.bf16.mxu0 %v1244
    %1358 = vmatpush1.bf16.msra.mxu0 %v1243
    %1359 = vmatprep.subr.bf16.mxu0 %v1248
    %1360 = vmatpush1.bf16.msra.mxu0 %v1247
    %1361 = vmatprep.subr.bf16.mxu0 %v1252
    %1362 = vmatpush1.bf16.msra.mxu0 %v1251
    %1363 = vmatprep.subr.bf16.mxu0 %v1256
    %1364 = vmatpush1.bf16.msra.mxu0 %v1255
    %1365 = vmatprep.subr.bf16.mxu0 %v1260
    %1366 = vmatpush1.bf16.msra.mxu0 %v1259
    %1367 = vmatprep.subr.bf16.mxu0 %v1264
    %1368 = vmatpush1.bf16.msra.mxu0 %v1263
    %1369 = vmatprep.subr.bf16.mxu0 %v1268
    %1370 = vmatpush1.bf16.msra.mxu0 %v1267
    %1371 = vmatprep.subr.bf16.mxu0 %v1272
    %1372 = vmatpush1.bf16.msra.mxu0 %v1271
    %1373 = vmatprep.subr.bf16.mxu0 %v1276
    %1374 = vmatpush1.bf16.msra.mxu0 %v1275
    %1375 = vmatprep.mubr.bf16.mxu0 %v958
    %1376 = vmatmul.mubr.bf16.gmra.mrb[0].mxu0 %v957
    %v1377 = vpop.f32.mrb[0].mxu0
    %v1378 = vadd.f32 0.0, %v1377
    %v1379 = vpop.f32.mrb[0].mxu0
    %v1380 = vadd.f32 0.0, %v1379
    %v1381 = vpop.f32.mrb[0].mxu0
    %v1382 = vpop.f32.mrb[0].mxu0
    %1383 = vdwg.mxu0
    %1384 = vmatprep.subr.bf16.mxu0 %v1218
    %1385 = vmatpush1.bf16.msra.mxu0 %v1217
    %1386 = vmatprep.subr.bf16.mxu0 %v1222
    %1387 = vmatpush1.bf16.msra.mxu0 %v1221
    %1388 = vmatprep.subr.bf16.mxu0 %v1226
    %1389 = vmatpush1.bf16.msra.mxu0 %v1225
    %1390 = vmatprep.subr.bf16.mxu0 %v1230
    %1391 = vmatpush1.bf16.msra.mxu0 %v1229
    %1392 = vmatprep.subr.bf16.mxu0 %v1234
    %1393 = vmatpush1.bf16.msra.mxu0 %v1233
    %1394 = vmatprep.subr.bf16.mxu0 %v1238
    %1395 = vmatpush1.bf16.msra.mxu0 %v1237
    %1396 = vmatprep.subr.bf16.mxu0 %v1242
    %1397 = vmatpush1.bf16.msra.mxu0 %v1241
    %1398 = vmatprep.subr.bf16.mxu0 %v1246
    %1399 = vmatpush1.bf16.msra.mxu0 %v1245
    %1400 = vmatprep.subr.bf16.mxu0 %v1250
    %1401 = vmatpush1.bf16.msra.mxu0 %v1249
    %1402 = vmatprep.subr.bf16.mxu0 %v1254
    %1403 = vmatpush1.bf16.msra.mxu0 %v1253
    %1404 = vmatprep.subr.bf16.mxu0 %v1258
    %1405 = vmatpush1.bf16.msra.mxu0 %v1257
    %1406 = vmatprep.subr.bf16.mxu0 %v1262
    %1407 = vmatpush1.bf16.msra.mxu0 %v1261
    %1408 = vmatprep.subr.bf16.mxu0 %v1266
    %1409 = vmatpush1.bf16.msra.mxu0 %v1265
    %1410 = vmatprep.subr.bf16.mxu0 %v1270
    %1411 = vmatpush1.bf16.msra.mxu0 %v1269
    %1412 = vmatprep.subr.bf16.mxu0 %v1274
    %1413 = vmatpush1.bf16.msra.mxu0 %v1273
    %1414 = vmatprep.subr.bf16.mxu0 %v1278
    %1415 = vmatpush1.bf16.msra.mxu0 %v1277
    %1416 = vmatprep.mubr.bf16.mxu0 %v958
    %1417 = vmatmul.mubr.bf16.gmra.mrb[0].mxu0 %v957
    %v1418 = vpop.f32.mrb[0].mxu0
    %v1419 = vadd.f32 0.0, %v1418
    %v1420 = vpop.f32.mrb[0].mxu0
    %v1421 = vadd.f32 0.0, %v1420
    %v1422 = vpop.f32.mrb[0].mxu0
    %v1423 = vpop.f32.mrb[0].mxu0
    %1424 = vdwg.mxu0
    %v1425 = vld [vmem:[%s7 + $0xc] sm:$0xf]
    %v1426 = vld [vmem:[%s7 + $0x10] sm:$0xf]
    %v1427 = vrot.slane %v1378, 4
    %v1428 = vadd.f32 %v1378, %v1427
    %v1429 = vrot.slane %v1428, 2
    %v1430 = vadd.f32 %v1428, %v1429
    %v1431 = vrot.slane %v1430, 1
    %v1432 = vadd.f32 %v1430, %v1431
    %v1433 = vrot.slane %v1380, 4
    %v1434 = vadd.f32 %v1380, %v1433
    %v1435 = vrot.slane %v1434, 2
    %v1436 = vadd.f32 %v1434, %v1435
    %v1437 = vrot.slane %v1436, 1
    %v1438 = vadd.f32 %v1436, %v1437
    %v1439 = vrot.slane %v1419, 4
    %v1440 = vadd.f32 %v1419, %v1439
    %v1441 = vrot.slane %v1440, 2
    %v1442 = vadd.f32 %v1440, %v1441
    %v1443 = vrot.slane %v1442, 1
    %v1444 = vadd.f32 %v1442, %v1443
    %v1445 = vrot.slane %v1421, 4
    %v1446 = vadd.f32 %v1421, %v1445
    %v1447 = vrot.slane %v1446, 2
    %v1448 = vadd.f32 %v1446, %v1447
    %v1449 = vrot.slane %v1448, 1
    %v1450 = vadd.f32 %v1448, %v1449
    %v1451 = vmul.f32 %v1432, 0.125
    %v1452 = vmul.f32 %v1438, 0.125
    %v1453 = vmul.f32 %v1444, 0.125
    %v1454 = vmul.f32 %v1450, 0.125
    %v1455 = vsub.f32 %v1378, %v1451
    %v1456 = vsub.f32 %v1380, %v1452
    %v1457 = vsub.f32 %v1419, %v1453
    %v1458 = vsub.f32 %v1421, %v1454
    %v1459 = vmul.f32 %v1455, %v1455
    %v1460 = vmul.f32 %v1456, %v1456
    %v1461 = vmul.f32 %v1457, %v1457
    %v1462 = vmul.f32 %v1458, %v1458
    %v1463 = vrot.slane %v1459, 4
    %v1464 = vadd.f32 %v1459, %v1463
    %v1465 = vrot.slane %v1464, 2
    %v1466 = vadd.f32 %v1464, %v1465
    %v1467 = vrot.slane %v1466, 1
    %v1468 = vadd.f32 %v1466, %v1467
    %v1469 = vrot.slane %v1460, 4
    %v1470 = vadd.f32 %v1460, %v1469
    %v1471 = vrot.slane %v1470, 2
    %v1472 = vadd.f32 %v1470, %v1471
    %v1473 = vrot.slane %v1472, 1
    %v1474 = vadd.f32 %v1472, %v1473
    %v1475 = vrot.slane %v1461, 4
    %v1476 = vadd.f32 %v1461, %v1475
    %v1477 = vrot.slane %v1476, 2
    %v1478 = vadd.f32 %v1476, %v1477
    %v1479 = vrot.slane %v1478, 1
    %v1480 = vadd.f32 %v1478, %v1479
    %v1481 = vrot.slane %v1462, 4
    %v1482 = vadd.f32 %v1462, %v1481
    %v1483 = vrot.slane %v1482, 2
    %v1484 = vadd.f32 %v1482, %v1483
    %v1485 = vrot.slane %v1484, 1
    %v1486 = vadd.f32 %v1484, %v1485
    %v1487 = vmul.f32 %v1468, 0.125
    %v1488 = vmul.f32 %v1474, 0.125
    %v1489 = vmul.f32 %v1480, 0.125
    %v1490 = vmul.f32 %v1486, 0.125
    %v1491 = vadd.f32 %v1487, 1e-05
    %v1492 = vadd.f32 %v1488, 1e-05
    %v1493 = vadd.f32 %v1489, 1e-05
    %v1494 = vadd.f32 %v1490, 1e-05
    %v1495 = vrsqrt.pop %v1491
    %v1496 = vrsqrt.pop %v1492
    %v1497 = vrsqrt.pop %v1493
    %v1498 = vrsqrt.pop %v1494
    %v1503 = vcombine.low %v1495, %v1496
    %v1504 = vcombine.low %v1497, %v1498
    %v1506 = vunpack.c.l.s4 1966171168
    %v1507 = vunpack.c.0.s8 %v1506
    %v1508 = vlaneseq
    %v1509 = vshrl.u32 %v1508, 7
    %v1510 = vsub.s32 %v1507, %v1509
    %v1511 = vrot.slane %v1503, %v1510
    %v1513 = vunpack.c.l.s4 1966171168
    %v1514 = vunpack.c.0.s8 %v1513
    %v1515 = vlaneseq
    %v1516 = vshrl.u32 %v1515, 7
    %v1517 = vsub.s32 %v1514, %v1516
    %v1518 = vrot.slane %v1504, %v1517
    %v1519 = vcombine.low %v1511, %v1518
    %v1521 = vunpack.c.l.s4 1966171168
    %v1522 = vunpack.c.0.s8 %v1521
    %v1523 = vlaneseq
    %v1524 = vshrl.u32 %v1523, 7
    %v1525 = vsub.s32 %v1522, %v1524
    %v1526 = vrot.slane %v1519, %v1525
    %v1528 = vmul.f32 %v1425, %v1526
    %v1530 = vlaneseq
    %v1531 = vshrl.u32 %v1530, 7
    %v1532 = vsub.s32 0, %v1531
    %v1533 = vrot.slane %v1528, %v1532
    %v1534 = vlaneseq
    %v1535 = vshrl.u32 %v1534, 7
    %v1536 = vsub.s32 1, %v1535
    %v1537 = vrot.slane %v1528, %v1536
    %v1538 = vlaneseq
    %v1539 = vshrl.u32 %v1538, 7
    %v1540 = vsub.s32 2, %v1539
    %v1541 = vrot.slane %v1528, %v1540
    %v1542 = vlaneseq
    %v1543 = vshrl.u32 %v1542, 7
    %v1544 = vsub.s32 3, %v1543
    %v1545 = vrot.slane %v1528, %v1544
    %v1550 = vmul.f32 %v1451, %v1533
    %v1551 = vmul.f32 %v1452, %v1537
    %v1552 = vmul.f32 %v1453, %v1541
    %v1553 = vmul.f32 %v1454, %v1545
    %v1558 = vcombine.low %v1550, %v1551
    %v1559 = vcombine.low %v1552, %v1553
    %v1561 = vunpack.c.l.s4 1966171168
    %v1562 = vunpack.c.0.s8 %v1561
    %v1563 = vlaneseq
    %v1564 = vshrl.u32 %v1563, 7
    %v1565 = vsub.s32 %v1562, %v1564
    %v1566 = vrot.slane %v1558, %v1565
    %v1568 = vunpack.c.l.s4 1966171168
    %v1569 = vunpack.c.0.s8 %v1568
    %v1570 = vlaneseq
    %v1571 = vshrl.u32 %v1570, 7
    %v1572 = vsub.s32 %v1569, %v1571
    %v1573 = vrot.slane %v1559, %v1572
    %v1574 = vcombine.low %v1566, %v1573
    %v1576 = vunpack.c.l.s4 1966171168
    %v1577 = vunpack.c.0.s8 %v1576
    %v1578 = vlaneseq
    %v1579 = vshrl.u32 %v1578, 7
    %v1580 = vsub.s32 %v1577, %v1579
    %v1581 = vrot.slane %v1574, %v1580
    %v1583 = vsub.f32 %v1426, %v1581
    %v1584 = vmul.f32 %v1378, %v1533
    %v1585 = vmul.f32 %v1380, %v1537
    %v1586 = vmul.f32 %v1419, %v1541
    %v1587 = vmul.f32 %v1421, %v1545
    %v1589 = vlaneseq
    %v1590 = vshrl.u32 %v1589, 7
    %v1591 = vsub.s32 0, %v1590
    %v1592 = vrot.slane %v1583, %v1591
    %v1593 = vlaneseq
    %v1594 = vshrl.u32 %v1593, 7
    %v1595 = vsub.s32 1, %v1594
    %v1596 = vrot.slane %v1583, %v1595
    %v1597 = vlaneseq
    %v1598 = vshrl.u32 %v1597, 7
    %v1599 = vsub.s32 2, %v1598
    %v1600 = vrot.slane %v1583, %v1599
    %v1601 = vlaneseq
    %v1602 = vshrl.u32 %v1601, 7
    %v1603 = vsub.s32 3, %v1602
    %v1604 = vrot.slane %v1583, %v1603
    %v1609 = vadd.f32 %v1584, %v1592
    %v1610 = vadd.f32 %v1585, %v1596
    %v1611 = vadd.f32 %v1586, %v1600
    %v1612 = vadd.f32 %v1587, %v1604
    %v1613 = vmax.f32 %v1609, 0.0
    %v1614 = vmax.f32 %v1610, 0.0
    %v1615 = vmax.f32 %v1611, 0.0
    %v1616 = vmax.f32 %v1612, 0.0
    %v1617 = vpack.c.bf16 %v1613, %v1613
    %v1618 = vpack.c.bf16 %v1614, %v1614
    %v1619 = vpack.c.bf16 %v1615, %v1615
    %v1620 = vpack.c.bf16 %v1616, %v1616
    %v1621 = vld [vmem:[#allocation7] sm:$0xff]
    %v1622 = vld [vmem:[#allocation7 + $0x8] sm:$0xff]
    %v1623 = vld [vmem:[#allocation7 + $0x10] sm:$0xff]
    %v1624 = vld [vmem:[#allocation7 + $0x18] sm:$0xff]
    %v1625 = vld [vmem:[#allocation7 + $0x20] sm:$0xff]
    %v1626 = vld [vmem:[#allocation7 + $0x28] sm:$0xff]
    %v1627 = vld [vmem:[#allocation7 + $0x30] sm:$0xff]
    %v1628 = vld [vmem:[#allocation7 + $0x38] sm:$0xff]
    %v1629 = vld [vmem:[#allocation7 + $0x40] sm:$0xff]
    %v1630 = vld [vmem:[#allocation7 + $0x48] sm:$0xff]
    %v1631 = vld [vmem:[#allocation7 + $0x50] sm:$0xff]
    %v1632 = vld [vmem:[#allocation7 + $0x58] sm:$0xff]
    %v1633 = vld [vmem:[#allocation7 + $0x60] sm:$0xff]
    %v1634 = vld [vmem:[#allocation7 + $0x68] sm:$0xff]
    %v1635 = vld [vmem:[#allocation7 + $0x70] sm:$0xff]
    %v1636 = vld [vmem:[#allocation7 + $0x78] sm:$0xff]
    %v1637 = vld [vmem:[#allocation7 + $0x80] sm:$0xff]
    %v1638 = vld [vmem:[#allocation7 + $0x88] sm:$0xff]
    %v1639 = vld [vmem:[#allocation7 + $0x90] sm:$0xff]
    %v1640 = vld [vmem:[#allocation7 + $0x98] sm:$0xff]
    %v1641 = vld [vmem:[#allocation7 + $0xa0] sm:$0xff]
    %v1642 = vld [vmem:[#allocation7 + $0xa8] sm:$0xff]
    %v1643 = vld [vmem:[#allocation7 + $0xb0] sm:$0xff]
    %v1644 = vld [vmem:[#allocation7 + $0xb8] sm:$0xff]
    %v1645 = vld [vmem:[#allocation7 + $0xc0] sm:$0xff]
    %v1646 = vld [vmem:[#allocation7 + $0xc8] sm:$0xff]
    %v1647 = vld [vmem:[#allocation7 + $0xd0] sm:$0xff]
    %v1648 = vld [vmem:[#allocation7 + $0xd8] sm:$0xff]
    %v1649 = vld [vmem:[#allocation7 + $0xe0] sm:$0xff]
    %v1650 = vld [vmem:[#allocation7 + $0xe8] sm:$0xff]
    %v1651 = vld [vmem:[#allocation7 + $0xf0] sm:$0xff]
    %v1652 = vld [vmem:[#allocation7 + $0xf8] sm:$0xff]
    %v1653 = vld [vmem:[#allocation7 + $0x100] sm:$0xff]
    %v1654 = vld [vmem:[#allocation7 + $0x108] sm:$0xff]
    %v1655 = vld [vmem:[#allocation7 + $0x110] sm:$0xff]
    %v1656 = vld [vmem:[#allocation7 + $0x118] sm:$0xff]
    %v1657 = vld [vmem:[#allocation7 + $0x120] sm:$0xff]
    %v1658 = vld [vmem:[#allocation7 + $0x128] sm:$0xff]
    %v1659 = vld [vmem:[#allocation7 + $0x130] sm:$0xff]
    %v1660 = vld [vmem:[#allocation7 + $0x138] sm:$0xff]
    %v1661 = vld [vmem:[#allocation7 + $0x140] sm:$0xff]
    %v1662 = vld [vmem:[#allocation7 + $0x148] sm:$0xff]
    %v1663 = vld [vmem:[#allocation7 + $0x150] sm:$0xff]
    %v1664 = vld [vmem:[#allocation7 + $0x158] sm:$0xff]
    %v1665 = vld [vmem:[#allocation7 + $0x160] sm:$0xff]
    %v1666 = vld [vmem:[#allocation7 + $0x168] sm:$0xff]
    %v1667 = vld [vmem:[#allocation7 + $0x170] sm:$0xff]
    %v1668 = vld [vmem:[#allocation7 + $0x178] sm:$0xff]
    %v1669 = vld [vmem:[#allocation7 + $0x180] sm:$0xff]
    %v1670 = vld [vmem:[#allocation7 + $0x188] sm:$0xff]
    %v1671 = vld [vmem:[#allocation7 + $0x190] sm:$0xff]
    %v1672 = vld [vmem:[#allocation7 + $0x198] sm:$0xff]
    %v1673 = vld [vmem:[#allocation7 + $0x1a0] sm:$0xff]
    %v1674 = vld [vmem:[#allocation7 + $0x1a8] sm:$0xff]
    %v1675 = vld [vmem:[#allocation7 + $0x1b0] sm:$0xff]
    %v1676 = vld [vmem:[#allocation7 + $0x1b8] sm:$0xff]
    %v1677 = vld [vmem:[#allocation7 + $0x1c0] sm:$0xff]
    %v1678 = vld [vmem:[#allocation7 + $0x1c8] sm:$0xff]
    %v1679 = vld [vmem:[#allocation7 + $0x1d0] sm:$0xff]
    %v1680 = vld [vmem:[#allocation7 + $0x1d8] sm:$0xff]
    %v1681 = vld [vmem:[#allocation7 + $0x1e0] sm:$0xff]
    %v1682 = vld [vmem:[#allocation7 + $0x1e8] sm:$0xff]
    %v1683 = vld [vmem:[#allocation7 + $0x1f0] sm:$0xff]
    %v1684 = vld [vmem:[#allocation7 + $0x1f8] sm:$0xff]
    %v1685 = vld [vmem:[#allocation7 + $0x200] sm:$0xff]
    %v1686 = vld [vmem:[#allocation7 + $0x208] sm:$0xff]
    %v1687 = vld [vmem:[#allocation7 + $0x210] sm:$0xff]
    %v1688 = vld [vmem:[#allocation7 + $0x218] sm:$0xff]
    %v1689 = vld [vmem:[#allocation7 + $0x220] sm:$0xff]
    %v1690 = vld [vmem:[#allocation7 + $0x228] sm:$0xff]
    %v1691 = vld [vmem:[#allocation7 + $0x230] sm:$0xff]
    %v1692 = vld [vmem:[#allocation7 + $0x238] sm:$0xff]
    %v1693 = vld [vmem:[#allocation7 + $0x240] sm:$0xff]
    %v1694 = vld [vmem:[#allocation7 + $0x248] sm:$0xff]
    %v1695 = vld [vmem:[#allocation7 + $0x250] sm:$0xff]
    %v1696 = vld [vmem:[#allocation7 + $0x258] sm:$0xff]
    %v1697 = vld [vmem:[#allocation7 + $0x260] sm:$0xff]
    %v1698 = vld [vmem:[#allocation7 + $0x268] sm:$0xff]
    %v1699 = vld [vmem:[#allocation7 + $0x270] sm:$0xff]
    %v1700 = vld [vmem:[#allocation7 + $0x278] sm:$0xff]
    %v1701 = vld [vmem:[#allocation7 + $0x280] sm:$0xff]
    %v1702 = vld [vmem:[#allocation7 + $0x288] sm:$0xff]
    %v1703 = vld [vmem:[#allocation7 + $0x290] sm:$0xff]
    %v1704 = vld [vmem:[#allocation7 + $0x298] sm:$0xff]
    %v1705 = vld [vmem:[#allocation7 + $0x2a0] sm:$0xff]
    %v1706 = vld [vmem:[#allocation7 + $0x2a8] sm:$0xff]
    %v1707 = vld [vmem:[#allocation7 + $0x2b0] sm:$0xff]
    %v1708 = vld [vmem:[#allocation7 + $0x2b8] sm:$0xff]
    %v1709 = vld [vmem:[#allocation7 + $0x2c0] sm:$0xff]
    %v1710 = vld [vmem:[#allocation7 + $0x2c8] sm:$0xff]
    %v1711 = vld [vmem:[#allocation7 + $0x2d0] sm:$0xff]
    %v1712 = vld [vmem:[#allocation7 + $0x2d8] sm:$0xff]
    %v1713 = vld [vmem:[#allocation7 + $0x2e0] sm:$0xff]
    %v1714 = vld [vmem:[#allocation7 + $0x2e8] sm:$0xff]
    %v1715 = vld [vmem:[#allocation7 + $0x2f0] sm:$0xff]
    %v1716 = vld [vmem:[#allocation7 + $0x2f8] sm:$0xff]
    %v1717 = vld [vmem:[#allocation7 + $0x300] sm:$0xff]
    %v1718 = vld [vmem:[#allocation7 + $0x308] sm:$0xff]
    %v1719 = vld [vmem:[#allocation7 + $0x310] sm:$0xff]
    %v1720 = vld [vmem:[#allocation7 + $0x318] sm:$0xff]
    %v1721 = vld [vmem:[#allocation7 + $0x320] sm:$0xff]
    %v1722 = vld [vmem:[#allocation7 + $0x328] sm:$0xff]
    %v1723 = vld [vmem:[#allocation7 + $0x330] sm:$0xff]
    %v1724 = vld [vmem:[#allocation7 + $0x338] sm:$0xff]
    %v1725 = vld [vmem:[#allocation7 + $0x340] sm:$0xff]
    %v1726 = vld [vmem:[#allocation7 + $0x348] sm:$0xff]
    %v1727 = vld [vmem:[#allocation7 + $0x350] sm:$0xff]
    %v1728 = vld [vmem:[#allocation7 + $0x358] sm:$0xff]
    %v1729 = vld [vmem:[#allocation7 + $0x360] sm:$0xff]
    %v1730 = vld [vmem:[#allocation7 + $0x368] sm:$0xff]
    %v1731 = vld [vmem:[#allocation7 + $0x370] sm:$0xff]
    %v1732 = vld [vmem:[#allocation7 + $0x378] sm:$0xff]
    %v1733 = vld [vmem:[#allocation7 + $0x380] sm:$0xff]
    %v1734 = vld [vmem:[#allocation7 + $0x388] sm:$0xff]
    %v1735 = vld [vmem:[#allocation7 + $0x390] sm:$0xff]
    %v1736 = vld [vmem:[#allocation7 + $0x398] sm:$0xff]
    %v1737 = vld [vmem:[#allocation7 + $0x3a0] sm:$0xff]
    %v1738 = vld [vmem:[#allocation7 + $0x3a8] sm:$0xff]
    %v1739 = vld [vmem:[#allocation7 + $0x3b0] sm:$0xff]
    %v1740 = vld [vmem:[#allocation7 + $0x3b8] sm:$0xff]
    %v1741 = vld [vmem:[#allocation7 + $0x3c0] sm:$0xff]
    %v1742 = vld [vmem:[#allocation7 + $0x3c8] sm:$0xff]
    %v1743 = vld [vmem:[#allocation7 + $0x3d0] sm:$0xff]
    %v1744 = vld [vmem:[#allocation7 + $0x3d8] sm:$0xff]
    %v1745 = vld [vmem:[#allocation7 + $0x3e0] sm:$0xff]
    %v1746 = vld [vmem:[#allocation7 + $0x3e8] sm:$0xff]
    %v1747 = vld [vmem:[#allocation7 + $0x3f0] sm:$0xff]
    %v1748 = vld [vmem:[#allocation7 + $0x3f8] sm:$0xff]
    %v1749 = vld [vmem:[#allocation7 + $0x400] sm:$0xff]
    %v1750 = vld [vmem:[#allocation7 + $0x408] sm:$0xff]
    %v1751 = vld [vmem:[#allocation7 + $0x410] sm:$0xff]
    %v1752 = vld [vmem:[#allocation7 + $0x418] sm:$0xff]
    %v1753 = vld [vmem:[#allocation7 + $0x420] sm:$0xff]
    %v1754 = vld [vmem:[#allocation7 + $0x428] sm:$0xff]
    %v1755 = vld [vmem:[#allocation7 + $0x430] sm:$0xff]
    %v1756 = vld [vmem:[#allocation7 + $0x438] sm:$0xff]
    %v1757 = vld [vmem:[#allocation7 + $0x440] sm:$0xff]
    %v1758 = vld [vmem:[#allocation7 + $0x448] sm:$0xff]
    %v1759 = vld [vmem:[#allocation7 + $0x450] sm:$0xff]
    %v1760 = vld [vmem:[#allocation7 + $0x458] sm:$0xff]
    %v1761 = vld [vmem:[#allocation7 + $0x460] sm:$0xff]
    %v1762 = vld [vmem:[#allocation7 + $0x468] sm:$0xff]
    %v1763 = vld [vmem:[#allocation7 + $0x470] sm:$0xff]
    %v1764 = vld [vmem:[#allocation7 + $0x478] sm:$0xff]
    %v1765 = vld [vmem:[#allocation7 + $0x480] sm:$0xff]
    %v1766 = vld [vmem:[#allocation7 + $0x488] sm:$0xff]
    %v1767 = vld [vmem:[#allocation7 + $0x490] sm:$0xff]
    %v1768 = vld [vmem:[#allocation7 + $0x498] sm:$0xff]
    %v1769 = vld [vmem:[#allocation7 + $0x4a0] sm:$0xff]
    %v1770 = vld [vmem:[#allocation7 + $0x4a8] sm:$0xff]
    %v1771 = vld [vmem:[#allocation7 + $0x4b0] sm:$0xff]
    %v1772 = vld [vmem:[#allocation7 + $0x4b8] sm:$0xff]
    %v1773 = vld [vmem:[#allocation7 + $0x4c0] sm:$0xff]
    %v1774 = vld [vmem:[#allocation7 + $0x4c8] sm:$0xff]
    %v1775 = vld [vmem:[#allocation7 + $0x4d0] sm:$0xff]
    %v1776 = vld [vmem:[#allocation7 + $0x4d8] sm:$0xff]
    %v1777 = vld [vmem:[#allocation7 + $0x4e0] sm:$0xff]
    %v1778 = vld [vmem:[#allocation7 + $0x4e8] sm:$0xff]
    %v1779 = vld [vmem:[#allocation7 + $0x4f0] sm:$0xff]
    %v1780 = vld [vmem:[#allocation7 + $0x4f8] sm:$0xff]
    %v1781 = vld [vmem:[#allocation7 + $0x500] sm:$0xff]
    %v1782 = vld [vmem:[#allocation7 + $0x508] sm:$0xff]
    %v1783 = vld [vmem:[#allocation7 + $0x510] sm:$0xff]
    %v1784 = vld [vmem:[#allocation7 + $0x518] sm:$0xff]
    %v1785 = vld [vmem:[#allocation7 + $0x520] sm:$0xff]
    %v1786 = vld [vmem:[#allocation7 + $0x528] sm:$0xff]
    %v1787 = vld [vmem:[#allocation7 + $0x530] sm:$0xff]
    %v1788 = vld [vmem:[#allocation7 + $0x538] sm:$0xff]
    %v1789 = vld [vmem:[#allocation7 + $0x540] sm:$0xff]
    %v1790 = vld [vmem:[#allocation7 + $0x548] sm:$0xff]
    %v1791 = vld [vmem:[#allocation7 + $0x550] sm:$0xff]
    %v1792 = vld [vmem:[#allocation7 + $0x558] sm:$0xff]
    %v1793 = vld [vmem:[#allocation7 + $0x560] sm:$0xff]
    %v1794 = vld [vmem:[#allocation7 + $0x568] sm:$0xff]
    %v1795 = vld [vmem:[#allocation7 + $0x570] sm:$0xff]
    %v1796 = vld [vmem:[#allocation7 + $0x578] sm:$0xff]
    %v1797 = vld [vmem:[#allocation7 + $0x580] sm:$0xff]
    %v1798 = vld [vmem:[#allocation7 + $0x588] sm:$0xff]
    %v1799 = vld [vmem:[#allocation7 + $0x590] sm:$0xff]
    %v1800 = vld [vmem:[#allocation7 + $0x598] sm:$0xff]
    %v1801 = vld [vmem:[#allocation7 + $0x5a0] sm:$0xff]
    %v1802 = vld [vmem:[#allocation7 + $0x5a8] sm:$0xff]
    %v1803 = vld [vmem:[#allocation7 + $0x5b0] sm:$0xff]
    %v1804 = vld [vmem:[#allocation7 + $0x5b8] sm:$0xff]
    %v1805 = vld [vmem:[#allocation7 + $0x5c0] sm:$0xff]
    %v1806 = vld [vmem:[#allocation7 + $0x5c8] sm:$0xff]
    %v1807 = vld [vmem:[#allocation7 + $0x5d0] sm:$0xff]
    %v1808 = vld [vmem:[#allocation7 + $0x5d8] sm:$0xff]
    %v1809 = vld [vmem:[#allocation7 + $0x5e0] sm:$0xff]
    %v1810 = vld [vmem:[#allocation7 + $0x5e8] sm:$0xff]
    %v1811 = vld [vmem:[#allocation7 + $0x5f0] sm:$0xff]
    %v1812 = vld [vmem:[#allocation7 + $0x5f8] sm:$0xff]
    %v1813 = vld [vmem:[#allocation7 + $0x600] sm:$0xff]
    %v1814 = vld [vmem:[#allocation7 + $0x608] sm:$0xff]
    %v1815 = vld [vmem:[#allocation7 + $0x610] sm:$0xff]
    %v1816 = vld [vmem:[#allocation7 + $0x618] sm:$0xff]
    %v1817 = vld [vmem:[#allocation7 + $0x620] sm:$0xff]
    %v1818 = vld [vmem:[#allocation7 + $0x628] sm:$0xff]
    %v1819 = vld [vmem:[#allocation7 + $0x630] sm:$0xff]
    %v1820 = vld [vmem:[#allocation7 + $0x638] sm:$0xff]
    %v1821 = vld [vmem:[#allocation7 + $0x640] sm:$0xff]
    %v1822 = vld [vmem:[#allocation7 + $0x648] sm:$0xff]
    %v1823 = vld [vmem:[#allocation7 + $0x650] sm:$0xff]
    %v1824 = vld [vmem:[#allocation7 + $0x658] sm:$0xff]
    %v1825 = vld [vmem:[#allocation7 + $0x660] sm:$0xff]
    %v1826 = vld [vmem:[#allocation7 + $0x668] sm:$0xff]
    %v1827 = vld [vmem:[#allocation7 + $0x670] sm:$0xff]
    %v1828 = vld [vmem:[#allocation7 + $0x678] sm:$0xff]
    %v1829 = vld [vmem:[#allocation7 + $0x680] sm:$0xff]
    %v1830 = vld [vmem:[#allocation7 + $0x688] sm:$0xff]
    %v1831 = vld [vmem:[#allocation7 + $0x690] sm:$0xff]
    %v1832 = vld [vmem:[#allocation7 + $0x698] sm:$0xff]
    %v1833 = vld [vmem:[#allocation7 + $0x6a0] sm:$0xff]
    %v1834 = vld [vmem:[#allocation7 + $0x6a8] sm:$0xff]
    %v1835 = vld [vmem:[#allocation7 + $0x6b0] sm:$0xff]
    %v1836 = vld [vmem:[#allocation7 + $0x6b8] sm:$0xff]
    %v1837 = vld [vmem:[#allocation7 + $0x6c0] sm:$0xff]
    %v1838 = vld [vmem:[#allocation7 + $0x6c8] sm:$0xff]
    %v1839 = vld [vmem:[#allocation7 + $0x6d0] sm:$0xff]
    %v1840 = vld [vmem:[#allocation7 + $0x6d8] sm:$0xff]
    %v1841 = vld [vmem:[#allocation7 + $0x6e0] sm:$0xff]
    %v1842 = vld [vmem:[#allocation7 + $0x6e8] sm:$0xff]
    %v1843 = vld [vmem:[#allocation7 + $0x6f0] sm:$0xff]
    %v1844 = vld [vmem:[#allocation7 + $0x6f8] sm:$0xff]
    %v1845 = vld [vmem:[#allocation7 + $0x700] sm:$0xff]
    %v1846 = vld [vmem:[#allocation7 + $0x708] sm:$0xff]
    %v1847 = vld [vmem:[#allocation7 + $0x710] sm:$0xff]
    %v1848 = vld [vmem:[#allocation7 + $0x718] sm:$0xff]
    %v1849 = vld [vmem:[#allocation7 + $0x720] sm:$0xff]
    %v1850 = vld [vmem:[#allocation7 + $0x728] sm:$0xff]
    %v1851 = vld [vmem:[#allocation7 + $0x730] sm:$0xff]
    %v1852 = vld [vmem:[#allocation7 + $0x738] sm:$0xff]
    %v1853 = vld [vmem:[#allocation7 + $0x740] sm:$0xff]
    %v1854 = vld [vmem:[#allocation7 + $0x748] sm:$0xff]
    %v1855 = vld [vmem:[#allocation7 + $0x750] sm:$0xff]
    %v1856 = vld [vmem:[#allocation7 + $0x758] sm:$0xff]
    %v1857 = vld [vmem:[#allocation7 + $0x760] sm:$0xff]
    %v1858 = vld [vmem:[#allocation7 + $0x768] sm:$0xff]
    %v1859 = vld [vmem:[#allocation7 + $0x770] sm:$0xff]
    %v1860 = vld [vmem:[#allocation7 + $0x778] sm:$0xff]
    %v1861 = vld [vmem:[#allocation7 + $0x780] sm:$0xff]
    %v1862 = vld [vmem:[#allocation7 + $0x788] sm:$0xff]
    %v1863 = vld [vmem:[#allocation7 + $0x790] sm:$0xff]
    %v1864 = vld [vmem:[#allocation7 + $0x798] sm:$0xff]
    %v1865 = vld [vmem:[#allocation7 + $0x7a0] sm:$0xff]
    %v1866 = vld [vmem:[#allocation7 + $0x7a8] sm:$0xff]
    %v1867 = vld [vmem:[#allocation7 + $0x7b0] sm:$0xff]
    %v1868 = vld [vmem:[#allocation7 + $0x7b8] sm:$0xff]
    %v1869 = vld [vmem:[#allocation7 + $0x7c0] sm:$0xff]
    %v1870 = vld [vmem:[#allocation7 + $0x7c8] sm:$0xff]
    %v1871 = vld [vmem:[#allocation7 + $0x7d0] sm:$0xff]
    %v1872 = vld [vmem:[#allocation7 + $0x7d8] sm:$0xff]
    %v1873 = vld [vmem:[#allocation7 + $0x7e0] sm:$0xff]
    %v1874 = vld [vmem:[#allocation7 + $0x7e8] sm:$0xff]
    %v1875 = vld [vmem:[#allocation7 + $0x7f0] sm:$0xff]
    %v1876 = vld [vmem:[#allocation7 + $0x7f8] sm:$0xff]
    %v2133 = vunpack.c.l.b16 %v1621
    %v2134 = vunpack.c.h.b16 %v1621
    %v2135 = vunpack.c.l.b16 %v1622
    %v2136 = vunpack.c.h.b16 %v1622
    %v2137 = vunpack.c.l.b16 %v1623
    %v2138 = vunpack.c.h.b16 %v1623
    %v2139 = vunpack.c.l.b16 %v1624
    %v2140 = vunpack.c.h.b16 %v1624
    %v2141 = vunpack.c.l.b16 %v1625
    %v2142 = vunpack.c.h.b16 %v1625
    %v2143 = vunpack.c.l.b16 %v1626
    %v2144 = vunpack.c.h.b16 %v1626
    %v2145 = vunpack.c.l.b16 %v1627
    %v2146 = vunpack.c.h.b16 %v1627
    %v2147 = vunpack.c.l.b16 %v1628
    %v2148 = vunpack.c.h.b16 %v1628
    %v2149 = vunpack.c.l.b16 %v1629
    %v2150 = vunpack.c.h.b16 %v1629
    %v2151 = vunpack.c.l.b16 %v1630
    %v2152 = vunpack.c.h.b16 %v1630
    %v2153 = vunpack.c.l.b16 %v1631
    %v2154 = vunpack.c.h.b16 %v1631
    %v2155 = vunpack.c.l.b16 %v1632
    %v2156 = vunpack.c.h.b16 %v1632
    %v2157 = vunpack.c.l.b16 %v1633
    %v2158 = vunpack.c.h.b16 %v1633
    %v2159 = vunpack.c.l.b16 %v1634
    %v2160 = vunpack.c.h.b16 %v1634
    %v2161 = vunpack.c.l.b16 %v1635
    %v2162 = vunpack.c.h.b16 %v1635
    %v2163 = vunpack.c.l.b16 %v1636
    %v2164 = vunpack.c.h.b16 %v1636
    %v2165 = vunpack.c.l.b16 %v1637
    %v2166 = vunpack.c.h.b16 %v1637
    %v2167 = vunpack.c.l.b16 %v1638
    %v2168 = vunpack.c.h.b16 %v1638
    %v2169 = vunpack.c.l.b16 %v1639
    %v2170 = vunpack.c.h.b16 %v1639
    %v2171 = vunpack.c.l.b16 %v1640
    %v2172 = vunpack.c.h.b16 %v1640
    %v2173 = vunpack.c.l.b16 %v1641
    %v2174 = vunpack.c.h.b16 %v1641
    %v2175 = vunpack.c.l.b16 %v1642
    %v2176 = vunpack.c.h.b16 %v1642
    %v2177 = vunpack.c.l.b16 %v1643
    %v2178 = vunpack.c.h.b16 %v1643
    %v2179 = vunpack.c.l.b16 %v1644
    %v2180 = vunpack.c.h.b16 %v1644
    %v2181 = vunpack.c.l.b16 %v1645
    %v2182 = vunpack.c.h.b16 %v1645
    %v2183 = vunpack.c.l.b16 %v1646
    %v2184 = vunpack.c.h.b16 %v1646
    %v2185 = vunpack.c.l.b16 %v1647
    %v2186 = vunpack.c.h.b16 %v1647
    %v2187 = vunpack.c.l.b16 %v1648
    %v2188 = vunpack.c.h.b16 %v1648
    %v2189 = vunpack.c.l.b16 %v1649
    %v2190 = vunpack.c.h.b16 %v1649
    %v2191 = vunpack.c.l.b16 %v1650
    %v2192 = vunpack.c.h.b16 %v1650
    %v2193 = vunpack.c.l.b16 %v1651
    %v2194 = vunpack.c.h.b16 %v1651
    %v2195 = vunpack.c.l.b16 %v1652
    %v2196 = vunpack.c.h.b16 %v1652
    %v2197 = vunpack.c.l.b16 %v1653
    %v2198 = vunpack.c.h.b16 %v1653
    %v2199 = vunpack.c.l.b16 %v1654
    %v2200 = vunpack.c.h.b16 %v1654
    %v2201 = vunpack.c.l.b16 %v1655
    %v2202 = vunpack.c.h.b16 %v1655
    %v2203 = vunpack.c.l.b16 %v1656
    %v2204 = vunpack.c.h.b16 %v1656
    %v2205 = vunpack.c.l.b16 %v1657
    %v2206 = vunpack.c.h.b16 %v1657
    %v2207 = vunpack.c.l.b16 %v1658
    %v2208 = vunpack.c.h.b16 %v1658
    %v2209 = vunpack.c.l.b16 %v1659
    %v2210 = vunpack.c.h.b16 %v1659
    %v2211 = vunpack.c.l.b16 %v1660
    %v2212 = vunpack.c.h.b16 %v1660
    %v2213 = vunpack.c.l.b16 %v1661
    %v2214 = vunpack.c.h.b16 %v1661
    %v2215 = vunpack.c.l.b16 %v1662
    %v2216 = vunpack.c.h.b16 %v1662
    %v2217 = vunpack.c.l.b16 %v1663
    %v2218 = vunpack.c.h.b16 %v1663
    %v2219 = vunpack.c.l.b16 %v1664
    %v2220 = vunpack.c.h.b16 %v1664
    %v2221 = vunpack.c.l.b16 %v1665
    %v2222 = vunpack.c.h.b16 %v1665
    %v2223 = vunpack.c.l.b16 %v1666
    %v2224 = vunpack.c.h.b16 %v1666
    %v2225 = vunpack.c.l.b16 %v1667
    %v2226 = vunpack.c.h.b16 %v1667
    %v2227 = vunpack.c.l.b16 %v1668
    %v2228 = vunpack.c.h.b16 %v1668
    %v2229 = vunpack.c.l.b16 %v1669
    %v2230 = vunpack.c.h.b16 %v1669
    %v2231 = vunpack.c.l.b16 %v1670
    %v2232 = vunpack.c.h.b16 %v1670
    %v2233 = vunpack.c.l.b16 %v1671
    %v2234 = vunpack.c.h.b16 %v1671
    %v2235 = vunpack.c.l.b16 %v1672
    %v2236 = vunpack.c.h.b16 %v1672
    %v2237 = vunpack.c.l.b16 %v1673
    %v2238 = vunpack.c.h.b16 %v1673
    %v2239 = vunpack.c.l.b16 %v1674
    %v2240 = vunpack.c.h.b16 %v1674
    %v2241 = vunpack.c.l.b16 %v1675
    %v2242 = vunpack.c.h.b16 %v1675
    %v2243 = vunpack.c.l.b16 %v1676
    %v2244 = vunpack.c.h.b16 %v1676
    %v2245 = vunpack.c.l.b16 %v1677
    %v2246 = vunpack.c.h.b16 %v1677
    %v2247 = vunpack.c.l.b16 %v1678
    %v2248 = vunpack.c.h.b16 %v1678
    %v2249 = vunpack.c.l.b16 %v1679
    %v2250 = vunpack.c.h.b16 %v1679
    %v2251 = vunpack.c.l.b16 %v1680
    %v2252 = vunpack.c.h.b16 %v1680
    %v2253 = vunpack.c.l.b16 %v1681
    %v2254 = vunpack.c.h.b16 %v1681
    %v2255 = vunpack.c.l.b16 %v1682
    %v2256 = vunpack.c.h.b16 %v1682
    %v2257 = vunpack.c.l.b16 %v1683
    %v2258 = vunpack.c.h.b16 %v1683
    %v2259 = vunpack.c.l.b16 %v1684
    %v2260 = vunpack.c.h.b16 %v1684
    %v2261 = vunpack.c.l.b16 %v1685
    %v2262 = vunpack.c.h.b16 %v1685
    %v2263 = vunpack.c.l.b16 %v1686
    %v2264 = vunpack.c.h.b16 %v1686
    %v2265 = vunpack.c.l.b16 %v1687
    %v2266 = vunpack.c.h.b16 %v1687
    %v2267 = vunpack.c.l.b16 %v1688
    %v2268 = vunpack.c.h.b16 %v1688
    %v2269 = vunpack.c.l.b16 %v1689
    %v2270 = vunpack.c.h.b16 %v1689
    %v2271 = vunpack.c.l.b16 %v1690
    %v2272 = vunpack.c.h.b16 %v1690
    %v2273 = vunpack.c.l.b16 %v1691
    %v2274 = vunpack.c.h.b16 %v1691
    %v2275 = vunpack.c.l.b16 %v1692
    %v2276 = vunpack.c.h.b16 %v1692
    %v2277 = vunpack.c.l.b16 %v1693
    %v2278 = vunpack.c.h.b16 %v1693
    %v2279 = vunpack.c.l.b16 %v1694
    %v2280 = vunpack.c.h.b16 %v1694
    %v2281 = vunpack.c.l.b16 %v1695
    %v2282 = vunpack.c.h.b16 %v1695
    %v2283 = vunpack.c.l.b16 %v1696
    %v2284 = vunpack.c.h.b16 %v1696
    %v2285 = vunpack.c.l.b16 %v1697
    %v2286 = vunpack.c.h.b16 %v1697
    %v2287 = vunpack.c.l.b16 %v1698
    %v2288 = vunpack.c.h.b16 %v1698
    %v2289 = vunpack.c.l.b16 %v1699
    %v2290 = vunpack.c.h.b16 %v1699
    %v2291 = vunpack.c.l.b16 %v1700
    %v2292 = vunpack.c.h.b16 %v1700
    %v2293 = vunpack.c.l.b16 %v1701
    %v2294 = vunpack.c.h.b16 %v1701
    %v2295 = vunpack.c.l.b16 %v1702
    %v2296 = vunpack.c.h.b16 %v1702
    %v2297 = vunpack.c.l.b16 %v1703
    %v2298 = vunpack.c.h.b16 %v1703
    %v2299 = vunpack.c.l.b16 %v1704
    %v2300 = vunpack.c.h.b16 %v1704
    %v2301 = vunpack.c.l.b16 %v1705
    %v2302 = vunpack.c.h.b16 %v1705
    %v2303 = vunpack.c.l.b16 %v1706
    %v2304 = vunpack.c.h.b16 %v1706
    %v2305 = vunpack.c.l.b16 %v1707
    %v2306 = vunpack.c.h.b16 %v1707
    %v2307 = vunpack.c.l.b16 %v1708
    %v2308 = vunpack.c.h.b16 %v1708
    %v2309 = vunpack.c.l.b16 %v1709
    %v2310 = vunpack.c.h.b16 %v1709
    %v2311 = vunpack.c.l.b16 %v1710
    %v2312 = vunpack.c.h.b16 %v1710
    %v2313 = vunpack.c.l.b16 %v1711
    %v2314 = vunpack.c.h.b16 %v1711
    %v2315 = vunpack.c.l.b16 %v1712
    %v2316 = vunpack.c.h.b16 %v1712
    %v2317 = vunpack.c.l.b16 %v1713
    %v2318 = vunpack.c.h.b16 %v1713
    %v2319 = vunpack.c.l.b16 %v1714
    %v2320 = vunpack.c.h.b16 %v1714
    %v2321 = vunpack.c.l.b16 %v1715
    %v2322 = vunpack.c.h.b16 %v1715
    %v2323 = vunpack.c.l.b16 %v1716
    %v2324 = vunpack.c.h.b16 %v1716
    %v2325 = vunpack.c.l.b16 %v1717
    %v2326 = vunpack.c.h.b16 %v1717
    %v2327 = vunpack.c.l.b16 %v1718
    %v2328 = vunpack.c.h.b16 %v1718
    %v2329 = vunpack.c.l.b16 %v1719
    %v2330 = vunpack.c.h.b16 %v1719
    %v2331 = vunpack.c.l.b16 %v1720
    %v2332 = vunpack.c.h.b16 %v1720
    %v2333 = vunpack.c.l.b16 %v1721
    %v2334 = vunpack.c.h.b16 %v1721
    %v2335 = vunpack.c.l.b16 %v1722
    %v2336 = vunpack.c.h.b16 %v1722
    %v2337 = vunpack.c.l.b16 %v1723
    %v2338 = vunpack.c.h.b16 %v1723
    %v2339 = vunpack.c.l.b16 %v1724
    %v2340 = vunpack.c.h.b16 %v1724
    %v2341 = vunpack.c.l.b16 %v1725
    %v2342 = vunpack.c.h.b16 %v1725
    %v2343 = vunpack.c.l.b16 %v1726
    %v2344 = vunpack.c.h.b16 %v1726
    %v2345 = vunpack.c.l.b16 %v1727
    %v2346 = vunpack.c.h.b16 %v1727
    %v2347 = vunpack.c.l.b16 %v1728
    %v2348 = vunpack.c.h.b16 %v1728
    %v2349 = vunpack.c.l.b16 %v1729
    %v2350 = vunpack.c.h.b16 %v1729
    %v2351 = vunpack.c.l.b16 %v1730
    %v2352 = vunpack.c.h.b16 %v1730
    %v2353 = vunpack.c.l.b16 %v1731
    %v2354 = vunpack.c.h.b16 %v1731
    %v2355 = vunpack.c.l.b16 %v1732
    %v2356 = vunpack.c.h.b16 %v1732
    %v2357 = vunpack.c.l.b16 %v1733
    %v2358 = vunpack.c.h.b16 %v1733
    %v2359 = vunpack.c.l.b16 %v1734
    %v2360 = vunpack.c.h.b16 %v1734
    %v2361 = vunpack.c.l.b16 %v1735
    %v2362 = vunpack.c.h.b16 %v1735
    %v2363 = vunpack.c.l.b16 %v1736
    %v2364 = vunpack.c.h.b16 %v1736
    %v2365 = vunpack.c.l.b16 %v1737
    %v2366 = vunpack.c.h.b16 %v1737
    %v2367 = vunpack.c.l.b16 %v1738
    %v2368 = vunpack.c.h.b16 %v1738
    %v2369 = vunpack.c.l.b16 %v1739
    %v2370 = vunpack.c.h.b16 %v1739
    %v2371 = vunpack.c.l.b16 %v1740
    %v2372 = vunpack.c.h.b16 %v1740
    %v2373 = vunpack.c.l.b16 %v1741
    %v2374 = vunpack.c.h.b16 %v1741
    %v2375 = vunpack.c.l.b16 %v1742
    %v2376 = vunpack.c.h.b16 %v1742
    %v2377 = vunpack.c.l.b16 %v1743
    %v2378 = vunpack.c.h.b16 %v1743
    %v2379 = vunpack.c.l.b16 %v1744
    %v2380 = vunpack.c.h.b16 %v1744
    %v2381 = vunpack.c.l.b16 %v1745
    %v2382 = vunpack.c.h.b16 %v1745
    %v2383 = vunpack.c.l.b16 %v1746
    %v2384 = vunpack.c.h.b16 %v1746
    %v2385 = vunpack.c.l.b16 %v1747
    %v2386 = vunpack.c.h.b16 %v1747
    %v2387 = vunpack.c.l.b16 %v1748
    %v2388 = vunpack.c.h.b16 %v1748
    %v2389 = vunpack.c.l.b16 %v1749
    %v2390 = vunpack.c.h.b16 %v1749
    %v2391 = vunpack.c.l.b16 %v1750
    %v2392 = vunpack.c.h.b16 %v1750
    %v2393 = vunpack.c.l.b16 %v1751
    %v2394 = vunpack.c.h.b16 %v1751
    %v2395 = vunpack.c.l.b16 %v1752
    %v2396 = vunpack.c.h.b16 %v1752
    %v2397 = vunpack.c.l.b16 %v1753
    %v2398 = vunpack.c.h.b16 %v1753
    %v2399 = vunpack.c.l.b16 %v1754
    %v2400 = vunpack.c.h.b16 %v1754
    %v2401 = vunpack.c.l.b16 %v1755
    %v2402 = vunpack.c.h.b16 %v1755
    %v2403 = vunpack.c.l.b16 %v1756
    %v2404 = vunpack.c.h.b16 %v1756
    %v2405 = vunpack.c.l.b16 %v1757
    %v2406 = vunpack.c.h.b16 %v1757
    %v2407 = vunpack.c.l.b16 %v1758
    %v2408 = vunpack.c.h.b16 %v1758
    %v2409 = vunpack.c.l.b16 %v1759
    %v2410 = vunpack.c.h.b16 %v1759
    %v2411 = vunpack.c.l.b16 %v1760
    %v2412 = vunpack.c.h.b16 %v1760
    %v2413 = vunpack.c.l.b16 %v1761
    %v2414 = vunpack.c.h.b16 %v1761
    %v2415 = vunpack.c.l.b16 %v1762
    %v2416 = vunpack.c.h.b16 %v1762
    %v2417 = vunpack.c.l.b16 %v1763
    %v2418 = vunpack.c.h.b16 %v1763
    %v2419 = vunpack.c.l.b16 %v1764
    %v2420 = vunpack.c.h.b16 %v1764
    %v2421 = vunpack.c.l.b16 %v1765
    %v2422 = vunpack.c.h.b16 %v1765
    %v2423 = vunpack.c.l.b16 %v1766
    %v2424 = vunpack.c.h.b16 %v1766
    %v2425 = vunpack.c.l.b16 %v1767
    %v2426 = vunpack.c.h.b16 %v1767
    %v2427 = vunpack.c.l.b16 %v1768
    %v2428 = vunpack.c.h.b16 %v1768
    %v2429 = vunpack.c.l.b16 %v1769
    %v2430 = vunpack.c.h.b16 %v1769
    %v2431 = vunpack.c.l.b16 %v1770
    %v2432 = vunpack.c.h.b16 %v1770
    %v2433 = vunpack.c.l.b16 %v1771
    %v2434 = vunpack.c.h.b16 %v1771
    %v2435 = vunpack.c.l.b16 %v1772
    %v2436 = vunpack.c.h.b16 %v1772
    %v2437 = vunpack.c.l.b16 %v1773
    %v2438 = vunpack.c.h.b16 %v1773
    %v2439 = vunpack.c.l.b16 %v1774
    %v2440 = vunpack.c.h.b16 %v1774
    %v2441 = vunpack.c.l.b16 %v1775
    %v2442 = vunpack.c.h.b16 %v1775
    %v2443 = vunpack.c.l.b16 %v1776
    %v2444 = vunpack.c.h.b16 %v1776
    %v2445 = vunpack.c.l.b16 %v1777
    %v2446 = vunpack.c.h.b16 %v1777
    %v2447 = vunpack.c.l.b16 %v1778
    %v2448 = vunpack.c.h.b16 %v1778
    %v2449 = vunpack.c.l.b16 %v1779
    %v2450 = vunpack.c.h.b16 %v1779
    %v2451 = vunpack.c.l.b16 %v1780
    %v2452 = vunpack.c.h.b16 %v1780
    %v2453 = vunpack.c.l.b16 %v1781
    %v2454 = vunpack.c.h.b16 %v1781
    %v2455 = vunpack.c.l.b16 %v1782
    %v2456 = vunpack.c.h.b16 %v1782
    %v2457 = vunpack.c.l.b16 %v1783
    %v2458 = vunpack.c.h.b16 %v1783
    %v2459 = vunpack.c.l.b16 %v1784
    %v2460 = vunpack.c.h.b16 %v1784
    %v2461 = vunpack.c.l.b16 %v1785
    %v2462 = vunpack.c.h.b16 %v1785
    %v2463 = vunpack.c.l.b16 %v1786
    %v2464 = vunpack.c.h.b16 %v1786
    %v2465 = vunpack.c.l.b16 %v1787
    %v2466 = vunpack.c.h.b16 %v1787
    %v2467 = vunpack.c.l.b16 %v1788
    %v2468 = vunpack.c.h.b16 %v1788
    %v2469 = vunpack.c.l.b16 %v1789
    %v2470 = vunpack.c.h.b16 %v1789
    %v2471 = vunpack.c.l.b16 %v1790
    %v2472 = vunpack.c.h.b16 %v1790
    %v2473 = vunpack.c.l.b16 %v1791
    %v2474 = vunpack.c.h.b16 %v1791
    %v2475 = vunpack.c.l.b16 %v1792
    %v2476 = vunpack.c.h.b16 %v1792
    %v2477 = vunpack.c.l.b16 %v1793
    %v2478 = vunpack.c.h.b16 %v1793
    %v2479 = vunpack.c.l.b16 %v1794
    %v2480 = vunpack.c.h.b16 %v1794
    %v2481 = vunpack.c.l.b16 %v1795
    %v2482 = vunpack.c.h.b16 %v1795
    %v2483 = vunpack.c.l.b16 %v1796
    %v2484 = vunpack.c.h.b16 %v1796
    %v2485 = vunpack.c.l.b16 %v1797
    %v2486 = vunpack.c.h.b16 %v1797
    %v2487 = vunpack.c.l.b16 %v1798
    %v2488 = vunpack.c.h.b16 %v1798
    %v2489 = vunpack.c.l.b16 %v1799
    %v2490 = vunpack.c.h.b16 %v1799
    %v2491 = vunpack.c.l.b16 %v1800
    %v2492 = vunpack.c.h.b16 %v1800
    %v2493 = vunpack.c.l.b16 %v1801
    %v2494 = vunpack.c.h.b16 %v1801
    %v2495 = vunpack.c.l.b16 %v1802
    %v2496 = vunpack.c.h.b16 %v1802
    %v2497 = vunpack.c.l.b16 %v1803
    %v2498 = vunpack.c.h.b16 %v1803
    %v2499 = vunpack.c.l.b16 %v1804
    %v2500 = vunpack.c.h.b16 %v1804
    %v2501 = vunpack.c.l.b16 %v1805
    %v2502 = vunpack.c.h.b16 %v1805
    %v2503 = vunpack.c.l.b16 %v1806
    %v2504 = vunpack.c.h.b16 %v1806
    %v2505 = vunpack.c.l.b16 %v1807
    %v2506 = vunpack.c.h.b16 %v1807
    %v2507 = vunpack.c.l.b16 %v1808
    %v2508 = vunpack.c.h.b16 %v1808
    %v2509 = vunpack.c.l.b16 %v1809
    %v2510 = vunpack.c.h.b16 %v1809
    %v2511 = vunpack.c.l.b16 %v1810
    %v2512 = vunpack.c.h.b16 %v1810
    %v2513 = vunpack.c.l.b16 %v1811
    %v2514 = vunpack.c.h.b16 %v1811
    %v2515 = vunpack.c.l.b16 %v1812
    %v2516 = vunpack.c.h.b16 %v1812
    %v2517 = vunpack.c.l.b16 %v1813
    %v2518 = vunpack.c.h.b16 %v1813
    %v2519 = vunpack.c.l.b16 %v1814
    %v2520 = vunpack.c.h.b16 %v1814
    %v2521 = vunpack.c.l.b16 %v1815
    %v2522 = vunpack.c.h.b16 %v1815
    %v2523 = vunpack.c.l.b16 %v1816
    %v2524 = vunpack.c.h.b16 %v1816
    %v2525 = vunpack.c.l.b16 %v1817
    %v2526 = vunpack.c.h.b16 %v1817
    %v2527 = vunpack.c.l.b16 %v1818
    %v2528 = vunpack.c.h.b16 %v1818
    %v2529 = vunpack.c.l.b16 %v1819
    %v2530 = vunpack.c.h.b16 %v1819
    %v2531 = vunpack.c.l.b16 %v1820
    %v2532 = vunpack.c.h.b16 %v1820
    %v2533 = vunpack.c.l.b16 %v1821
    %v2534 = vunpack.c.h.b16 %v1821
    %v2535 = vunpack.c.l.b16 %v1822
    %v2536 = vunpack.c.h.b16 %v1822
    %v2537 = vunpack.c.l.b16 %v1823
    %v2538 = vunpack.c.h.b16 %v1823
    %v2539 = vunpack.c.l.b16 %v1824
    %v2540 = vunpack.c.h.b16 %v1824
    %v2541 = vunpack.c.l.b16 %v1825
    %v2542 = vunpack.c.h.b16 %v1825
    %v2543 = vunpack.c.l.b16 %v1826
    %v2544 = vunpack.c.h.b16 %v1826
    %v2545 = vunpack.c.l.b16 %v1827
    %v2546 = vunpack.c.h.b16 %v1827
    %v2547 = vunpack.c.l.b16 %v1828
    %v2548 = vunpack.c.h.b16 %v1828
    %v2549 = vunpack.c.l.b16 %v1829
    %v2550 = vunpack.c.h.b16 %v1829
    %v2551 = vunpack.c.l.b16 %v1830
    %v2552 = vunpack.c.h.b16 %v1830
    %v2553 = vunpack.c.l.b16 %v1831
    %v2554 = vunpack.c.h.b16 %v1831
    %v2555 = vunpack.c.l.b16 %v1832
    %v2556 = vunpack.c.h.b16 %v1832
    %v2557 = vunpack.c.l.b16 %v1833
    %v2558 = vunpack.c.h.b16 %v1833
    %v2559 = vunpack.c.l.b16 %v1834
    %v2560 = vunpack.c.h.b16 %v1834
    %v2561 = vunpack.c.l.b16 %v1835
    %v2562 = vunpack.c.h.b16 %v1835
    %v2563 = vunpack.c.l.b16 %v1836
    %v2564 = vunpack.c.h.b16 %v1836
    %v2565 = vunpack.c.l.b16 %v1837
    %v2566 = vunpack.c.h.b16 %v1837
    %v2567 = vunpack.c.l.b16 %v1838
    %v2568 = vunpack.c.h.b16 %v1838
    %v2569 = vunpack.c.l.b16 %v1839
    %v2570 = vunpack.c.h.b16 %v1839
    %v2571 = vunpack.c.l.b16 %v1840
    %v2572 = vunpack.c.h.b16 %v1840
    %v2573 = vunpack.c.l.b16 %v1841
    %v2574 = vunpack.c.h.b16 %v1841
    %v2575 = vunpack.c.l.b16 %v1842
    %v2576 = vunpack.c.h.b16 %v1842
    %v2577 = vunpack.c.l.b16 %v1843
    %v2578 = vunpack.c.h.b16 %v1843
    %v2579 = vunpack.c.l.b16 %v1844
    %v2580 = vunpack.c.h.b16 %v1844
    %v2581 = vunpack.c.l.b16 %v1845
    %v2582 = vunpack.c.h.b16 %v1845
    %v2583 = vunpack.c.l.b16 %v1846
    %v2584 = vunpack.c.h.b16 %v1846
    %v2585 = vunpack.c.l.b16 %v1847
    %v2586 = vunpack.c.h.b16 %v1847
    %v2587 = vunpack.c.l.b16 %v1848
    %v2588 = vunpack.c.h.b16 %v1848
    %v2589 = vunpack.c.l.b16 %v1849
    %v2590 = vunpack.c.h.b16 %v1849
    %v2591 = vunpack.c.l.b16 %v1850
    %v2592 = vunpack.c.h.b16 %v1850
    %v2593 = vunpack.c.l.b16 %v1851
    %v2594 = vunpack.c.h.b16 %v1851
    %v2595 = vunpack.c.l.b16 %v1852
    %v2596 = vunpack.c.h.b16 %v1852
    %v2597 = vunpack.c.l.b16 %v1853
    %v2598 = vunpack.c.h.b16 %v1853
    %v2599 = vunpack.c.l.b16 %v1854
    %v2600 = vunpack.c.h.b16 %v1854
    %v2601 = vunpack.c.l.b16 %v1855
    %v2602 = vunpack.c.h.b16 %v1855
    %v2603 = vunpack.c.l.b16 %v1856
    %v2604 = vunpack.c.h.b16 %v1856
    %v2605 = vunpack.c.l.b16 %v1857
    %v2606 = vunpack.c.h.b16 %v1857
    %v2607 = vunpack.c.l.b16 %v1858
    %v2608 = vunpack.c.h.b16 %v1858
    %v2609 = vunpack.c.l.b16 %v1859
    %v2610 = vunpack.c.h.b16 %v1859
    %v2611 = vunpack.c.l.b16 %v1860
    %v2612 = vunpack.c.h.b16 %v1860
    %v2613 = vunpack.c.l.b16 %v1861
    %v2614 = vunpack.c.h.b16 %v1861
    %v2615 = vunpack.c.l.b16 %v1862
    %v2616 = vunpack.c.h.b16 %v1862
    %v2617 = vunpack.c.l.b16 %v1863
    %v2618 = vunpack.c.h.b16 %v1863
    %v2619 = vunpack.c.l.b16 %v1864
    %v2620 = vunpack.c.h.b16 %v1864
    %v2621 = vunpack.c.l.b16 %v1865
    %v2622 = vunpack.c.h.b16 %v1865
    %v2623 = vunpack.c.l.b16 %v1866
    %v2624 = vunpack.c.h.b16 %v1866
    %v2625 = vunpack.c.l.b16 %v1867
    %v2626 = vunpack.c.h.b16 %v1867
    %v2627 = vunpack.c.l.b16 %v1868
    %v2628 = vunpack.c.h.b16 %v1868
    %v2629 = vunpack.c.l.b16 %v1869
    %v2630 = vunpack.c.h.b16 %v1869
    %v2631 = vunpack.c.l.b16 %v1870
    %v2632 = vunpack.c.h.b16 %v1870
    %v2633 = vunpack.c.l.b16 %v1871
    %v2634 = vunpack.c.h.b16 %v1871
    %v2635 = vunpack.c.l.b16 %v1872
    %v2636 = vunpack.c.h.b16 %v1872
    %v2637 = vunpack.c.l.b16 %v1873
    %v2638 = vunpack.c.h.b16 %v1873
    %v2639 = vunpack.c.l.b16 %v1874
    %v2640 = vunpack.c.h.b16 %v1874
    %v2641 = vunpack.c.l.b16 %v1875
    %v2642 = vunpack.c.h.b16 %v1875
    %v2643 = vunpack.c.l.b16 %v1876
    %v2644 = vunpack.c.h.b16 %v1876
    %v2645 = vpack.c.b16 %v2141, %v2133
    %v2646 = vpack.c.b16 %v2142, %v2134
    %v2647 = vpack.c.b16 %v2143, %v2135
    %v2648 = vpack.c.b16 %v2144, %v2136
    %v2649 = vpack.c.b16 %v2145, %v2137
    %v2650 = vpack.c.b16 %v2146, %v2138
    %v2651 = vpack.c.b16 %v2147, %v2139
    %v2652 = vpack.c.b16 %v2148, %v2140
    %v2653 = vpack.c.b16 %v2157, %v2149
    %v2654 = vpack.c.b16 %v2158, %v2150
    %v2655 = vpack.c.b16 %v2159, %v2151
    %v2656 = vpack.c.b16 %v2160, %v2152
    %v2657 = vpack.c.b16 %v2161, %v2153
    %v2658 = vpack.c.b16 %v2162, %v2154
    %v2659 = vpack.c.b16 %v2163, %v2155
    %v2660 = vpack.c.b16 %v2164, %v2156
    %v2661 = vpack.c.b16 %v2173, %v2165
    %v2662 = vpack.c.b16 %v2174, %v2166
    %v2663 = vpack.c.b16 %v2175, %v2167
    %v2664 = vpack.c.b16 %v2176, %v2168
    %v2665 = vpack.c.b16 %v2177, %v2169
    %v2666 = vpack.c.b16 %v2178, %v2170
    %v2667 = vpack.c.b16 %v2179, %v2171
    %v2668 = vpack.c.b16 %v2180, %v2172
    %v2669 = vpack.c.b16 %v2189, %v2181
    %v2670 = vpack.c.b16 %v2190, %v2182
    %v2671 = vpack.c.b16 %v2191, %v2183
    %v2672 = vpack.c.b16 %v2192, %v2184
    %v2673 = vpack.c.b16 %v2193, %v2185
    %v2674 = vpack.c.b16 %v2194, %v2186
    %v2675 = vpack.c.b16 %v2195, %v2187
    %v2676 = vpack.c.b16 %v2196, %v2188
    %v2677 = vpack.c.b16 %v2205, %v2197
    %v2678 = vpack.c.b16 %v2206, %v2198
    %v2679 = vpack.c.b16 %v2207, %v2199
    %v2680 = vpack.c.b16 %v2208, %v2200
    %v2681 = vpack.c.b16 %v2209, %v2201
    %v2682 = vpack.c.b16 %v2210, %v2202
    %v2683 = vpack.c.b16 %v2211, %v2203
    %v2684 = vpack.c.b16 %v2212, %v2204
    %v2685 = vpack.c.b16 %v2221, %v2213
    %v2686 = vpack.c.b16 %v2222, %v2214
    %v2687 = vpack.c.b16 %v2223, %v2215
    %v2688 = vpack.c.b16 %v2224, %v2216
    %v2689 = vpack.c.b16 %v2225, %v2217
    %v2690 = vpack.c.b16 %v2226, %v2218
    %v2691 = vpack.c.b16 %v2227, %v2219
    %v2692 = vpack.c.b16 %v2228, %v2220
    %v2693 = vpack.c.b16 %v2237, %v2229
    %v2694 = vpack.c.b16 %v2238, %v2230
    %v2695 = vpack.c.b16 %v2239, %v2231
    %v2696 = vpack.c.b16 %v2240, %v2232
    %v2697 = vpack.c.b16 %v2241, %v2233
    %v2698 = vpack.c.b16 %v2242, %v2234
    %v2699 = vpack.c.b16 %v2243, %v2235
    %v2700 = vpack.c.b16 %v2244, %v2236
    %v2701 = vpack.c.b16 %v2253, %v2245
    %v2702 = vpack.c.b16 %v2254, %v2246
    %v2703 = vpack.c.b16 %v2255, %v2247
    %v2704 = vpack.c.b16 %v2256, %v2248
    %v2705 = vpack.c.b16 %v2257, %v2249
    %v2706 = vpack.c.b16 %v2258, %v2250
    %v2707 = vpack.c.b16 %v2259, %v2251
    %v2708 = vpack.c.b16 %v2260, %v2252
    %v2709 = vpack.c.b16 %v2269, %v2261
    %v2710 = vpack.c.b16 %v2270, %v2262
    %v2711 = vpack.c.b16 %v2271, %v2263
    %v2712 = vpack.c.b16 %v2272, %v2264
    %v2713 = vpack.c.b16 %v2273, %v2265
    %v2714 = vpack.c.b16 %v2274, %v2266
    %v2715 = vpack.c.b16 %v2275, %v2267
    %v2716 = vpack.c.b16 %v2276, %v2268
    %v2717 = vpack.c.b16 %v2285, %v2277
    %v2718 = vpack.c.b16 %v2286, %v2278
    %v2719 = vpack.c.b16 %v2287, %v2279
    %v2720 = vpack.c.b16 %v2288, %v2280
    %v2721 = vpack.c.b16 %v2289, %v2281
    %v2722 = vpack.c.b16 %v2290, %v2282
    %v2723 = vpack.c.b16 %v2291, %v2283
    %v2724 = vpack.c.b16 %v2292, %v2284
    %v2725 = vpack.c.b16 %v2301, %v2293
    %v2726 = vpack.c.b16 %v2302, %v2294
    %v2727 = vpack.c.b16 %v2303, %v2295
    %v2728 = vpack.c.b16 %v2304, %v2296
    %v2729 = vpack.c.b16 %v2305, %v2297
    %v2730 = vpack.c.b16 %v2306, %v2298
    %v2731 = vpack.c.b16 %v2307, %v2299
    %v2732 = vpack.c.b16 %v2308, %v2300
    %v2733 = vpack.c.b16 %v2317, %v2309
    %v2734 = vpack.c.b16 %v2318, %v2310
    %v2735 = vpack.c.b16 %v2319, %v2311
    %v2736 = vpack.c.b16 %v2320, %v2312
    %v2737 = vpack.c.b16 %v2321, %v2313
    %v2738 = vpack.c.b16 %v2322, %v2314
    %v2739 = vpack.c.b16 %v2323, %v2315
    %v2740 = vpack.c.b16 %v2324, %v2316
    %v2741 = vpack.c.b16 %v2333, %v2325
    %v2742 = vpack.c.b16 %v2334, %v2326
    %v2743 = vpack.c.b16 %v2335, %v2327
    %v2744 = vpack.c.b16 %v2336, %v2328
    %v2745 = vpack.c.b16 %v2337, %v2329
    %v2746 = vpack.c.b16 %v2338, %v2330
    %v2747 = vpack.c.b16 %v2339, %v2331
    %v2748 = vpack.c.b16 %v2340, %v2332
    %v2749 = vpack.c.b16 %v2349, %v2341
    %v2750 = vpack.c.b16 %v2350, %v2342
    %v2751 = vpack.c.b16 %v2351, %v2343
    %v2752 = vpack.c.b16 %v2352, %v2344
    %v2753 = vpack.c.b16 %v2353, %v2345
    %v2754 = vpack.c.b16 %v2354, %v2346
    %v2755 = vpack.c.b16 %v2355, %v2347
    %v2756 = vpack.c.b16 %v2356, %v2348
    %v2757 = vpack.c.b16 %v2365, %v2357
    %v2758 = vpack.c.b16 %v2366, %v2358
    %v2759 = vpack.c.b16 %v2367, %v2359
    %v2760 = vpack.c.b16 %v2368, %v2360
    %v2761 = vpack.c.b16 %v2369, %v2361
    %v2762 = vpack.c.b16 %v2370, %v2362
    %v2763 = vpack.c.b16 %v2371, %v2363
    %v2764 = vpack.c.b16 %v2372, %v2364
    %v2765 = vpack.c.b16 %v2381, %v2373
    %v2766 = vpack.c.b16 %v2382, %v2374
    %v2767 = vpack.c.b16 %v2383, %v2375
    %v2768 = vpack.c.b16 %v2384, %v2376
    %v2769 = vpack.c.b16 %v2385, %v2377
    %v2770 = vpack.c.b16 %v2386, %v2378
    %v2771 = vpack.c.b16 %v2387, %v2379
    %v2772 = vpack.c.b16 %v2388, %v2380
    %v2773 = vpack.c.b16 %v2397, %v2389
    %v2774 = vpack.c.b16 %v2398, %v2390
    %v2775 = vpack.c.b16 %v2399, %v2391
    %v2776 = vpack.c.b16 %v2400, %v2392
    %v2777 = vpack.c.b16 %v2401, %v2393
    %v2778 = vpack.c.b16 %v2402, %v2394
    %v2779 = vpack.c.b16 %v2403, %v2395
    %v2780 = vpack.c.b16 %v2404, %v2396
    %v2781 = vpack.c.b16 %v2413, %v2405
    %v2782 = vpack.c.b16 %v2414, %v2406
    %v2783 = vpack.c.b16 %v2415, %v2407
    %v2784 = vpack.c.b16 %v2416, %v2408
    %v2785 = vpack.c.b16 %v2417, %v2409
    %v2786 = vpack.c.b16 %v2418, %v2410
    %v2787 = vpack.c.b16 %v2419, %v2411
    %v2788 = vpack.c.b16 %v2420, %v2412
    %v2789 = vpack.c.b16 %v2429, %v2421
    %v2790 = vpack.c.b16 %v2430, %v2422
    %v2791 = vpack.c.b16 %v2431, %v2423
    %v2792 = vpack.c.b16 %v2432, %v2424
    %v2793 = vpack.c.b16 %v2433, %v2425
    %v2794 = vpack.c.b16 %v2434, %v2426
    %v2795 = vpack.c.b16 %v2435, %v2427
    %v2796 = vpack.c.b16 %v2436, %v2428
    %v2797 = vpack.c.b16 %v2445, %v2437
    %v2798 = vpack.c.b16 %v2446, %v2438
    %v2799 = vpack.c.b16 %v2447, %v2439
    %v2800 = vpack.c.b16 %v2448, %v2440
    %v2801 = vpack.c.b16 %v2449, %v2441
    %v2802 = vpack.c.b16 %v2450, %v2442
    %v2803 = vpack.c.b16 %v2451, %v2443
    %v2804 = vpack.c.b16 %v2452, %v2444
    %v2805 = vpack.c.b16 %v2461, %v2453
    %v2806 = vpack.c.b16 %v2462, %v2454
    %v2807 = vpack.c.b16 %v2463, %v2455
    %v2808 = vpack.c.b16 %v2464, %v2456
    %v2809 = vpack.c.b16 %v2465, %v2457
    %v2810 = vpack.c.b16 %v2466, %v2458
    %v2811 = vpack.c.b16 %v2467, %v2459
    %v2812 = vpack.c.b16 %v2468, %v2460
    %v2813 = vpack.c.b16 %v2477, %v2469
    %v2814 = vpack.c.b16 %v2478, %v2470
    %v2815 = vpack.c.b16 %v2479, %v2471
    %v2816 = vpack.c.b16 %v2480, %v2472
    %v2817 = vpack.c.b16 %v2481, %v2473
    %v2818 = vpack.c.b16 %v2482, %v2474
    %v2819 = vpack.c.b16 %v2483, %v2475
    %v2820 = vpack.c.b16 %v2484, %v2476
    %v2821 = vpack.c.b16 %v2493, %v2485
    %v2822 = vpack.c.b16 %v2494, %v2486
    %v2823 = vpack.c.b16 %v2495, %v2487
    %v2824 = vpack.c.b16 %v2496, %v2488
    %v2825 = vpack.c.b16 %v2497, %v2489
    %v2826 = vpack.c.b16 %v2498, %v2490
    %v2827 = vpack.c.b16 %v2499, %v2491
    %v2828 = vpack.c.b16 %v2500, %v2492
    %v2829 = vpack.c.b16 %v2509, %v2501
    %v2830 = vpack.c.b16 %v2510, %v2502
    %v2831 = vpack.c.b16 %v2511, %v2503
    %v2832 = vpack.c.b16 %v2512, %v2504
    %v2833 = vpack.c.b16 %v2513, %v2505
    %v2834 = vpack.c.b16 %v2514, %v2506
    %v2835 = vpack.c.b16 %v2515, %v2507
    %v2836 = vpack.c.b16 %v2516, %v2508
    %v2837 = vpack.c.b16 %v2525, %v2517
    %v2838 = vpack.c.b16 %v2526, %v2518
    %v2839 = vpack.c.b16 %v2527, %v2519
    %v2840 = vpack.c.b16 %v2528, %v2520
    %v2841 = vpack.c.b16 %v2529, %v2521
    %v2842 = vpack.c.b16 %v2530, %v2522
    %v2843 = vpack.c.b16 %v2531, %v2523
    %v2844 = vpack.c.b16 %v2532, %v2524
    %v2845 = vpack.c.b16 %v2541, %v2533
    %v2846 = vpack.c.b16 %v2542, %v2534
    %v2847 = vpack.c.b16 %v2543, %v2535
    %v2848 = vpack.c.b16 %v2544, %v2536
    %v2849 = vpack.c.b16 %v2545, %v2537
    %v2850 = vpack.c.b16 %v2546, %v2538
    %v2851 = vpack.c.b16 %v2547, %v2539
    %v2852 = vpack.c.b16 %v2548, %v2540
    %v2853 = vpack.c.b16 %v2557, %v2549
    %v2854 = vpack.c.b16 %v2558, %v2550
    %v2855 = vpack.c.b16 %v2559, %v2551
    %v2856 = vpack.c.b16 %v2560, %v2552
    %v2857 = vpack.c.b16 %v2561, %v2553
    %v2858 = vpack.c.b16 %v2562, %v2554
    %v2859 = vpack.c.b16 %v2563, %v2555
    %v2860 = vpack.c.b16 %v2564, %v2556
    %v2861 = vpack.c.b16 %v2573, %v2565
    %v2862 = vpack.c.b16 %v2574, %v2566
    %v2863 = vpack.c.b16 %v2575, %v2567
    %v2864 = vpack.c.b16 %v2576, %v2568
    %v2865 = vpack.c.b16 %v2577, %v2569
    %v2866 = vpack.c.b16 %v2578, %v2570
    %v2867 = vpack.c.b16 %v2579, %v2571
    %v2868 = vpack.c.b16 %v2580, %v2572
    %v2869 = vpack.c.b16 %v2589, %v2581
    %v2870 = vpack.c.b16 %v2590, %v2582
    %v2871 = vpack.c.b16 %v2591, %v2583
    %v2872 = vpack.c.b16 %v2592, %v2584
    %v2873 = vpack.c.b16 %v2593, %v2585
    %v2874 = vpack.c.b16 %v2594, %v2586
    %v2875 = vpack.c.b16 %v2595, %v2587
    %v2876 = vpack.c.b16 %v2596, %v2588
    %v2877 = vpack.c.b16 %v2605, %v2597
    %v2878 = vpack.c.b16 %v2606, %v2598
    %v2879 = vpack.c.b16 %v2607, %v2599
    %v2880 = vpack.c.b16 %v2608, %v2600
    %v2881 = vpack.c.b16 %v2609, %v2601
    %v2882 = vpack.c.b16 %v2610, %v2602
    %v2883 = vpack.c.b16 %v2611, %v2603
    %v2884 = vpack.c.b16 %v2612, %v2604
    %v2885 = vpack.c.b16 %v2621, %v2613
    %v2886 = vpack.c.b16 %v2622, %v2614
    %v2887 = vpack.c.b16 %v2623, %v2615
    %v2888 = vpack.c.b16 %v2624, %v2616
    %v2889 = vpack.c.b16 %v2625, %v2617
    %v2890 = vpack.c.b16 %v2626, %v2618
    %v2891 = vpack.c.b16 %v2627, %v2619
    %v2892 = vpack.c.b16 %v2628, %v2620
    %v2893 = vpack.c.b16 %v2637, %v2629
    %v2894 = vpack.c.b16 %v2638, %v2630
    %v2895 = vpack.c.b16 %v2639, %v2631
    %v2896 = vpack.c.b16 %v2640, %v2632
    %v2897 = vpack.c.b16 %v2641, %v2633
    %v2898 = vpack.c.b16 %v2642, %v2634
    %v2899 = vpack.c.b16 %v2643, %v2635
    %v2900 = vpack.c.b16 %v2644, %v2636
    %3157 = vmatprep.subr.bf16.mxu0 %v2646
    %3158 = vmatpush1.bf16.msra.mxu0 %v2645
    %3159 = vmatprep.subr.bf16.mxu0 %v2654
    %3160 = vmatpush1.bf16.msra.mxu0 %v2653
    %3161 = vmatprep.subr.bf16.mxu0 %v2662
    %3162 = vmatpush1.bf16.msra.mxu0 %v2661
    %3163 = vmatprep.subr.bf16.mxu0 %v2670
    %3164 = vmatpush1.bf16.msra.mxu0 %v2669
    %3165 = vmatprep.subr.bf16.mxu0 %v2678
    %3166 = vmatpush1.bf16.msra.mxu0 %v2677
    %3167 = vmatprep.subr.bf16.mxu0 %v2686
    %3168 = vmatpush1.bf16.msra.mxu0 %v2685
    %3169 = vmatprep.subr.bf16.mxu0 %v2694
    %3170 = vmatpush1.bf16.msra.mxu0 %v2693
    %3171 = vmatprep.subr.bf16.mxu0 %v2702
    %3172 = vmatpush1.bf16.msra.mxu0 %v2701
    %3173 = vmatprep.subr.bf16.mxu0 %v2710
    %3174 = vmatpush1.bf16.msra.mxu0 %v2709
    %3175 = vmatprep.subr.bf16.mxu0 %v2718
    %3176 = vmatpush1.bf16.msra.mxu0 %v2717
    %3177 = vmatprep.subr.bf16.mxu0 %v2726
    %3178 = vmatpush1.bf16.msra.mxu0 %v2725
    %3179 = vmatprep.subr.bf16.mxu0 %v2734
    %3180 = vmatpush1.bf16.msra.mxu0 %v2733
    %3181 = vmatprep.subr.bf16.mxu0 %v2742
    %3182 = vmatpush1.bf16.msra.mxu0 %v2741
    %3183 = vmatprep.subr.bf16.mxu0 %v2750
    %3184 = vmatpush1.bf16.msra.mxu0 %v2749
    %3185 = vmatprep.subr.bf16.mxu0 %v2758
    %3186 = vmatpush1.bf16.msra.mxu0 %v2757
    %3187 = vmatprep.subr.bf16.mxu0 %v2766
    %3188 = vmatpush1.bf16.msra.mxu0 %v2765
    %3189 = vmatprep.mubr.bf16.mxu0 %v1618
    %3190 = vmatmul.mubr.bf16.gmra.mrb[0].mxu0 %v1617
    %v3191 = vpop.f32.mrb[0].mxu0
    %v3192 = vadd.f32 0.0, %v3191
    %v3193 = vpop.f32.mrb[0].mxu0
    %v3194 = vadd.f32 0.0, %v3193
    %v3195 = vpop.f32.mrb[0].mxu0
    %v3196 = vpop.f32.mrb[0].mxu0
    %3197 = vdwg.mxu0
    %3198 = vmatprep.subr.bf16.mxu0 %v2774
    %3199 = vmatpush1.bf16.msra.mxu0 %v2773
    %3200 = vmatprep.subr.bf16.mxu0 %v2782
    %3201 = vmatpush1.bf16.msra.mxu0 %v2781
    %3202 = vmatprep.subr.bf16.mxu0 %v2790
    %3203 = vmatpush1.bf16.msra.mxu0 %v2789
    %3204 = vmatprep.subr.bf16.mxu0 %v2798
    %3205 = vmatpush1.bf16.msra.mxu0 %v2797
    %3206 = vmatprep.subr.bf16.mxu0 %v2806
    %3207 = vmatpush1.bf16.msra.mxu0 %v2805
    %3208 = vmatprep.subr.bf16.mxu0 %v2814
    %3209 = vmatpush1.bf16.msra.mxu0 %v2813
    %3210 = vmatprep.subr.bf16.mxu0 %v2822
    %3211 = vmatpush1.bf16.msra.mxu0 %v2821
    %3212 = vmatprep.subr.bf16.mxu0 %v2830
    %3213 = vmatpush1.bf16.msra.mxu0 %v2829
    %3214 = vmatprep.subr.bf16.mxu0 %v2838
    %3215 = vmatpush1.bf16.msra.mxu0 %v2837
    %3216 = vmatprep.subr.bf16.mxu0 %v2846
    %3217 = vmatpush1.bf16.msra.mxu0 %v2845
    %3218 = vmatprep.subr.bf16.mxu0 %v2854
    %3219 = vmatpush1.bf16.msra.mxu0 %v2853
    %3220 = vmatprep.subr.bf16.mxu0 %v2862
    %3221 = vmatpush1.bf16.msra.mxu0 %v2861
    %3222 = vmatprep.subr.bf16.mxu0 %v2870
    %3223 = vmatpush1.bf16.msra.mxu0 %v2869
    %3224 = vmatprep.subr.bf16.mxu0 %v2878
    %3225 = vmatpush1.bf16.msra.mxu0 %v2877
    %3226 = vmatprep.subr.bf16.mxu0 %v2886
    %3227 = vmatpush1.bf16.msra.mxu0 %v2885
    %3228 = vmatprep.subr.bf16.mxu0 %v2894
    %3229 = vmatpush1.bf16.msra.mxu0 %v2893
    %3230 = vmatprep.mubr.bf16.mxu0 %v1620
    %3231 = vmatmul.mubr.bf16.gmra.mrb[0].mxu0 %v1619
    %v3232 = vpop.f32.mrb[0].mxu0
    %v3233 = vadd.f32 %v3192, %v3232
    %v3234 = vpop.f32.mrb[0].mxu0
    %v3235 = vadd.f32 %v3194, %v3234
    %v3236 = vpop.f32.mrb[0].mxu0
    %v3237 = vpop.f32.mrb[0].mxu0
    %3238 = vdwg.mxu0
    %3239 = vmatprep.subr.bf16.mxu0 %v2648
    %3240 = vmatpush1.bf16.msra.mxu0 %v2647
    %3241 = vmatprep.subr.bf16.mxu0 %v2656
    %3242 = vmatpush1.bf16.msra.mxu0 %v2655
    %3243 = vmatprep.subr.bf16.mxu0 %v2664
    %3244 = vmatpush1.bf16.msra.mxu0 %v2663
    %3245 = vmatprep.subr.bf16.mxu0 %v2672
    %3246 = vmatpush1.bf16.msra.mxu0 %v2671
    %3247 = vmatprep.subr.bf16.mxu0 %v2680
    %3248 = vmatpush1.bf16.msra.mxu0 %v2679
    %3249 = vmatprep.subr.bf16.mxu0 %v2688
    %3250 = vmatpush1.bf16.msra.mxu0 %v2687
    %3251 = vmatprep.subr.bf16.mxu0 %v2696
    %3252 = vmatpush1.bf16.msra.mxu0 %v2695
    %3253 = vmatprep.subr.bf16.mxu0 %v2704
    %3254 = vmatpush1.bf16.msra.mxu0 %v2703
    %3255 = vmatprep.subr.bf16.mxu0 %v2712
    %3256 = vmatpush1.bf16.msra.mxu0 %v2711
    %3257 = vmatprep.subr.bf16.mxu0 %v2720
    %3258 = vmatpush1.bf16.msra.mxu0 %v2719
    %3259 = vmatprep.subr.bf16.mxu0 %v2728
    %3260 = vmatpush1.bf16.msra.mxu0 %v2727
    %3261 = vmatprep.subr.bf16.mxu0 %v2736
    %3262 = vmatpush1.bf16.msra.mxu0 %v2735
    %3263 = vmatprep.subr.bf16.mxu0 %v2744
    %3264 = vmatpush1.bf16.msra.mxu0 %v2743
    %3265 = vmatprep.subr.bf16.mxu0 %v2752
    %3266 = vmatpush1.bf16.msra.mxu0 %v2751
    %3267 = vmatprep.subr.bf16.mxu0 %v2760
    %3268 = vmatpush1.bf16.msra.mxu0 %v2759
    %3269 = vmatprep.subr.bf16.mxu0 %v2768
    %3270 = vmatpush1.bf16.msra.mxu0 %v2767
    %3271 = vmatprep.mubr.bf16.mxu0 %v1618
    %3272 = vmatmul.mubr.bf16.gmra.mrb[0].mxu0 %v1617
    %v3273 = vpop.f32.mrb[0].mxu0
    %v3274 = vadd.f32 0.0, %v3273
    %v3275 = vpop.f32.mrb[0].mxu0
    %v3276 = vadd.f32 0.0, %v3275
    %v3277 = vpop.f32.mrb[0].mxu0
    %v3278 = vpop.f32.mrb[0].mxu0
    %3279 = vdwg.mxu0
    %3280 = vmatprep.subr.bf16.mxu0 %v2776
    %3281 = vmatpush1.bf16.msra.mxu0 %v2775
    %3282 = vmatprep.subr.bf16.mxu0 %v2784
    %3283 = vmatpush1.bf16.msra.mxu0 %v2783
    %3284 = vmatprep.subr.bf16.mxu0 %v2792
    %3285 = vmatpush1.bf16.msra.mxu0 %v2791
    %3286 = vmatprep.subr.bf16.mxu0 %v2800
    %3287 = vmatpush1.bf16.msra.mxu0 %v2799
    %3288 = vmatprep.subr.bf16.mxu0 %v2808
    %3289 = vmatpush1.bf16.msra.mxu0 %v2807
    %3290 = vmatprep.subr.bf16.mxu0 %v2816
    %3291 = vmatpush1.bf16.msra.mxu0 %v2815
    %3292 = vmatprep.subr.bf16.mxu0 %v2824
    %3293 = vmatpush1.bf16.msra.mxu0 %v2823
    %3294 = vmatprep.subr.bf16.mxu0 %v2832
    %3295 = vmatpush1.bf16.msra.mxu0 %v2831
    %3296 = vmatprep.subr.bf16.mxu0 %v2840
    %3297 = vmatpush1.bf16.msra.mxu0 %v2839
    %3298 = vmatprep.subr.bf16.mxu0 %v2848
    %3299 = vmatpush1.bf16.msra.mxu0 %v2847
    %3300 = vmatprep.subr.bf16.mxu0 %v2856
    %3301 = vmatpush1.bf16.msra.mxu0 %v2855
    %3302 = vmatprep.subr.bf16.mxu0 %v2864
    %3303 = vmatpush1.bf16.msra.mxu0 %v2863
    %3304 = vmatprep.subr.bf16.mxu0 %v2872
    %3305 = vmatpush1.bf16.msra.mxu0 %v2871
    %3306 = vmatprep.subr.bf16.mxu0 %v2880
    %3307 = vmatpush1.bf16.msra.mxu0 %v2879
    %3308 = vmatprep.subr.bf16.mxu0 %v2888
    %3309 = vmatpush1.bf16.msra.mxu0 %v2887
    %3310 = vmatprep.subr.bf16.mxu0 %v2896
    %3311 = vmatpush1.bf16.msra.mxu0 %v2895
    %3312 = vmatprep.mubr.bf16.mxu0 %v1620
    %3313 = vmatmul.mubr.bf16.gmra.mrb[0].mxu0 %v1619
    %v3314 = vpop.f32.mrb[0].mxu0
    %v3315 = vadd.f32 %v3274, %v3314
    %v3316 = vpop.f32.mrb[0].mxu0
    %v3317 = vadd.f32 %v3276, %v3316
    %v3318 = vpop.f32.mrb[0].mxu0
    %v3319 = vpop.f32.mrb[0].mxu0
    %3320 = vdwg.mxu0
    %3321 = vmatprep.subr.bf16.mxu0 %v2650
    %3322 = vmatpush1.bf16.msra.mxu0 %v2649
    %3323 = vmatprep.subr.bf16.mxu0 %v2658
    %3324 = vmatpush1.bf16.msra.mxu0 %v2657
    %3325 = vmatprep.subr.bf16.mxu0 %v2666
    %3326 = vmatpush1.bf16.msra.mxu0 %v2665
    %3327 = vmatprep.subr.bf16.mxu0 %v2674
    %3328 = vmatpush1.bf16.msra.mxu0 %v2673
    %3329 = vmatprep.subr.bf16.mxu0 %v2682
    %3330 = vmatpush1.bf16.msra.mxu0 %v2681
    %3331 = vmatprep.subr.bf16.mxu0 %v2690
    %3332 = vmatpush1.bf16.msra.mxu0 %v2689
    %3333 = vmatprep.subr.bf16.mxu0 %v2698
    %3334 = vmatpush1.bf16.msra.mxu0 %v2697
    %3335 = vmatprep.subr.bf16.mxu0 %v2706
    %3336 = vmatpush1.bf16.msra.mxu0 %v2705
    %3337 = vmatprep.subr.bf16.mxu0 %v2714
    %3338 = vmatpush1.bf16.msra.mxu0 %v2713
    %3339 = vmatprep.subr.bf16.mxu0 %v2722
    %3340 = vmatpush1.bf16.msra.mxu0 %v2721
    %3341 = vmatprep.subr.bf16.mxu0 %v2730
    %3342 = vmatpush1.bf16.msra.mxu0 %v2729
    %3343 = vmatprep.subr.bf16.mxu0 %v2738
    %3344 = vmatpush1.bf16.msra.mxu0 %v2737
    %3345 = vmatprep.subr.bf16.mxu0 %v2746
    %3346 = vmatpush1.bf16.msra.mxu0 %v2745
    %3347 = vmatprep.subr.bf16.mxu0 %v2754
    %3348 = vmatpush1.bf16.msra.mxu0 %v2753
    %3349 = vmatprep.subr.bf16.mxu0 %v2762
    %3350 = vmatpush1.bf16.msra.mxu0 %v2761
    %3351 = vmatprep.subr.bf16.mxu0 %v2770
    %3352 = vmatpush1.bf16.msra.mxu0 %v2769
    %3353 = vmatprep.mubr.bf16.mxu0 %v1618
    %3354 = vmatmul.mubr.bf16.gmra.mrb[0].mxu0 %v1617
    %v3355 = vpop.f32.mrb[0].mxu0
    %v3356 = vadd.f32 0.0, %v3355
    %v3357 = vpop.f32.mrb[0].mxu0
    %v3358 = vadd.f32 0.0, %v3357
    %v3359 = vpop.f32.mrb[0].mxu0
    %v3360 = vpop.f32.mrb[0].mxu0
    %3361 = vdwg.mxu0
    %3362 = vmatprep.subr.bf16.mxu0 %v2778
    %3363 = vmatpush1.bf16.msra.mxu0 %v2777
    %3364 = vmatprep.subr.bf16.mxu0 %v2786
    %3365 = vmatpush1.bf16.msra.mxu0 %v2785
    %3366 = vmatprep.subr.bf16.mxu0 %v2794
    %3367 = vmatpush1.bf16.msra.mxu0 %v2793
    %3368 = vmatprep.subr.bf16.mxu0 %v2802
    %3369 = vmatpush1.bf16.msra.mxu0 %v2801
    %3370 = vmatprep.subr.bf16.mxu0 %v2810
    %3371 = vmatpush1.bf16.msra.mxu0 %v2809
    %3372 = vmatprep.subr.bf16.mxu0 %v2818
    %3373 = vmatpush1.bf16.msra.mxu0 %v2817
    %3374 = vmatprep.subr.bf16.mxu0 %v2826
    %3375 = vmatpush1.bf16.msra.mxu0 %v2825
    %3376 = vmatprep.subr.bf16.mxu0 %v2834
    %3377 = vmatpush1.bf16.msra.mxu0 %v2833
    %3378 = vmatprep.subr.bf16.mxu0 %v2842
    %3379 = vmatpush1.bf16.msra.mxu0 %v2841
    %3380 = vmatprep.subr.bf16.mxu0 %v2850
    %3381 = vmatpush1.bf16.msra.mxu0 %v2849
    %3382 = vmatprep.subr.bf16.mxu0 %v2858
    %3383 = vmatpush1.bf16.msra.mxu0 %v2857
    %3384 = vmatprep.subr.bf16.mxu0 %v2866
    %3385 = vmatpush1.bf16.msra.mxu0 %v2865
    %3386 = vmatprep.subr.bf16.mxu0 %v2874
    %3387 = vmatpush1.bf16.msra.mxu0 %v2873
    %3388 = vmatprep.subr.bf16.mxu0 %v2882
    %3389 = vmatpush1.bf16.msra.mxu0 %v2881
    %3390 = vmatprep.subr.bf16.mxu0 %v2890
    %3391 = vmatpush1.bf16.msra.mxu0 %v2889
    %3392 = vmatprep.subr.bf16.mxu0 %v2898
    %3393 = vmatpush1.bf16.msra.mxu0 %v2897
    %3394 = vmatprep.mubr.bf16.mxu0 %v1620
    %3395 = vmatmul.mubr.bf16.gmra.mrb[0].mxu0 %v1619
    %v3396 = vpop.f32.mrb[0].mxu0
    %v3397 = vadd.f32 %v3356, %v3396
    %v3398 = vpop.f32.mrb[0].mxu0
    %v3399 = vadd.f32 %v3358, %v3398
    %v3400 = vpop.f32.mrb[0].mxu0
    %v3401 = vpop.f32.mrb[0].mxu0
    %3402 = vdwg.mxu0
    %3403 = vmatprep.subr.bf16.mxu0 %v2652
    %3404 = vmatpush1.bf16.msra.mxu0 %v2651
    %3405 = vmatprep.subr.bf16.mxu0 %v2660
    %3406 = vmatpush1.bf16.msra.mxu0 %v2659
    %3407 = vmatprep.subr.bf16.mxu0 %v2668
    %3408 = vmatpush1.bf16.msra.mxu0 %v2667
    %3409 = vmatprep.subr.bf16.mxu0 %v2676
    %3410 = vmatpush1.bf16.msra.mxu0 %v2675
    %3411 = vmatprep.subr.bf16.mxu0 %v2684
    %3412 = vmatpush1.bf16.msra.mxu0 %v2683
    %3413 = vmatprep.subr.bf16.mxu0 %v2692
    %3414 = vmatpush1.bf16.msra.mxu0 %v2691
    %3415 = vmatprep.subr.bf16.mxu0 %v2700
    %3416 = vmatpush1.bf16.msra.mxu0 %v2699
    %3417 = vmatprep.subr.bf16.mxu0 %v2708
    %3418 = vmatpush1.bf16.msra.mxu0 %v2707
    %3419 = vmatprep.subr.bf16.mxu0 %v2716
    %3420 = vmatpush1.bf16.msra.mxu0 %v2715
    %3421 = vmatprep.subr.bf16.mxu0 %v2724
    %3422 = vmatpush1.bf16.msra.mxu0 %v2723
    %3423 = vmatprep.subr.bf16.mxu0 %v2732
    %3424 = vmatpush1.bf16.msra.mxu0 %v2731
    %3425 = vmatprep.subr.bf16.mxu0 %v2740
    %3426 = vmatpush1.bf16.msra.mxu0 %v2739
    %3427 = vmatprep.subr.bf16.mxu0 %v2748
    %3428 = vmatpush1.bf16.msra.mxu0 %v2747
    %3429 = vmatprep.subr.bf16.mxu0 %v2756
    %3430 = vmatpush1.bf16.msra.mxu0 %v2755
    %3431 = vmatprep.subr.bf16.mxu0 %v2764
    %3432 = vmatpush1.bf16.msra.mxu0 %v2763
    %3433 = vmatprep.subr.bf16.mxu0 %v2772
    %3434 = vmatpush1.bf16.msra.mxu0 %v2771
    %3435 = vmatprep.mubr.bf16.mxu0 %v1618
    %3436 = vmatmul.mubr.bf16.gmra.mrb[0].mxu0 %v1617
    %v3437 = vpop.f32.mrb[0].mxu0
    %v3438 = vadd.f32 0.0, %v3437
    %v3439 = vpop.f32.mrb[0].mxu0
    %v3440 = vadd.f32 0.0, %v3439
    %v3441 = vpop.f32.mrb[0].mxu0
    %v3442 = vpop.f32.mrb[0].mxu0
    %3443 = vdwg.mxu0
    %3444 = vmatprep.subr.bf16.mxu0 %v2780
    %3445 = vmatpush1.bf16.msra.mxu0 %v2779
    %3446 = vmatprep.subr.bf16.mxu0 %v2788
    %3447 = vmatpush1.bf16.msra.mxu0 %v2787
    %3448 = vmatprep.subr.bf16.mxu0 %v2796
    %3449 = vmatpush1.bf16.msra.mxu0 %v2795
    %3450 = vmatprep.subr.bf16.mxu0 %v2804
    %3451 = vmatpush1.bf16.msra.mxu0 %v2803
    %3452 = vmatprep.subr.bf16.mxu0 %v2812
    %3453 = vmatpush1.bf16.msra.mxu0 %v2811
    %3454 = vmatprep.subr.bf16.mxu0 %v2820
    %3455 = vmatpush1.bf16.msra.mxu0 %v2819
    %3456 = vmatprep.subr.bf16.mxu0 %v2828
    %3457 = vmatpush1.bf16.msra.mxu0 %v2827
    %3458 = vmatprep.subr.bf16.mxu0 %v2836
    %3459 = vmatpush1.bf16.msra.mxu0 %v2835
    %3460 = vmatprep.subr.bf16.mxu0 %v2844
    %3461 = vmatpush1.bf16.msra.mxu0 %v2843
    %3462 = vmatprep.subr.bf16.mxu0 %v2852
    %3463 = vmatpush1.bf16.msra.mxu0 %v2851
    %3464 = vmatprep.subr.bf16.mxu0 %v2860
    %3465 = vmatpush1.bf16.msra.mxu0 %v2859
    %3466 = vmatprep.subr.bf16.mxu0 %v2868
    %3467 = vmatpush1.bf16.msra.mxu0 %v2867
    %3468 = vmatprep.subr.bf16.mxu0 %v2876
    %3469 = vmatpush1.bf16.msra.mxu0 %v2875
    %3470 = vmatprep.subr.bf16.mxu0 %v2884
    %3471 = vmatpush1.bf16.msra.mxu0 %v2883
    %3472 = vmatprep.subr.bf16.mxu0 %v2892
    %3473 = vmatpush1.bf16.msra.mxu0 %v2891
    %3474 = vmatprep.subr.bf16.mxu0 %v2900
    %3475 = vmatpush1.bf16.msra.mxu0 %v2899
    %3476 = vmatprep.mubr.bf16.mxu0 %v1620
    %3477 = vmatmul.mubr.bf16.gmra.mrb[0].mxu0 %v1619
    %v3478 = vpop.f32.mrb[0].mxu0
    %v3479 = vadd.f32 %v3438, %v3478
    %v3480 = vpop.f32.mrb[0].mxu0
    %v3481 = vadd.f32 %v3440, %v3480
    %v3482 = vpop.f32.mrb[0].mxu0
    %v3483 = vpop.f32.mrb[0].mxu0
    %3484 = vdwg.mxu0
    %v3485 = vld [vmem:[%s7 + $0x14] sm:$0xff]
    %v3486 = vld [vmem:[%s7 + $0x1c] sm:$0xff]
    %v3487 = vrot.slane %v3233, 4
    %v3488 = vadd.f32 %v3233, %v3487
    %v3489 = vrot.slane %v3488, 2
    %v3490 = vadd.f32 %v3488, %v3489
    %v3491 = vrot.slane %v3490, 1
    %v3492 = vadd.f32 %v3490, %v3491
    %v3493 = vrot.slane %v3235, 4
    %v3494 = vadd.f32 %v3235, %v3493
    %v3495 = vrot.slane %v3494, 2
    %v3496 = vadd.f32 %v3494, %v3495
    %v3497 = vrot.slane %v3496, 1
    %v3498 = vadd.f32 %v3496, %v3497
    %v3499 = vrot.slane %v3315, 4
    %v3500 = vadd.f32 %v3315, %v3499
    %v3501 = vrot.slane %v3500, 2
    %v3502 = vadd.f32 %v3500, %v3501
    %v3503 = vrot.slane %v3502, 1
    %v3504 = vadd.f32 %v3502, %v3503
    %v3505 = vrot.slane %v3317, 4
    %v3506 = vadd.f32 %v3317, %v3505
    %v3507 = vrot.slane %v3506, 2
    %v3508 = vadd.f32 %v3506, %v3507
    %v3509 = vrot.slane %v3508, 1
    %v3510 = vadd.f32 %v3508, %v3509
    %v3511 = vrot.slane %v3397, 4
    %v3512 = vadd.f32 %v3397, %v3511
    %v3513 = vrot.slane %v3512, 2
    %v3514 = vadd.f32 %v3512, %v3513
    %v3515 = vrot.slane %v3514, 1
    %v3516 = vadd.f32 %v3514, %v3515
    %v3517 = vrot.slane %v3399, 4
    %v3518 = vadd.f32 %v3399, %v3517
    %v3519 = vrot.slane %v3518, 2
    %v3520 = vadd.f32 %v3518, %v3519
    %v3521 = vrot.slane %v3520, 1
    %v3522 = vadd.f32 %v3520, %v3521
    %v3523 = vrot.slane %v3479, 4
    %v3524 = vadd.f32 %v3479, %v3523
    %v3525 = vrot.slane %v3524, 2
    %v3526 = vadd.f32 %v3524, %v3525
    %v3527 = vrot.slane %v3526, 1
    %v3528 = vadd.f32 %v3526, %v3527
    %v3529 = vrot.slane %v3481, 4
    %v3530 = vadd.f32 %v3481, %v3529
    %v3531 = vrot.slane %v3530, 2
    %v3532 = vadd.f32 %v3530, %v3531
    %v3533 = vrot.slane %v3532, 1
    %v3534 = vadd.f32 %v3532, %v3533
    %v3535 = vmul.f32 %v3492, 0.125
    %v3536 = vmul.f32 %v3498, 0.125
    %v3537 = vmul.f32 %v3504, 0.125
    %v3538 = vmul.f32 %v3510, 0.125
    %v3539 = vmul.f32 %v3516, 0.125
    %v3540 = vmul.f32 %v3522, 0.125
    %v3541 = vmul.f32 %v3528, 0.125
    %v3542 = vmul.f32 %v3534, 0.125
    %v3543 = vsub.f32 %v3233, %v3535
    %v3544 = vsub.f32 %v3235, %v3536
    %v3545 = vsub.f32 %v3315, %v3537
    %v3546 = vsub.f32 %v3317, %v3538
    %v3547 = vsub.f32 %v3397, %v3539
    %v3548 = vsub.f32 %v3399, %v3540
    %v3549 = vsub.f32 %v3479, %v3541
    %v3550 = vsub.f32 %v3481, %v3542
    %v3551 = vmul.f32 %v3543, %v3543
    %v3552 = vmul.f32 %v3544, %v3544
    %v3553 = vmul.f32 %v3545, %v3545
    %v3554 = vmul.f32 %v3546, %v3546
    %v3555 = vmul.f32 %v3547, %v3547
    %v3556 = vmul.f32 %v3548, %v3548
    %v3557 = vmul.f32 %v3549, %v3549
    %v3558 = vmul.f32 %v3550, %v3550
    %v3559 = vrot.slane %v3551, 4
    %v3560 = vadd.f32 %v3551, %v3559
    %v3561 = vrot.slane %v3560, 2
    %v3562 = vadd.f32 %v3560, %v3561
    %v3563 = vrot.slane %v3562, 1
    %v3564 = vadd.f32 %v3562, %v3563
    %v3565 = vrot.slane %v3552, 4
    %v3566 = vadd.f32 %v3552, %v3565
    %v3567 = vrot.slane %v3566, 2
    %v3568 = vadd.f32 %v3566, %v3567
    %v3569 = vrot.slane %v3568, 1
    %v3570 = vadd.f32 %v3568, %v3569
    %v3571 = vrot.slane %v3553, 4
    %v3572 = vadd.f32 %v3553, %v3571
    %v3573 = vrot.slane %v3572, 2
    %v3574 = vadd.f32 %v3572, %v3573
    %v3575 = vrot.slane %v3574, 1
    %v3576 = vadd.f32 %v3574, %v3575
    %v3577 = vrot.slane %v3554, 4
    %v3578 = vadd.f32 %v3554, %v3577
    %v3579 = vrot.slane %v3578, 2
    %v3580 = vadd.f32 %v3578, %v3579
    %v3581 = vrot.slane %v3580, 1
    %v3582 = vadd.f32 %v3580, %v3581
    %v3583 = vrot.slane %v3555, 4
    %v3584 = vadd.f32 %v3555, %v3583
    %v3585 = vrot.slane %v3584, 2
    %v3586 = vadd.f32 %v3584, %v3585
    %v3587 = vrot.slane %v3586, 1
    %v3588 = vadd.f32 %v3586, %v3587
    %v3589 = vrot.slane %v3556, 4
    %v3590 = vadd.f32 %v3556, %v3589
    %v3591 = vrot.slane %v3590, 2
    %v3592 = vadd.f32 %v3590, %v3591
    %v3593 = vrot.slane %v3592, 1
    %v3594 = vadd.f32 %v3592, %v3593
    %v3595 = vrot.slane %v3557, 4
    %v3596 = vadd.f32 %v3557, %v3595
    %v3597 = vrot.slane %v3596, 2
    %v3598 = vadd.f32 %v3596, %v3597
    %v3599 = vrot.slane %v3598, 1
    %v3600 = vadd.f32 %v3598, %v3599
    %v3601 = vrot.slane %v3558, 4
    %v3602 = vadd.f32 %v3558, %v3601
    %v3603 = vrot.slane %v3602, 2
    %v3604 = vadd.f32 %v3602, %v3603
    %v3605 = vrot.slane %v3604, 1
    %v3606 = vadd.f32 %v3604, %v3605
    %v3607 = vmul.f32 %v3564, 0.125
    %v3608 = vmul.f32 %v3570, 0.125
    %v3609 = vmul.f32 %v3576, 0.125
    %v3610 = vmul.f32 %v3582, 0.125
    %v3611 = vmul.f32 %v3588, 0.125
    %v3612 = vmul.f32 %v3594, 0.125
    %v3613 = vmul.f32 %v3600, 0.125
    %v3614 = vmul.f32 %v3606, 0.125
    %v3615 = vadd.f32 %v3607, 1e-05
    %v3616 = vadd.f32 %v3608, 1e-05
    %v3617 = vadd.f32 %v3609, 1e-05
    %v3618 = vadd.f32 %v3610, 1e-05
    %v3619 = vadd.f32 %v3611, 1e-05
    %v3620 = vadd.f32 %v3612, 1e-05
    %v3621 = vadd.f32 %v3613, 1e-05
    %v3622 = vadd.f32 %v3614, 1e-05
    %v3623 = vrsqrt.pop %v3615
    %v3624 = vrsqrt.pop %v3616
    %v3625 = vrsqrt.pop %v3617
    %v3626 = vrsqrt.pop %v3618
    %v3627 = vrsqrt.pop %v3619
    %v3628 = vrsqrt.pop %v3620
    %v3629 = vrsqrt.pop %v3621
    %v3630 = vrsqrt.pop %v3622
    %v3639 = vcombine.low %v3623, %v3624
    %v3640 = vcombine.low %v3625, %v3626
    %v3641 = vcombine.low %v3627, %v3628
    %v3642 = vcombine.low %v3629, %v3630
    %v3644 = vunpack.c.l.s4 1966171168
    %v3645 = vunpack.c.0.s8 %v3644
    %v3646 = vlaneseq
    %v3647 = vshrl.u32 %v3646, 7
    %v3648 = vsub.s32 %v3645, %v3647
    %v3649 = vrot.slane %v3639, %v3648
    %v3651 = vunpack.c.l.s4 1966171168
    %v3652 = vunpack.c.0.s8 %v3651
    %v3653 = vlaneseq
    %v3654 = vshrl.u32 %v3653, 7
    %v3655 = vsub.s32 %v3652, %v3654
    %v3656 = vrot.slane %v3640, %v3655
    %v3658 = vunpack.c.l.s4 1966171168
    %v3659 = vunpack.c.0.s8 %v3658
    %v3660 = vlaneseq
    %v3661 = vshrl.u32 %v3660, 7
    %v3662 = vsub.s32 %v3659, %v3661
    %v3663 = vrot.slane %v3641, %v3662
    %v3665 = vunpack.c.l.s4 1966171168
    %v3666 = vunpack.c.0.s8 %v3665
    %v3667 = vlaneseq
    %v3668 = vshrl.u32 %v3667, 7
    %v3669 = vsub.s32 %v3666, %v3668
    %v3670 = vrot.slane %v3642, %v3669
    %v3671 = vcombine.low %v3649, %v3656
    %v3672 = vcombine.low %v3663, %v3670
    %v3674 = vunpack.c.l.s4 1966171168
    %v3675 = vunpack.c.0.s8 %v3674
    %v3676 = vlaneseq
    %v3677 = vshrl.u32 %v3676, 7
    %v3678 = vsub.s32 %v3675, %v3677
    %v3679 = vrot.slane %v3671, %v3678
    %v3681 = vunpack.c.l.s4 1966171168
    %v3682 = vunpack.c.0.s8 %v3681
    %v3683 = vlaneseq
    %v3684 = vshrl.u32 %v3683, 7
    %v3685 = vsub.s32 %v3682, %v3684
    %v3686 = vrot.slane %v3672, %v3685
    %v3687 = vcombine.low %v3679, %v3686
    %v3689 = vmul.f32 %v3485, %v3687
    %v3691 = vlaneseq
    %v3692 = vshrl.u32 %v3691, 7
    %v3693 = vsub.s32 0, %v3692
    %v3694 = vrot.slane %v3689, %v3693
    %v3695 = vlaneseq
    %v3696 = vshrl.u32 %v3695, 7
    %v3697 = vsub.s32 1, %v3696
    %v3698 = vrot.slane %v3689, %v3697
    %v3699 = vlaneseq
    %v3700 = vshrl.u32 %v3699, 7
    %v3701 = vsub.s32 2, %v3700
    %v3702 = vrot.slane %v3689, %v3701
    %v3703 = vlaneseq
    %v3704 = vshrl.u32 %v3703, 7
    %v3705 = vsub.s32 3, %v3704
    %v3706 = vrot.slane %v3689, %v3705
    %v3707 = vlaneseq
    %v3708 = vshrl.u32 %v3707, 7
    %v3709 = vsub.s32 4, %v3708
    %v3710 = vrot.slane %v3689, %v3709
    %v3711 = vlaneseq
    %v3712 = vshrl.u32 %v3711, 7
    %v3713 = vsub.s32 5, %v3712
    %v3714 = vrot.slane %v3689, %v3713
    %v3715 = vlaneseq
    %v3716 = vshrl.u32 %v3715, 7
    %v3717 = vsub.s32 6, %v3716
    %v3718 = vrot.slane %v3689, %v3717
    %v3719 = vlaneseq
    %v3720 = vshrl.u32 %v3719, 7
    %v3721 = vsub.s32 7, %v3720
    %v3722 = vrot.slane %v3689, %v3721
    %v3731 = vmul.f32 %v3535, %v3694
    %v3732 = vmul.f32 %v3536, %v3698
    %v3733 = vmul.f32 %v3537, %v3702
    %v3734 = vmul.f32 %v3538, %v3706
    %v3735 = vmul.f32 %v3539, %v3710
    %v3736 = vmul.f32 %v3540, %v3714
    %v3737 = vmul.f32 %v3541, %v3718
    %v3738 = vmul.f32 %v3542, %v3722
    %v3747 = vcombine.low %v3731, %v3732
    %v3748 = vcombine.low %v3733, %v3734
    %v3749 = vcombine.low %v3735, %v3736
    %v3750 = vcombine.low %v3737, %v3738
    %v3752 = vunpack.c.l.s4 1966171168
    %v3753 = vunpack.c.0.s8 %v3752
    %v3754 = vlaneseq
    %v3755 = vshrl.u32 %v3754, 7
    %v3756 = vsub.s32 %v3753, %v3755
    %v3757 = vrot.slane %v3747, %v3756
    %v3759 = vunpack.c.l.s4 1966171168
    %v3760 = vunpack.c.0.s8 %v3759
    %v3761 = vlaneseq
    %v3762 = vshrl.u32 %v3761, 7
    %v3763 = vsub.s32 %v3760, %v3762
    %v3764 = vrot.slane %v3748, %v3763
    %v3766 = vunpack.c.l.s4 1966171168
    %v3767 = vunpack.c.0.s8 %v3766
    %v3768 = vlaneseq
    %v3769 = vshrl.u32 %v3768, 7
    %v3770 = vsub.s32 %v3767, %v3769
    %v3771 = vrot.slane %v3749, %v3770
    %v3773 = vunpack.c.l.s4 1966171168
    %v3774 = vunpack.c.0.s8 %v3773
    %v3775 = vlaneseq
    %v3776 = vshrl.u32 %v3775, 7
    %v3777 = vsub.s32 %v3774, %v3776
    %v3778 = vrot.slane %v3750, %v3777
    %v3779 = vcombine.low %v3757, %v3764
    %v3780 = vcombine.low %v3771, %v3778
    %v3782 = vunpack.c.l.s4 1966171168
    %v3783 = vunpack.c.0.s8 %v3782
    %v3784 = vlaneseq
    %v3785 = vshrl.u32 %v3784, 7
    %v3786 = vsub.s32 %v3783, %v3785
    %v3787 = vrot.slane %v3779, %v3786
    %v3789 = vunpack.c.l.s4 1966171168
    %v3790 = vunpack.c.0.s8 %v3789
    %v3791 = vlaneseq
    %v3792 = vshrl.u32 %v3791, 7
    %v3793 = vsub.s32 %v3790, %v3792
    %v3794 = vrot.slane %v3780, %v3793
    %v3795 = vcombine.low %v3787, %v3794
    %v3797 = vsub.f32 %v3486, %v3795
    %v3798 = vmul.f32 %v3233, %v3694
    %v3799 = vmul.f32 %v3235, %v3698
    %v3800 = vmul.f32 %v3315, %v3702
    %v3801 = vmul.f32 %v3317, %v3706
    %v3802 = vmul.f32 %v3397, %v3710
    %v3803 = vmul.f32 %v3399, %v3714
    %v3804 = vmul.f32 %v3479, %v3718
    %v3805 = vmul.f32 %v3481, %v3722
    %v3807 = vlaneseq
    %v3808 = vshrl.u32 %v3807, 7
    %v3809 = vsub.s32 0, %v3808
    %v3810 = vrot.slane %v3797, %v3809
    %v3811 = vlaneseq
    %v3812 = vshrl.u32 %v3811, 7
    %v3813 = vsub.s32 1, %v3812
    %v3814 = vrot.slane %v3797, %v3813
    %v3815 = vlaneseq
    %v3816 = vshrl.u32 %v3815, 7
    %v3817 = vsub.s32 2, %v3816
    %v3818 = vrot.slane %v3797, %v3817
    %v3819 = vlaneseq
    %v3820 = vshrl.u32 %v3819, 7
    %v3821 = vsub.s32 3, %v3820
    %v3822 = vrot.slane %v3797, %v3821
    %v3823 = vlaneseq
    %v3824 = vshrl.u32 %v3823, 7
    %v3825 = vsub.s32 4, %v3824
    %v3826 = vrot.slane %v3797, %v3825
    %v3827 = vlaneseq
    %v3828 = vshrl.u32 %v3827, 7
    %v3829 = vsub.s32 5, %v3828
    %v3830 = vrot.slane %v3797, %v3829
    %v3831 = vlaneseq
    %v3832 = vshrl.u32 %v3831, 7
    %v3833 = vsub.s32 6, %v3832
    %v3834 = vrot.slane %v3797, %v3833
    %v3835 = vlaneseq
    %v3836 = vshrl.u32 %v3835, 7
    %v3837 = vsub.s32 7, %v3836
    %v3838 = vrot.slane %v3797, %v3837
    %v3847 = vadd.f32 %v3798, %v3810
    %v3848 = vadd.f32 %v3799, %v3814
    %v3849 = vadd.f32 %v3800, %v3818
    %v3850 = vadd.f32 %v3801, %v3822
    %v3851 = vadd.f32 %v3802, %v3826
    %v3852 = vadd.f32 %v3803, %v3830
    %v3853 = vadd.f32 %v3804, %v3834
    %v3854 = vadd.f32 %v3805, %v3838
    %v3855 = vmax.f32 %v3847, 0.0
    %v3856 = vmax.f32 %v3848, 0.0
    %v3857 = vmax.f32 %v3849, 0.0
    %v3858 = vmax.f32 %v3850, 0.0
    %v3859 = vmax.f32 %v3851, 0.0
    %v3860 = vmax.f32 %v3852, 0.0
    %v3861 = vmax.f32 %v3853, 0.0
    %v3862 = vmax.f32 %v3854, 0.0
    %v3863 = vpack.c.bf16 %v3855, %v3855
    %v3864 = vpack.c.bf16 %v3856, %v3856
    %v3865 = vpack.c.bf16 %v3857, %v3857
    %v3866 = vpack.c.bf16 %v3858, %v3858
    %v3867 = vpack.c.bf16 %v3859, %v3859
    %v3868 = vpack.c.bf16 %v3860, %v3860
    %v3869 = vpack.c.bf16 %v3861, %v3861
    %v3870 = vpack.c.bf16 %v3862, %v3862
    %v3871 = vld [vmem:[#allocation9] sm:$0xf]
    %v3872 = vld [vmem:[#allocation9 + $0x4] sm:$0xf]
    %v3873 = vld [vmem:[#allocation9 + $0x8] sm:$0xf]
    %v3874 = vld [vmem:[#allocation9 + $0xc] sm:$0xf]
    %v3875 = vld [vmem:[#allocation9 + $0x10] sm:$0xf]
    %v3876 = vld [vmem:[#allocation9 + $0x14] sm:$0xf]
    %v3877 = vld [vmem:[#allocation9 + $0x18] sm:$0xf]
    %v3878 = vld [vmem:[#allocation9 + $0x1c] sm:$0xf]
    %v3879 = vld [vmem:[#allocation9 + $0x20] sm:$0xf]
    %v3880 = vld [vmem:[#allocation9 + $0x24] sm:$0xf]
    %v3881 = vld [vmem:[#allocation9 + $0x28] sm:$0xf]
    %v3882 = vld [vmem:[#allocation9 + $0x2c] sm:$0xf]
    %v3883 = vld [vmem:[#allocation9 + $0x30] sm:$0xf]
    %v3884 = vld [vmem:[#allocation9 + $0x34] sm:$0xf]
    %v3885 = vld [vmem:[#allocation9 + $0x38] sm:$0xf]
    %v3886 = vld [vmem:[#allocation9 + $0x3c] sm:$0xf]
    %v3887 = vld [vmem:[#allocation9 + $0x40] sm:$0xf]
    %v3888 = vld [vmem:[#allocation9 + $0x44] sm:$0xf]
    %v3889 = vld [vmem:[#allocation9 + $0x48] sm:$0xf]
    %v3890 = vld [vmem:[#allocation9 + $0x4c] sm:$0xf]
    %v3891 = vld [vmem:[#allocation9 + $0x50] sm:$0xf]
    %v3892 = vld [vmem:[#allocation9 + $0x54] sm:$0xf]
    %v3893 = vld [vmem:[#allocation9 + $0x58] sm:$0xf]
    %v3894 = vld [vmem:[#allocation9 + $0x5c] sm:$0xf]
    %v3895 = vld [vmem:[#allocation9 + $0x60] sm:$0xf]
    %v3896 = vld [vmem:[#allocation9 + $0x64] sm:$0xf]
    %v3897 = vld [vmem:[#allocation9 + $0x68] sm:$0xf]
    %v3898 = vld [vmem:[#allocation9 + $0x6c] sm:$0xf]
    %v3899 = vld [vmem:[#allocation9 + $0x70] sm:$0xf]
    %v3900 = vld [vmem:[#allocation9 + $0x74] sm:$0xf]
    %v3901 = vld [vmem:[#allocation9 + $0x78] sm:$0xf]
    %v3902 = vld [vmem:[#allocation9 + $0x7c] sm:$0xf]
    %v3903 = vld [vmem:[#allocation9 + $0x80] sm:$0xf]
    %v3904 = vld [vmem:[#allocation9 + $0x84] sm:$0xf]
    %v3905 = vld [vmem:[#allocation9 + $0x88] sm:$0xf]
    %v3906 = vld [vmem:[#allocation9 + $0x8c] sm:$0xf]
    %v3907 = vld [vmem:[#allocation9 + $0x90] sm:$0xf]
    %v3908 = vld [vmem:[#allocation9 + $0x94] sm:$0xf]
    %v3909 = vld [vmem:[#allocation9 + $0x98] sm:$0xf]
    %v3910 = vld [vmem:[#allocation9 + $0x9c] sm:$0xf]
    %v3911 = vld [vmem:[#allocation9 + $0xa0] sm:$0xf]
    %v3912 = vld [vmem:[#allocation9 + $0xa4] sm:$0xf]
    %v3913 = vld [vmem:[#allocation9 + $0xa8] sm:$0xf]
    %v3914 = vld [vmem:[#allocation9 + $0xac] sm:$0xf]
    %v3915 = vld [vmem:[#allocation9 + $0xb0] sm:$0xf]
    %v3916 = vld [vmem:[#allocation9 + $0xb4] sm:$0xf]
    %v3917 = vld [vmem:[#allocation9 + $0xb8] sm:$0xf]
    %v3918 = vld [vmem:[#allocation9 + $0xbc] sm:$0xf]
    %v3919 = vld [vmem:[#allocation9 + $0xc0] sm:$0xf]
    %v3920 = vld [vmem:[#allocation9 + $0xc4] sm:$0xf]
    %v3921 = vld [vmem:[#allocation9 + $0xc8] sm:$0xf]
    %v3922 = vld [vmem:[#allocation9 + $0xcc] sm:$0xf]
    %v3923 = vld [vmem:[#allocation9 + $0xd0] sm:$0xf]
    %v3924 = vld [vmem:[#allocation9 + $0xd4] sm:$0xf]
    %v3925 = vld [vmem:[#allocation9 + $0xd8] sm:$0xf]
    %v3926 = vld [vmem:[#allocation9 + $0xdc] sm:$0xf]
    %v3927 = vld [vmem:[#allocation9 + $0xe0] sm:$0xf]
    %v3928 = vld [vmem:[#allocation9 + $0xe4] sm:$0xf]
    %v3929 = vld [vmem:[#allocation9 + $0xe8] sm:$0xf]
    %v3930 = vld [vmem:[#allocation9 + $0xec] sm:$0xf]
    %v3931 = vld [vmem:[#allocation9 + $0xf0] sm:$0xf]
    %v3932 = vld [vmem:[#allocation9 + $0xf4] sm:$0xf]
    %v3933 = vld [vmem:[#allocation9 + $0xf8] sm:$0xf]
    %v3934 = vld [vmem:[#allocation9 + $0xfc] sm:$0xf]
    %v3935 = vld [vmem:[#allocation9 + $0x100] sm:$0xf]
    %v3936 = vld [vmem:[#allocation9 + $0x104] sm:$0xf]
    %v3937 = vld [vmem:[#allocation9 + $0x108] sm:$0xf]
    %v3938 = vld [vmem:[#allocation9 + $0x10c] sm:$0xf]
    %v3939 = vld [vmem:[#allocation9 + $0x110] sm:$0xf]
    %v3940 = vld [vmem:[#allocation9 + $0x114] sm:$0xf]
    %v3941 = vld [vmem:[#allocation9 + $0x118] sm:$0xf]
    %v3942 = vld [vmem:[#allocation9 + $0x11c] sm:$0xf]
    %v3943 = vld [vmem:[#allocation9 + $0x120] sm:$0xf]
    %v3944 = vld [vmem:[#allocation9 + $0x124] sm:$0xf]
    %v3945 = vld [vmem:[#allocation9 + $0x128] sm:$0xf]
    %v3946 = vld [vmem:[#allocation9 + $0x12c] sm:$0xf]
    %v3947 = vld [vmem:[#allocation9 + $0x130] sm:$0xf]
    %v3948 = vld [vmem:[#allocation9 + $0x134] sm:$0xf]
    %v3949 = vld [vmem:[#allocation9 + $0x138] sm:$0xf]
    %v3950 = vld [vmem:[#allocation9 + $0x13c] sm:$0xf]
    %v3951 = vld [vmem:[#allocation9 + $0x140] sm:$0xf]
    %v3952 = vld [vmem:[#allocation9 + $0x144] sm:$0xf]
    %v3953 = vld [vmem:[#allocation9 + $0x148] sm:$0xf]
    %v3954 = vld [vmem:[#allocation9 + $0x14c] sm:$0xf]
    %v3955 = vld [vmem:[#allocation9 + $0x150] sm:$0xf]
    %v3956 = vld [vmem:[#allocation9 + $0x154] sm:$0xf]
    %v3957 = vld [vmem:[#allocation9 + $0x158] sm:$0xf]
    %v3958 = vld [vmem:[#allocation9 + $0x15c] sm:$0xf]
    %v3959 = vld [vmem:[#allocation9 + $0x160] sm:$0xf]
    %v3960 = vld [vmem:[#allocation9 + $0x164] sm:$0xf]
    %v3961 = vld [vmem:[#allocation9 + $0x168] sm:$0xf]
    %v3962 = vld [vmem:[#allocation9 + $0x16c] sm:$0xf]
    %v3963 = vld [vmem:[#allocation9 + $0x170] sm:$0xf]
    %v3964 = vld [vmem:[#allocation9 + $0x174] sm:$0xf]
    %v3965 = vld [vmem:[#allocation9 + $0x178] sm:$0xf]
    %v3966 = vld [vmem:[#allocation9 + $0x17c] sm:$0xf]
    %v3967 = vld [vmem:[#allocation9 + $0x180] sm:$0xf]
    %v3968 = vld [vmem:[#allocation9 + $0x184] sm:$0xf]
    %v3969 = vld [vmem:[#allocation9 + $0x188] sm:$0xf]
    %v3970 = vld [vmem:[#allocation9 + $0x18c] sm:$0xf]
    %v3971 = vld [vmem:[#allocation9 + $0x190] sm:$0xf]
    %v3972 = vld [vmem:[#allocation9 + $0x194] sm:$0xf]
    %v3973 = vld [vmem:[#allocation9 + $0x198] sm:$0xf]
    %v3974 = vld [vmem:[#allocation9 + $0x19c] sm:$0xf]
    %v3975 = vld [vmem:[#allocation9 + $0x1a0] sm:$0xf]
    %v3976 = vld [vmem:[#allocation9 + $0x1a4] sm:$0xf]
    %v3977 = vld [vmem:[#allocation9 + $0x1a8] sm:$0xf]
    %v3978 = vld [vmem:[#allocation9 + $0x1ac] sm:$0xf]
    %v3979 = vld [vmem:[#allocation9 + $0x1b0] sm:$0xf]
    %v3980 = vld [vmem:[#allocation9 + $0x1b4] sm:$0xf]
    %v3981 = vld [vmem:[#allocation9 + $0x1b8] sm:$0xf]
    %v3982 = vld [vmem:[#allocation9 + $0x1bc] sm:$0xf]
    %v3983 = vld [vmem:[#allocation9 + $0x1c0] sm:$0xf]
    %v3984 = vld [vmem:[#allocation9 + $0x1c4] sm:$0xf]
    %v3985 = vld [vmem:[#allocation9 + $0x1c8] sm:$0xf]
    %v3986 = vld [vmem:[#allocation9 + $0x1cc] sm:$0xf]
    %v3987 = vld [vmem:[#allocation9 + $0x1d0] sm:$0xf]
    %v3988 = vld [vmem:[#allocation9 + $0x1d4] sm:$0xf]
    %v3989 = vld [vmem:[#allocation9 + $0x1d8] sm:$0xf]
    %v3990 = vld [vmem:[#allocation9 + $0x1dc] sm:$0xf]
    %v3991 = vld [vmem:[#allocation9 + $0x1e0] sm:$0xf]
    %v3992 = vld [vmem:[#allocation9 + $0x1e4] sm:$0xf]
    %v3993 = vld [vmem:[#allocation9 + $0x1e8] sm:$0xf]
    %v3994 = vld [vmem:[#allocation9 + $0x1ec] sm:$0xf]
    %v3995 = vld [vmem:[#allocation9 + $0x1f0] sm:$0xf]
    %v3996 = vld [vmem:[#allocation9 + $0x1f4] sm:$0xf]
    %v3997 = vld [vmem:[#allocation9 + $0x1f8] sm:$0xf]
    %v3998 = vld [vmem:[#allocation9 + $0x1fc] sm:$0xf]
    %v3999 = vld [vmem:[%s7 + $0x24] sm:$0x1]
    %v4001 = vlaneseq
    %v4002 = vshrl.u32 %v4001, 7
    %v4003 = vsub.s32 0, %v4002
    %v4004 = vrot.slane %v3999, %v4003
    %v4134 = vunpack.c.l.b16 %v3871
    %v4135 = vunpack.c.l.b16 %v3872
    %v4136 = vunpack.c.l.b16 %v3873
    %v4137 = vunpack.c.l.b16 %v3874
    %v4138 = vunpack.c.l.b16 %v3875
    %v4139 = vunpack.c.l.b16 %v3876
    %v4140 = vunpack.c.l.b16 %v3877
    %v4141 = vunpack.c.l.b16 %v3878
    %v4142 = vunpack.c.l.b16 %v3879
    %v4143 = vunpack.c.l.b16 %v3880
    %v4144 = vunpack.c.l.b16 %v3881
    %v4145 = vunpack.c.l.b16 %v3882
    %v4146 = vunpack.c.l.b16 %v3883
    %v4147 = vunpack.c.l.b16 %v3884
    %v4148 = vunpack.c.l.b16 %v3885
    %v4149 = vunpack.c.l.b16 %v3886
    %v4150 = vunpack.c.l.b16 %v3887
    %v4151 = vunpack.c.l.b16 %v3888
    %v4152 = vunpack.c.l.b16 %v3889
    %v4153 = vunpack.c.l.b16 %v3890
    %v4154 = vunpack.c.l.b16 %v3891
    %v4155 = vunpack.c.l.b16 %v3892
    %v4156 = vunpack.c.l.b16 %v3893
    %v4157 = vunpack.c.l.b16 %v3894
    %v4158 = vunpack.c.l.b16 %v3895
    %v4159 = vunpack.c.l.b16 %v3896
    %v4160 = vunpack.c.l.b16 %v3897
    %v4161 = vunpack.c.l.b16 %v3898
    %v4162 = vunpack.c.l.b16 %v3899
    %v4163 = vunpack.c.l.b16 %v3900
    %v4164 = vunpack.c.l.b16 %v3901
    %v4165 = vunpack.c.l.b16 %v3902
    %v4166 = vunpack.c.l.b16 %v3903
    %v4167 = vunpack.c.l.b16 %v3904
    %v4168 = vunpack.c.l.b16 %v3905
    %v4169 = vunpack.c.l.b16 %v3906
    %v4170 = vunpack.c.l.b16 %v3907
    %v4171 = vunpack.c.l.b16 %v3908
    %v4172 = vunpack.c.l.b16 %v3909
    %v4173 = vunpack.c.l.b16 %v3910
    %v4174 = vunpack.c.l.b16 %v3911
    %v4175 = vunpack.c.l.b16 %v3912
    %v4176 = vunpack.c.l.b16 %v3913
    %v4177 = vunpack.c.l.b16 %v3914
    %v4178 = vunpack.c.l.b16 %v3915
    %v4179 = vunpack.c.l.b16 %v3916
    %v4180 = vunpack.c.l.b16 %v3917
    %v4181 = vunpack.c.l.b16 %v3918
    %v4182 = vunpack.c.l.b16 %v3919
    %v4183 = vunpack.c.l.b16 %v3920
    %v4184 = vunpack.c.l.b16 %v3921
    %v4185 = vunpack.c.l.b16 %v3922
    %v4186 = vunpack.c.l.b16 %v3923
    %v4187 = vunpack.c.l.b16 %v3924
    %v4188 = vunpack.c.l.b16 %v3925
    %v4189 = vunpack.c.l.b16 %v3926
    %v4190 = vunpack.c.l.b16 %v3927
    %v4191 = vunpack.c.l.b16 %v3928
    %v4192 = vunpack.c.l.b16 %v3929
    %v4193 = vunpack.c.l.b16 %v3930
    %v4194 = vunpack.c.l.b16 %v3931
    %v4195 = vunpack.c.l.b16 %v3932
    %v4196 = vunpack.c.l.b16 %v3933
    %v4197 = vunpack.c.l.b16 %v3934
    %v4198 = vunpack.c.l.b16 %v3935
    %v4199 = vunpack.c.l.b16 %v3936
    %v4200 = vunpack.c.l.b16 %v3937
    %v4201 = vunpack.c.l.b16 %v3938
    %v4202 = vunpack.c.l.b16 %v3939
    %v4203 = vunpack.c.l.b16 %v3940
    %v4204 = vunpack.c.l.b16 %v3941
    %v4205 = vunpack.c.l.b16 %v3942
    %v4206 = vunpack.c.l.b16 %v3943
    %v4207 = vunpack.c.l.b16 %v3944
    %v4208 = vunpack.c.l.b16 %v3945
    %v4209 = vunpack.c.l.b16 %v3946
    %v4210 = vunpack.c.l.b16 %v3947
    %v4211 = vunpack.c.l.b16 %v3948
    %v4212 = vunpack.c.l.b16 %v3949
    %v4213 = vunpack.c.l.b16 %v3950
    %v4214 = vunpack.c.l.b16 %v3951
    %v4215 = vunpack.c.l.b16 %v3952
    %v4216 = vunpack.c.l.b16 %v3953
    %v4217 = vunpack.c.l.b16 %v3954
    %v4218 = vunpack.c.l.b16 %v3955
    %v4219 = vunpack.c.l.b16 %v3956
    %v4220 = vunpack.c.l.b16 %v3957
    %v4221 = vunpack.c.l.b16 %v3958
    %v4222 = vunpack.c.l.b16 %v3959
    %v4223 = vunpack.c.l.b16 %v3960
    %v4224 = vunpack.c.l.b16 %v3961
    %v4225 = vunpack.c.l.b16 %v3962
    %v4226 = vunpack.c.l.b16 %v3963
    %v4227 = vunpack.c.l.b16 %v3964
    %v4228 = vunpack.c.l.b16 %v3965
    %v4229 = vunpack.c.l.b16 %v3966
    %v4230 = vunpack.c.l.b16 %v3967
    %v4231 = vunpack.c.l.b16 %v3968
    %v4232 = vunpack.c.l.b16 %v3969
    %v4233 = vunpack.c.l.b16 %v3970
    %v4234 = vunpack.c.l.b16 %v3971
    %v4235 = vunpack.c.l.b16 %v3972
    %v4236 = vunpack.c.l.b16 %v3973
    %v4237 = vunpack.c.l.b16 %v3974
    %v4238 = vunpack.c.l.b16 %v3975
    %v4239 = vunpack.c.l.b16 %v3976
    %v4240 = vunpack.c.l.b16 %v3977
    %v4241 = vunpack.c.l.b16 %v3978
    %v4242 = vunpack.c.l.b16 %v3979
    %v4243 = vunpack.c.l.b16 %v3980
    %v4244 = vunpack.c.l.b16 %v3981
    %v4245 = vunpack.c.l.b16 %v3982
    %v4246 = vunpack.c.l.b16 %v3983
    %v4247 = vunpack.c.l.b16 %v3984
    %v4248 = vunpack.c.l.b16 %v3985
    %v4249 = vunpack.c.l.b16 %v3986
    %v4250 = vunpack.c.l.b16 %v3987
    %v4251 = vunpack.c.l.b16 %v3988
    %v4252 = vunpack.c.l.b16 %v3989
    %v4253 = vunpack.c.l.b16 %v3990
    %v4254 = vunpack.c.l.b16 %v3991
    %v4255 = vunpack.c.l.b16 %v3992
    %v4256 = vunpack.c.l.b16 %v3993
    %v4257 = vunpack.c.l.b16 %v3994
    %v4258 = vunpack.c.l.b16 %v3995
    %v4259 = vunpack.c.l.b16 %v3996
    %v4260 = vunpack.c.l.b16 %v3997
    %v4261 = vunpack.c.l.b16 %v3998
    %v4262 = vpack.c.b16 %v4135, %v4134
    %v4263 = vpack.c.b16 %v4137, %v4136
    %v4264 = vpack.c.b16 %v4139, %v4138
    %v4265 = vpack.c.b16 %v4141, %v4140
    %v4266 = vpack.c.b16 %v4143, %v4142
    %v4267 = vpack.c.b16 %v4145, %v4144
    %v4268 = vpack.c.b16 %v4147, %v4146
    %v4269 = vpack.c.b16 %v4149, %v4148
    %v4270 = vpack.c.b16 %v4151, %v4150
    %v4271 = vpack.c.b16 %v4153, %v4152
    %v4272 = vpack.c.b16 %v4155, %v4154
    %v4273 = vpack.c.b16 %v4157, %v4156
    %v4274 = vpack.c.b16 %v4159, %v4158
    %v4275 = vpack.c.b16 %v4161, %v4160
    %v4276 = vpack.c.b16 %v4163, %v4162
    %v4277 = vpack.c.b16 %v4165, %v4164
    %v4278 = vpack.c.b16 %v4167, %v4166
    %v4279 = vpack.c.b16 %v4169, %v4168
    %v4280 = vpack.c.b16 %v4171, %v4170
    %v4281 = vpack.c.b16 %v4173, %v4172
    %v4282 = vpack.c.b16 %v4175, %v4174
    %v4283 = vpack.c.b16 %v4177, %v4176
    %v4284 = vpack.c.b16 %v4179, %v4178
    %v4285 = vpack.c.b16 %v4181, %v4180
    %v4286 = vpack.c.b16 %v4183, %v4182
    %v4287 = vpack.c.b16 %v4185, %v4184
    %v4288 = vpack.c.b16 %v4187, %v4186
    %v4289 = vpack.c.b16 %v4189, %v4188
    %v4290 = vpack.c.b16 %v4191, %v4190
    %v4291 = vpack.c.b16 %v4193, %v4192
    %v4292 = vpack.c.b16 %v4195, %v4194
    %v4293 = vpack.c.b16 %v4197, %v4196
    %v4294 = vpack.c.b16 %v4199, %v4198
    %v4295 = vpack.c.b16 %v4201, %v4200
    %v4296 = vpack.c.b16 %v4203, %v4202
    %v4297 = vpack.c.b16 %v4205, %v4204
    %v4298 = vpack.c.b16 %v4207, %v4206
    %v4299 = vpack.c.b16 %v4209, %v4208
    %v4300 = vpack.c.b16 %v4211, %v4210
    %v4301 = vpack.c.b16 %v4213, %v4212
    %v4302 = vpack.c.b16 %v4215, %v4214
    %v4303 = vpack.c.b16 %v4217, %v4216
    %v4304 = vpack.c.b16 %v4219, %v4218
    %v4305 = vpack.c.b16 %v4221, %v4220
    %v4306 = vpack.c.b16 %v4223, %v4222
    %v4307 = vpack.c.b16 %v4225, %v4224
    %v4308 = vpack.c.b16 %v4227, %v4226
    %v4309 = vpack.c.b16 %v4229, %v4228
    %v4310 = vpack.c.b16 %v4231, %v4230
    %v4311 = vpack.c.b16 %v4233, %v4232
    %v4312 = vpack.c.b16 %v4235, %v4234
    %v4313 = vpack.c.b16 %v4237, %v4236
    %v4314 = vpack.c.b16 %v4239, %v4238
    %v4315 = vpack.c.b16 %v4241, %v4240
    %v4316 = vpack.c.b16 %v4243, %v4242
    %v4317 = vpack.c.b16 %v4245, %v4244
    %v4318 = vpack.c.b16 %v4247, %v4246
    %v4319 = vpack.c.b16 %v4249, %v4248
    %v4320 = vpack.c.b16 %v4251, %v4250
    %v4321 = vpack.c.b16 %v4253, %v4252
    %v4322 = vpack.c.b16 %v4255, %v4254
    %v4323 = vpack.c.b16 %v4257, %v4256
    %v4324 = vpack.c.b16 %v4259, %v4258
    %v4325 = vpack.c.b16 %v4261, %v4260
    %4390 = vmatprep.subr.bf16.mxu0 0
    %4391 = vmatpush1.bf16.msra.mxu0 %v4262
    %4392 = vmatprep.subr.bf16.mxu0 0
    %4393 = vmatpush1.bf16.msra.mxu0 %v4263
    %4394 = vmatprep.subr.bf16.mxu0 0
    %4395 = vmatpush1.bf16.msra.mxu0 %v4264
    %4396 = vmatprep.subr.bf16.mxu0 0
    %4397 = vmatpush1.bf16.msra.mxu0 %v4265
    %4398 = vmatprep.subr.bf16.mxu0 0
    %4399 = vmatpush1.bf16.msra.mxu0 %v4266
    %4400 = vmatprep.subr.bf16.mxu0 0
    %4401 = vmatpush1.bf16.msra.mxu0 %v4267
    %4402 = vmatprep.subr.bf16.mxu0 0
    %4403 = vmatpush1.bf16.msra.mxu0 %v4268
    %4404 = vmatprep.subr.bf16.mxu0 0
    %4405 = vmatpush1.bf16.msra.mxu0 %v4269
    %4406 = vmatprep.subr.bf16.mxu0 0
    %4407 = vmatpush1.bf16.msra.mxu0 %v4270
    %4408 = vmatprep.subr.bf16.mxu0 0
    %4409 = vmatpush1.bf16.msra.mxu0 %v4271
    %4410 = vmatprep.subr.bf16.mxu0 0
    %4411 = vmatpush1.bf16.msra.mxu0 %v4272
    %4412 = vmatprep.subr.bf16.mxu0 0
    %4413 = vmatpush1.bf16.msra.mxu0 %v4273
    %4414 = vmatprep.subr.bf16.mxu0 0
    %4415 = vmatpush1.bf16.msra.mxu0 %v4274
    %4416 = vmatprep.subr.bf16.mxu0 0
    %4417 = vmatpush1.bf16.msra.mxu0 %v4275
    %4418 = vmatprep.subr.bf16.mxu0 0
    %4419 = vmatpush1.bf16.msra.mxu0 %v4276
    %4420 = vmatprep.subr.bf16.mxu0 0
    %4421 = vmatpush1.bf16.msra.mxu0 %v4277
    %4422 = vmatprep.mubr.bf16.mxu0 %v3864
    %4423 = vmatmul.mubr.bf16.gmra.mrb[0].mxu0 %v3863
    %v4424 = vpop.f32.mrb[0].mxu0
    %v4425 = vadd.f32 %v4004, %v4424
    %v4426 = vpop.f32.mrb[0].mxu0
    %v4427 = vpop.f32.mrb[0].mxu0
    %v4428 = vpop.f32.mrb[0].mxu0
    %4429 = vdwg.mxu0
    %4430 = vmatprep.subr.bf16.mxu0 0
    %4431 = vmatpush1.bf16.msra.mxu0 %v4278
    %4432 = vmatprep.subr.bf16.mxu0 0
    %4433 = vmatpush1.bf16.msra.mxu0 %v4279
    %4434 = vmatprep.subr.bf16.mxu0 0
    %4435 = vmatpush1.bf16.msra.mxu0 %v4280
    %4436 = vmatprep.subr.bf16.mxu0 0
    %4437 = vmatpush1.bf16.msra.mxu0 %v4281
    %4438 = vmatprep.subr.bf16.mxu0 0
    %4439 = vmatpush1.bf16.msra.mxu0 %v4282
    %4440 = vmatprep.subr.bf16.mxu0 0
    %4441 = vmatpush1.bf16.msra.mxu0 %v4283
    %4442 = vmatprep.subr.bf16.mxu0 0
    %4443 = vmatpush1.bf16.msra.mxu0 %v4284
    %4444 = vmatprep.subr.bf16.mxu0 0
    %4445 = vmatpush1.bf16.msra.mxu0 %v4285
    %4446 = vmatprep.subr.bf16.mxu0 0
    %4447 = vmatpush1.bf16.msra.mxu0 %v4286
    %4448 = vmatprep.subr.bf16.mxu0 0
    %4449 = vmatpush1.bf16.msra.mxu0 %v4287
    %4450 = vmatprep.subr.bf16.mxu0 0
    %4451 = vmatpush1.bf16.msra.mxu0 %v4288
    %4452 = vmatprep.subr.bf16.mxu0 0
    %4453 = vmatpush1.bf16.msra.mxu0 %v4289
    %4454 = vmatprep.subr.bf16.mxu0 0
    %4455 = vmatpush1.bf16.msra.mxu0 %v4290
    %4456 = vmatprep.subr.bf16.mxu0 0
    %4457 = vmatpush1.bf16.msra.mxu0 %v4291
    %4458 = vmatprep.subr.bf16.mxu0 0
    %4459 = vmatpush1.bf16.msra.mxu0 %v4292
    %4460 = vmatprep.subr.bf16.mxu0 0
    %4461 = vmatpush1.bf16.msra.mxu0 %v4293
    %4462 = vmatprep.mubr.bf16.mxu0 %v3866
    %4463 = vmatmul.mubr.bf16.gmra.mrb[0].mxu0 %v3865
    %v4464 = vpop.f32.mrb[0].mxu0
    %v4465 = vadd.f32 %v4425, %v4464
    %v4466 = vpop.f32.mrb[0].mxu0
    %v4467 = vpop.f32.mrb[0].mxu0
    %v4468 = vpop.f32.mrb[0].mxu0
    %4469 = vdwg.mxu0
    %4470 = vmatprep.subr.bf16.mxu0 0
    %4471 = vmatpush1.bf16.msra.mxu0 %v4294
    %4472 = vmatprep.subr.bf16.mxu0 0
    %4473 = vmatpush1.bf16.msra.mxu0 %v4295
    %4474 = vmatprep.subr.bf16.mxu0 0
    %4475 = vmatpush1.bf16.msra.mxu0 %v4296
    %4476 = vmatprep.subr.bf16.mxu0 0
    %4477 = vmatpush1.bf16.msra.mxu0 %v4297
    %4478 = vmatprep.subr.bf16.mxu0 0
    %4479 = vmatpush1.bf16.msra.mxu0 %v4298
    %4480 = vmatprep.subr.bf16.mxu0 0
    %4481 = vmatpush1.bf16.msra.mxu0 %v4299
    %4482 = vmatprep.subr.bf16.mxu0 0
    %4483 = vmatpush1.bf16.msra.mxu0 %v4300
    %4484 = vmatprep.subr.bf16.mxu0 0
    %4485 = vmatpush1.bf16.msra.mxu0 %v4301
    %4486 = vmatprep.subr.bf16.mxu0 0
    %4487 = vmatpush1.bf16.msra.mxu0 %v4302
    %4488 = vmatprep.subr.bf16.mxu0 0
    %4489 = vmatpush1.bf16.msra.mxu0 %v4303
    %4490 = vmatprep.subr.bf16.mxu0 0
    %4491 = vmatpush1.bf16.msra.mxu0 %v4304
    %4492 = vmatprep.subr.bf16.mxu0 0
    %4493 = vmatpush1.bf16.msra.mxu0 %v4305
    %4494 = vmatprep.subr.bf16.mxu0 0
    %4495 = vmatpush1.bf16.msra.mxu0 %v4306
    %4496 = vmatprep.subr.bf16.mxu0 0
    %4497 = vmatpush1.bf16.msra.mxu0 %v4307
    %4498 = vmatprep.subr.bf16.mxu0 0
    %4499 = vmatpush1.bf16.msra.mxu0 %v4308
    %4500 = vmatprep.subr.bf16.mxu0 0
    %4501 = vmatpush1.bf16.msra.mxu0 %v4309
    %4502 = vmatprep.mubr.bf16.mxu0 %v3868
    %4503 = vmatmul.mubr.bf16.gmra.mrb[0].mxu0 %v3867
    %v4504 = vpop.f32.mrb[0].mxu0
    %v4505 = vadd.f32 %v4465, %v4504
    %v4506 = vpop.f32.mrb[0].mxu0
    %v4507 = vpop.f32.mrb[0].mxu0
    %v4508 = vpop.f32.mrb[0].mxu0
    %4509 = vdwg.mxu0
    %4510 = vmatprep.subr.bf16.mxu0 0
    %4511 = vmatpush1.bf16.msra.mxu0 %v4310
    %4512 = vmatprep.subr.bf16.mxu0 0
    %4513 = vmatpush1.bf16.msra.mxu0 %v4311
    %4514 = vmatprep.subr.bf16.mxu0 0
    %4515 = vmatpush1.bf16.msra.mxu0 %v4312
    %4516 = vmatprep.subr.bf16.mxu0 0
    %4517 = vmatpush1.bf16.msra.mxu0 %v4313
    %4518 = vmatprep.subr.bf16.mxu0 0
    %4519 = vmatpush1.bf16.msra.mxu0 %v4314
    %4520 = vmatprep.subr.bf16.mxu0 0
    %4521 = vmatpush1.bf16.msra.mxu0 %v4315
    %4522 = vmatprep.subr.bf16.mxu0 0
    %4523 = vmatpush1.bf16.msra.mxu0 %v4316
    %4524 = vmatprep.subr.bf16.mxu0 0
    %4525 = vmatpush1.bf16.msra.mxu0 %v4317
    %4526 = vmatprep.subr.bf16.mxu0 0
    %4527 = vmatpush1.bf16.msra.mxu0 %v4318
    %4528 = vmatprep.subr.bf16.mxu0 0
    %4529 = vmatpush1.bf16.msra.mxu0 %v4319
    %4530 = vmatprep.subr.bf16.mxu0 0
    %4531 = vmatpush1.bf16.msra.mxu0 %v4320
    %4532 = vmatprep.subr.bf16.mxu0 0
    %4533 = vmatpush1.bf16.msra.mxu0 %v4321
    %4534 = vmatprep.subr.bf16.mxu0 0
    %4535 = vmatpush1.bf16.msra.mxu0 %v4322
    %4536 = vmatprep.subr.bf16.mxu0 0
    %4537 = vmatpush1.bf16.msra.mxu0 %v4323
    %4538 = vmatprep.subr.bf16.mxu0 0
    %4539 = vmatpush1.bf16.msra.mxu0 %v4324
    %4540 = vmatprep.subr.bf16.mxu0 0
    %4541 = vmatpush1.bf16.msra.mxu0 %v4325
    %4542 = vmatprep.mubr.bf16.mxu0 %v3870
    %4543 = vmatmul.mubr.bf16.gmra.mrb[0].mxu0 %v3869
    %v4544 = vpop.f32.mrb[0].mxu0
    %v4545 = vadd.f32 %v4505, %v4544
    %v4546 = vpop.f32.mrb[0].mxu0
    %v4547 = vpop.f32.mrb[0].mxu0
    %v4548 = vpop.f32.mrb[0].mxu0
    %4549 = vdwg.mxu0
    %v4550 = vxor.u32 %v4545, 2147483648
    %v4551 = vmul.f32 %v4550, 1.442695
    %v4552 = vpow.pop %v4551
    %v4553 = vadd.f32 %v4552, 1.0
    %v4554 = vrcp.pop %v4553
    %v4555 = vmul.f32 1.0, %v4554
    %4556 = vst [vmem:[%s8] sm:$0xff] %v4555
    // Predicated region
    $region54: #{generator_forward.1} parent=1 // pred_check
      _
    $region55: #{generator_forward.1} parent=1 // pred_check_branch
      %4558 = sbr.rel (0) target = $region57
    $region56: #{generator_forward.1} parent=1 // pred_region
      _
    $region57: #{generator_forward.1} parent=1 // pred_fallthru
      _
    // Predicated region
    $region58: #{generator_forward.1} parent=1 // pred_check
      _
    $region59: #{generator_forward.1} parent=1 // pred_check_branch
      %4560 = sbr.rel (0) target = $region61
    $region60: #{generator_forward.1} parent=1 // pred_region
      _
    $region61: #{generator_forward.1} parent=1 // pred_fallthru
      _
    %4561 = vsyncpa [#allocation3], 1
    %4562 = vsyncpa [#allocation5], 1
    %4563 = vsyncpa [#allocation8], 1

</llo_original>
